<compile_context>
chip_gen: v7x
topology: tpu7x:2x2x1
jax: 0.10.0
libtpu: 0.0.40
codegen_flags: <defaults>
</compile_context>

<pallas_src>
import functools
import math

import jax
import jax.numpy as jnp
from jax.experimental import pallas as pl
from jax.experimental.pallas import tpu as pltpu


def _gelu_exact_f32(x):
    # PyTorch nn.GELU() default = exact erf formulation (computed in f32).
    return 0.5 * x * (1.0 + jax.lax.erf(x * 0.7071067811865476))


def _token_learner_kernel(x_ref, w1_ref, b1_ref, w2_ref, b2_ref, o_ref, *,
                          num_groups, group_dim, mxu_dtype):
    # x_ref : (TB, C, N)   channels-first (no HBM transpose of the activation)
    # w1_ref: (C, G*D)     first grouped 1x1 conv, pre-transposed + cast to mxu_dtype
    # b1_ref: (1, G*D)     f32
    # w2_ref: (1, G*D)     second grouped conv weights flattened (g, d) -> g*D + d, f32
    # b2_ref: (1, G)       f32
    # o_ref : (TB, G, C)   lane-dense output (C on lanes)
    G, D = num_groups, group_dim
    x_cn = x_ref[...]                                       # (TB, C, N), input dtype
    _, _, N = x_cn.shape

    # (TB, C, N) -> (TB, N, C): one in-VMEM transpose for the first matmul.
    x_nc = jnp.swapaxes(x_cn, 1, 2)                         # (TB, N, C)

    # grouped 1x1 conv #1 (all groups share x): MXU, bf16 operands / f32 accumulation.
    h = jnp.einsum(
        "bnc,cf->bnf",
        x_nc.astype(mxu_dtype), w1_ref[...],
        preferred_element_type=jnp.float32)                 # (TB, N, G*D) f32
    h = _gelu_exact_f32(h + b1_ref[...])                    # f32 elementwise

    # grouped 1x1 conv #2: VPU multiply + per-group lane reduce (no MXU, no zeros).
    hw = h * w2_ref[...]                                    # (TB, N, G*D) f32
    parts = [
        jnp.sum(hw[..., g * D:(g + 1) * D], axis=-1, keepdims=True)   # (TB, N, 1)
        for g in range(G)
    ]
    attn = jnp.concatenate(parts, axis=-1) + b2_ref[...]    # (TB, N, G) f32

    # spatial mean: out[b, g, c] = (1/N) * sum_n attn[b, n, g] * x[b, c, n]
    # contraction over n = lane dim of both operands; output lanes = C (dense).
    attn_t = jnp.swapaxes(attn, 1, 2)                       # (TB, G, N) -- tiny transpose
    out = jnp.einsum(
        "bgn,bcn->bgc",
        attn_t.astype(mxu_dtype), x_cn.astype(mxu_dtype),
        preferred_element_type=jnp.float32) * (1.0 / N)     # (TB, G, C) f32
    o_ref[...] = out.astype(o_ref.dtype)


def token_learner_pallas(x_nchw, w1, b1, w2, b2, *, num_output_tokens, ff_mult,
                         mxu_dtype=jnp.bfloat16, tb_max=8,
                         vmem_budget_bytes=48 * 1024 * 1024):
    """x_nchw: (B, C, H, W). Conv params in PyTorch layout:
       w1: (G*C*ff, C, 1, 1), b1: (G*C*ff,), w2: (G, C*ff, 1, 1), b2: (G,)."""
    B, C, H, W = x_nchw.shape
    G = num_output_tokens
    D = C * ff_mult
    GD = G * D
    N = H * W

    # ---- parameter glue (tiny, one-time, plain JAX) ----
    w1_mat = jnp.transpose(w1[:, :, 0, 0], (1, 0)).astype(mxu_dtype)   # (C, G*D)
    b1_row = b1.reshape(1, GD).astype(jnp.float32)
    w2_row = w2[:, :, 0, 0].reshape(1, GD).astype(jnp.float32)         # (g, d) -> g*D + d
    b2_row = b2.reshape(1, G).astype(jnp.float32)

    # x: NCHW -> (B, C, N).  Pure reshape: no HBM round-trip transpose of x.
    x_bcn = x_nchw.reshape(B, C, N)
    x_bytes = x_bcn.dtype.itemsize
    mxu_bytes = jnp.dtype(mxu_dtype).itemsize

    # ---- how many batch elements to fuse per grid step (VMEM-budgeted) ----
    fixed = 2 * (C * GD * mxu_bytes + 3 * GD * 4) + (2 << 20)          # weights + slack
    per_batch = (2 * C * N * x_bytes          # x block, double buffered
                 + C * N * 4                  # in-kernel transposed copy
                 + 4 * N * GD * 4             # h / hw / GELU temporaries (f32)
                 + 2 * G * C * 4)             # output block
    tb = 1
    for cand in range(1, min(B, tb_max) + 1):
        if B % cand == 0 and fixed + cand * per_batch <= vmem_budget_bytes:
            tb = cand

    vmem_limit = int(min(max(fixed + tb * per_batch, 32 * 1024 * 1024),
                         64 * 1024 * 1024))                 # stay inside v7x's 64 MiB

    cost = pl.CostEstimate(
        flops=2 * B * N * C * GD + 2 * B * N * GD + 2 * B * G * N * C,
        transcendentals=B * N * GD,
        bytes_accessed=(x_bcn.size * x_bytes + w1_mat.size * mxu_bytes
                        + (b1_row.size + w2_row.size + b2_row.size) * 4
                        + B * G * C * 4))

    kernel = functools.partial(_token_learner_kernel,
                               num_groups=G, group_dim=D, mxu_dtype=mxu_dtype)

    out_bgc = pl.pallas_call(
        kernel,
        out_shape=jax.ShapeDtypeStruct((B, G, C), x_nchw.dtype),
        grid_spec=pltpu.PrefetchScalarGridSpec(
            num_scalar_prefetch=0,
            grid=(B // tb,),
            in_specs=[
                pl.BlockSpec((tb, C, N), lambda b: (b, 0, 0)),
                pl.BlockSpec((C, GD), lambda b: (0, 0)),     # constant index: fetched once
                pl.BlockSpec((1, GD), lambda b: (0, 0)),
                pl.BlockSpec((1, GD), lambda b: (0, 0)),
                pl.BlockSpec((1, G), lambda b: (0, 0)),
            ],
            out_specs=pl.BlockSpec((tb, G, C), lambda b: (b, 0, 0)),
        ),
        compiler_params=pltpu.CompilerParams(
            dimension_semantics=("parallel",),
            vmem_limit_bytes=vmem_limit),
        cost_estimate=cost,
    )(x_bcn, w1_mat, b1_row, w2_row, b2_row)

    # (B, G, C) -> (B, C, G): tiny tensor, flip outside the kernel.
    return jnp.swapaxes(out_bgc, 1, 2)


def token_learner_reference(x_nchw, w1, b1, w2, b2, *, num_output_tokens, ff_mult):
    """Pure-JAX f32 reference mirroring the PyTorch forward."""
    B, C, H, W = x_nchw.shape
    G, D = num_output_tokens, C * ff_mult
    xp = jnp.transpose(x_nchw, (0, 2, 3, 1)).astype(jnp.float32)       # (B, H, W, C)
    w1g = w1[:, :, 0, 0].reshape(G, D, C).astype(jnp.float32)          # (G, D, C)
    b1g = b1.reshape(G, D).astype(jnp.float32)
    w2g = w2[:, :, 0, 0].astype(jnp.float32)                           # (G, D)
    h = jnp.einsum("bhwc,gdc->bhwgd", xp, w1g) + b1g                   # (B,H,W,G,D)
    h = _gelu_exact_f32(h)
    attn = jnp.einsum("bhwgd,gd->bhwg", h, w2g) + b2.astype(jnp.float32)
    out = jnp.einsum("bhwc,bhwg->bcg", xp, attn) / (H * W)             # (B,C,G)
    return out.astype(x_nchw.dtype)


if __name__ == "__main__":
    # small, deterministic setup (B here = packed batch*frames of RT1_Mod)
    B, C, H, W = 4, 8, 16, 16
    G, FF = 8, 2          # num_output_tokens, ff_mult
    D = C * FF
    inner = G * D

    key = jax.random.PRNGKey(0)
    k_x, k_w1, k_b1, k_w2, k_b2 = jax.random.split(key, 5)

    x = jax.random.normal(k_x, (B, C, H, W), dtype=jnp.float32)

    # deterministic param init (shapes per nn.Conv2d with groups=G, kernel 1x1)
    bound1 = 1.0 / math.sqrt(C)
    w1 = jax.random.uniform(k_w1, (inner, C, 1, 1), minval=-bound1, maxval=bound1)
    b1 = jax.random.uniform(k_b1, (inner,), minval=-bound1, maxval=bound1)

    bound2 = 1.0 / math.sqrt(D)
    w2 = jax.random.uniform(k_w2, (G, D, 1, 1), minval=-bound2, maxval=bound2)
    b2 = jax.random.uniform(k_b2, (G,), minval=-bound2, maxval=bound2)

    ref = token_learner_reference(x, w1, b1, w2, b2,
                                  num_output_tokens=G, ff_mult=FF)

    run = functools.partial(token_learner_pallas,
                            num_output_tokens=G, ff_mult=FF,
                            tb_max=2)   # tb_max=2 -> 2 batches/step, 2 grid steps

    # exact-numerics configuration (f32 MXU operands): tight check vs f32 reference
    out_f32 = jax.block_until_ready(run(x, w1, b1, w2, b2, mxu_dtype=jnp.float32))
    assert out_f32.shape == (B, C, G), out_f32.shape
    assert jnp.allclose(out_f32, ref, atol=1e-5, rtol=1e-5), "f32 kernel mismatch vs reference"

    # performance configuration (bf16 MXU operands, f32 accumulation): relaxed tolerance
    out_bf16 = jax.block_until_ready(run(x, w1, b1, w2, b2, mxu_dtype=jnp.bfloat16))
    assert out_bf16.shape == (B, C, G), out_bf16.shape
    assert jnp.allclose(out_bf16, ref, atol=2e-2, rtol=2e-2), "bf16 kernel drifted from reference"

    print("KERNEL_OK")
</pallas_src>

<mosaic_0001>
module attributes {stable_mosaic.version = 11 : i64} {
  func.func @_token_learner_kernel(%arg0: i32, %arg1: memref<2x8x256xf32, #tpu.memory_space<vmem>>, %arg2: memref<8x128xf32, #tpu.memory_space<vmem>>, %arg3: memref<1x128xf32, #tpu.memory_space<vmem>>, %arg4: memref<1x128xf32, #tpu.memory_space<vmem>>, %arg5: memref<1x8xf32, #tpu.memory_space<vmem>>, %arg6: memref<2x8x8xf32, #tpu.memory_space<vmem>>) attributes {dimension_semantics = [#tpu.dimension_semantics<parallel>], iteration_bounds = array<i64: 2>, scalar_prefetch = 0 : i64, scratch_operands = 0 : i64, tpu.core_type = #tpu.core_type<tc>, window_params = [{transform_indices = @transform_0, window_bounds = array<i64: 2, 8, 256>}, {pipeline_mode = #tpu.pipeline_mode<synchronous>, transform_indices = @transform_1, window_bounds = array<i64: 8, 128>}, {pipeline_mode = #tpu.pipeline_mode<synchronous>, transform_indices = @transform_2, window_bounds = array<i64: 1, 128>}, {pipeline_mode = #tpu.pipeline_mode<synchronous>, transform_indices = @transform_3, window_bounds = array<i64: 1, 128>}, {pipeline_mode = #tpu.pipeline_mode<synchronous>, transform_indices = @transform_4, window_bounds = array<i64: 1, 8>}, {transform_indices = @transform_5, window_bounds = array<i64: 2, 8, 8>}]} {
    %c0 = arith.constant 0 : index
    %c0_0 = arith.constant 0 : index
    %c0_1 = arith.constant 0 : index
    %0 = vector.load %arg1[%c0, %c0_0, %c0_1] : memref<2x8x256xf32, #tpu.memory_space<vmem>>, vector<2x8x256xf32>
    %1 = tpu.transpose %0, [0, 2, 1] : vector<2x8x256xf32> -> vector<2x256x8xf32>
    %c0_2 = arith.constant 0 : index
    %c0_3 = arith.constant 0 : index
    %2 = vector.load %arg2[%c0_2, %c0_3] : memref<8x128xf32, #tpu.memory_space<vmem>>, vector<8x128xf32>
    "tpu.trace_start"() <{level = 10 : i32, message = "bnc,cf->bnf"}> : () -> ()
    %cst = arith.constant dense<0.000000e+00> : vector<2x256x128xf32>
    %3 = tpu.matmul %1, %2, %cst {dimension_numbers = #tpu.dot_dimension_numbers<[2], [0], [0, 1], [1], [0, 0, 0, 1, 1, 1], [], []>} : vector<2x256x8xf32>, vector<8x128xf32>, vector<2x256x128xf32> -> vector<2x256x128xf32>
    "tpu.trace_stop"() : () -> ()
    %c0_4 = arith.constant 0 : index
    %c0_5 = arith.constant 0 : index
    %4 = vector.load %arg3[%c0_4, %c0_5] : memref<1x128xf32, #tpu.memory_space<vmem>>, vector<1x128xf32>
    %5 = vector.shape_cast %4 : vector<1x128xf32> to vector<1x1x128xf32>
    %6 = vector.broadcast %5 : vector<1x1x128xf32> to vector<2x256x128xf32>
    %7 = arith.addf %3, %6 : vector<2x256x128xf32>
    %cst_6 = arith.constant 5.000000e-01 : f32
    %8 = vector.broadcast %cst_6 : f32 to vector<2x256x128xf32>
    %9 = arith.mulf %8, %7 : vector<2x256x128xf32>
    %cst_7 = arith.constant 0.707106769 : f32
    %10 = vector.broadcast %cst_7 : f32 to vector<2x256x128xf32>
    %11 = arith.mulf %7, %10 : vector<2x256x128xf32>
    %12 = math.erf %11 : vector<2x256x128xf32>
    %cst_8 = arith.constant 1.000000e+00 : f32
    %13 = vector.broadcast %cst_8 : f32 to vector<2x256x128xf32>
    %14 = arith.addf %13, %12 : vector<2x256x128xf32>
    %15 = arith.mulf %9, %14 : vector<2x256x128xf32>
    %c0_9 = arith.constant 0 : index
    %c0_10 = arith.constant 0 : index
    %16 = vector.load %arg4[%c0_9, %c0_10] : memref<1x128xf32, #tpu.memory_space<vmem>>, vector<1x128xf32>
    %17 = vector.shape_cast %16 : vector<1x128xf32> to vector<1x1x128xf32>
    %18 = vector.broadcast %17 : vector<1x1x128xf32> to vector<2x256x128xf32>
    %19 = arith.mulf %15, %18 : vector<2x256x128xf32>
    %20 = vector.extract_strided_slice %19 {offsets = [0, 0, 0], sizes = [2, 256, 16], strides = [1, 1, 1]} : vector<2x256x128xf32> to vector<2x256x16xf32>
    %cst_11 = arith.constant dense<0.000000e+00> : vector<2x256xf32>
    %21 = vector.multi_reduction <add>, %20, %cst_11 [2] : vector<2x256x16xf32> to vector<2x256xf32>
    %22 = vector.shape_cast %21 : vector<2x256xf32> to vector<2x256x1xf32>
    %23 = vector.extract_strided_slice %19 {offsets = [0, 0, 16], sizes = [2, 256, 16], strides = [1, 1, 1]} : vector<2x256x128xf32> to vector<2x256x16xf32>
    %cst_12 = arith.constant dense<0.000000e+00> : vector<2x256xf32>
    %24 = vector.multi_reduction <add>, %23, %cst_12 [2] : vector<2x256x16xf32> to vector<2x256xf32>
    %25 = vector.shape_cast %24 : vector<2x256xf32> to vector<2x256x1xf32>
    %26 = vector.extract_strided_slice %19 {offsets = [0, 0, 32], sizes = [2, 256, 16], strides = [1, 1, 1]} : vector<2x256x128xf32> to vector<2x256x16xf32>
    %cst_13 = arith.constant dense<0.000000e+00> : vector<2x256xf32>
    %27 = vector.multi_reduction <add>, %26, %cst_13 [2] : vector<2x256x16xf32> to vector<2x256xf32>
    %28 = vector.shape_cast %27 : vector<2x256xf32> to vector<2x256x1xf32>
    %29 = vector.extract_strided_slice %19 {offsets = [0, 0, 48], sizes = [2, 256, 16], strides = [1, 1, 1]} : vector<2x256x128xf32> to vector<2x256x16xf32>
    %cst_14 = arith.constant dense<0.000000e+00> : vector<2x256xf32>
    %30 = vector.multi_reduction <add>, %29, %cst_14 [2] : vector<2x256x16xf32> to vector<2x256xf32>
    %31 = vector.shape_cast %30 : vector<2x256xf32> to vector<2x256x1xf32>
    %32 = vector.extract_strided_slice %19 {offsets = [0, 0, 64], sizes = [2, 256, 16], strides = [1, 1, 1]} : vector<2x256x128xf32> to vector<2x256x16xf32>
    %cst_15 = arith.constant dense<0.000000e+00> : vector<2x256xf32>
    %33 = vector.multi_reduction <add>, %32, %cst_15 [2] : vector<2x256x16xf32> to vector<2x256xf32>
    %34 = vector.shape_cast %33 : vector<2x256xf32> to vector<2x256x1xf32>
    %35 = vector.extract_strided_slice %19 {offsets = [0, 0, 80], sizes = [2, 256, 16], strides = [1, 1, 1]} : vector<2x256x128xf32> to vector<2x256x16xf32>
    %cst_16 = arith.constant dense<0.000000e+00> : vector<2x256xf32>
    %36 = vector.multi_reduction <add>, %35, %cst_16 [2] : vector<2x256x16xf32> to vector<2x256xf32>
    %37 = vector.shape_cast %36 : vector<2x256xf32> to vector<2x256x1xf32>
    %38 = vector.extract_strided_slice %19 {offsets = [0, 0, 96], sizes = [2, 256, 16], strides = [1, 1, 1]} : vector<2x256x128xf32> to vector<2x256x16xf32>
    %cst_17 = arith.constant dense<0.000000e+00> : vector<2x256xf32>
    %39 = vector.multi_reduction <add>, %38, %cst_17 [2] : vector<2x256x16xf32> to vector<2x256xf32>
    %40 = vector.shape_cast %39 : vector<2x256xf32> to vector<2x256x1xf32>
    %41 = vector.extract_strided_slice %19 {offsets = [0, 0, 112], sizes = [2, 256, 16], strides = [1, 1, 1]} : vector<2x256x128xf32> to vector<2x256x16xf32>
    %cst_18 = arith.constant dense<0.000000e+00> : vector<2x256xf32>
    %42 = vector.multi_reduction <add>, %41, %cst_18 [2] : vector<2x256x16xf32> to vector<2x256xf32>
    %43 = vector.shape_cast %42 : vector<2x256xf32> to vector<2x256x1xf32>
    %44 = tpu.concatenate %22, %25, %28, %31, %34, %37, %40, %43 in 2 : vector<2x256x1xf32>, vector<2x256x1xf32>, vector<2x256x1xf32>, vector<2x256x1xf32>, vector<2x256x1xf32>, vector<2x256x1xf32>, vector<2x256x1xf32>, vector<2x256x1xf32> -> vector<2x256x8xf32>
    %c0_19 = arith.constant 0 : index
    %c0_20 = arith.constant 0 : index
    %45 = vector.load %arg5[%c0_19, %c0_20] : memref<1x8xf32, #tpu.memory_space<vmem>>, vector<1x8xf32>
    %46 = vector.shape_cast %45 : vector<1x8xf32> to vector<1x1x8xf32>
    %47 = vector.broadcast %46 : vector<1x1x8xf32> to vector<2x256x8xf32>
    %48 = arith.addf %44, %47 : vector<2x256x8xf32>
    %49 = tpu.transpose %48, [0, 2, 1] : vector<2x256x8xf32> -> vector<2x8x256xf32>
    "tpu.trace_start"() <{level = 10 : i32, message = "bgn,bcn->bgc"}> : () -> ()
    %cst_21 = arith.constant dense<0.000000e+00> : vector<2x8x8xf32>
    %50 = tpu.matmul %49, %0, %cst_21 {dimension_numbers = #tpu.dot_dimension_numbers<[2], [2], [1], [1], [0, 0, 0, 1, 1, 1], [0], [0]>} : vector<2x8x256xf32>, vector<2x8x256xf32>, vector<2x8x8xf32> -> vector<2x8x8xf32>
    "tpu.trace_stop"() : () -> ()
    %cst_22 = arith.constant 3.906250e-03 : f32
    %51 = vector.broadcast %cst_22 : f32 to vector<2x8x8xf32>
    %52 = arith.mulf %50, %51 : vector<2x8x8xf32>
    %c0_23 = arith.constant 0 : index
    %c0_24 = arith.constant 0 : index
    %c0_25 = arith.constant 0 : index
    %53 = vector.load %arg6[%c0_23, %c0_24, %c0_25] : memref<2x8x8xf32, #tpu.memory_space<vmem>>, vector<2x8x8xf32>
    tpu.vector_store %arg6[%c0_23, %c0_24, %c0_25], %52 {strides = array<i32>} : memref<2x8x8xf32, #tpu.memory_space<vmem>>, vector<2x8x8xf32>,
    return
  }
  func.func @transform_0(%arg0: i32) -> (i32, i32, i32) {
    %c0_i32 = arith.constant 0 : i32
    %c0_i32_0 = arith.constant 0 : i32
    %c0_i32_1 = arith.constant 0 : i32
    return %arg0, %c0_i32, %c0_i32_0 : i32, i32, i32
  }
  func.func @transform_1(%arg0: i32) -> (i32, i32) {
    %c0_i32 = arith.constant 0 : i32
    %c0_i32_0 = arith.constant 0 : i32
    %c0_i32_1 = arith.constant 0 : i32
    return %c0_i32, %c0_i32_0 : i32, i32
  }
  func.func @transform_2(%arg0: i32) -> (i32, i32) {
    %c0_i32 = arith.constant 0 : i32
    %c0_i32_0 = arith.constant 0 : i32
    %c0_i32_1 = arith.constant 0 : i32
    return %c0_i32, %c0_i32_0 : i32, i32
  }
  func.func @transform_3(%arg0: i32) -> (i32, i32) {
    %c0_i32 = arith.constant 0 : i32
    %c0_i32_0 = arith.constant 0 : i32
    %c0_i32_1 = arith.constant 0 : i32
    return %c0_i32, %c0_i32_0 : i32, i32
  }
  func.func @transform_4(%arg0: i32) -> (i32, i32) {
    %c0_i32 = arith.constant 0 : i32
    %c0_i32_0 = arith.constant 0 : i32
    %c0_i32_1 = arith.constant 0 : i32
    return %c0_i32, %c0_i32_0 : i32, i32
  }
  func.func @transform_5(%arg0: i32) -> (i32, i32, i32) {
    %c0_i32 = arith.constant 0 : i32
    %c0_i32_0 = arith.constant 0 : i32
    %c0_i32_1 = arith.constant 0 : i32
    return %arg0, %c0_i32, %c0_i32_0 : i32, i32, i32
  }
}

</mosaic_0001>

<llo_original>
// kernel: tpu_custom_call.1
$region0: #{tpu_custom_call.1}
  #allocation0 [shape = 'u32[]', space=smem, size = 0x4, offset = 0x4, fixed_abs, tag = 'smem constant byte address 0x4 - core index']
  #allocation1 [shape = 'u32[144,128]{1,0:T(1,128)}', space=vmem, size = 0x12000, scoped, tag = 'internal scratch']
  %s0 = inlined_call_operand.hbm [shape: f32[4,8,256], index: 0, kind: input, shape index: {}]
  %s1 = inlined_call_operand.hbm [shape: f32[8,128], index: 1, kind: input, shape index: {}]
  %s2 = inlined_call_operand.vmem [shape: f32[1,128], index: 2, kind: input, shape index: {}]
  %s3 = inlined_call_operand.vmem [shape: f32[1,128], index: 3, kind: input, shape index: {}]
  %s4 = inlined_call_operand.vmem [shape: f32[1,8], index: 4, kind: input, shape index: {}]
  %s5 = inlined_call_operand.hbm [shape: f32[4,8,8], index: 5, kind: output, shape index: {}]
  %s6 = sld [smem:[#allocation0]]
  $region61: #{tpu_custom_call.1} parent=0
    _
  %s8 = ssub.s32 1, %s6
  %s9 = scalar_select 0, %s8, %s6
  $region1: #{tpu_custom_call.1} parent=0
    #allocation2 [shape = 'u8[32768]{0}', space=vmem, size = 0x8000, scoped, tag = 'input window, operand 0']
    #allocation3 [shape = 's32[2]{0}', space=sflag, size = 0x8, scoped, tag = 'scoped memory for tpu_custom_call.1']
    #allocation4 [shape = 's32[2]{0}', space=sflag, size = 0x8, scoped, tag = 'scoped memory for tpu_custom_call.1']
    #allocation5 [shape = 'u8[4096]{0}', space=vmem, size = 0x1000, scoped, tag = 'input window, operand 1, single buffered']
    #allocation6 [shape = 's32[1]{0}', space=sflag, size = 0x4, scoped, tag = 'scoped memory for tpu_custom_call.1']
    #allocation7 [shape = 'u8[16384]{0}', space=vmem, size = 0x4000, scoped, tag = 'output window, operand 0']
    %10 = vsyncpa [#allocation3], 0
    %s11 = scalar_lea.sflag [#allocation3], 1
    %12 = vsyncpa %s11, 0
    %13 = vsyncpa [#allocation6], 0
    %14 = vsyncpa [#allocation4], 0
    %s15 = scalar_lea.sflag [#allocation4], 1
    %16 = vsyncpa %s15, 0
    loop: start=0, step=1, limit=4
    $region2: #{tpu_custom_call.1} parent=1 // loop_pre_header
      _
    $region3: #{tpu_custom_call.1} parent=1 // loop_header
      %s18 = sphi 0, %s22
      %p19 = scmp.ge.s32.totalorder %s18, 4
      %s28 = sphi 0, %s30
      %s31 = sphi 0, %s28
      %s32 = sphi 0, %s31
      %s48 = sphi 0, %s32
      %s52 = sphi 0, %s52
      %s54 = sphi 0, %s52
      %s55 = sphi 0, %s54
      %s69 = sphi 0, %s55
      %s73 = sphi 0, %s73
      %s75 = sphi 0, %s73
      %s76 = sphi 0, %s75
      %s90 = sphi 0, %s76
      %s94 = sphi 0, %s94
      %s96 = sphi 0, %s94
      %s97 = sphi 0, %s96
      %s111 = sphi 0, %s97
      %s115 = sphi 0, %s115
      %s117 = sphi 0, %s115
      %s118 = sphi 0, %s117
      %s132 = sphi 0, %s118
      %s138 = sphi 0, %s140
      %s141 = sphi 0, %s138
      %s142 = sphi 0, %s141
      %s158 = sphi 0, %s142
    $region4: #{tpu_custom_call.1} parent=1 // loop_header_branch
      %21 = sbr.rel (%p19) target = $region8
    $region5: #{tpu_custom_call.1} parent=1 // loop_body
      %s23 = ssub.s32 %s18, 1
      %s24 = ssub.s32 %s18, 2
      %s25 = sadd.s32 %s18, 1
      %s26 = ssub.s32 %s18, %s25
      %p27 = scmp.eq.s32.totalorder %s26, 0
      %s29 = sadd.s32 %s28, 1
      %s30 = scalar_select %p27, %s28, %s29
      %p33 = pneg %p27
      %p34 = scmp.eq.s32.totalorder %s18, 1
      %p35 = por %p33, %p34
      %p36 = scmp.ne.s32.totalorder %s28, %s31
      %p37 = scmp.eq.s32.totalorder %s18, 0
      %p38 = por %p36, %p37
      %p39 = scmp.ne.s32.totalorder %s28, %s31
      %p40 = scmp.eq.s32.totalorder %s23, 1
      %p41 = por %p39, %p40
      %p42 = scmp.ne.s32.totalorder %s31, %s32
      %p43 = scmp.eq.s32.totalorder %s23, 0
      %p44 = por %p42, %p43
      %p45 = scmp.ne.s32.totalorder %s31, %s32
      %p46 = scmp.eq.s32.totalorder %s24, 1
      %p47 = por %p45, %p46
      %p49 = scmp.ne.s32.totalorder %s32, %s48
      %p50 = scmp.eq.s32.totalorder %s24, 0
      %p51 = por %p49, %p50
      %s53 = sadd.s32 %s52, 1
      %p56 = scmp.eq.s32.totalorder %s18, 1
      %p57 = scmp.ne.s32.totalorder %s52, %s54
      %p58 = scmp.eq.s32.totalorder %s18, 0
      %p59 = por %p57, %p58
      %p60 = scmp.ne.s32.totalorder %s52, %s54
      %p61 = scmp.eq.s32.totalorder %s23, 1
      %p62 = por %p60, %p61
      %p63 = scmp.ne.s32.totalorder %s54, %s55
      %p64 = scmp.eq.s32.totalorder %s23, 0
      %p65 = por %p63, %p64
      %p66 = scmp.ne.s32.totalorder %s54, %s55
      %p67 = scmp.eq.s32.totalorder %s24, 1
      %p68 = por %p66, %p67
      %p70 = scmp.ne.s32.totalorder %s55, %s69
      %p71 = scmp.eq.s32.totalorder %s24, 0
      %p72 = por %p70, %p71
      %s74 = sadd.s32 %s73, 1
      %p77 = scmp.eq.s32.totalorder %s18, 1
      %p78 = scmp.ne.s32.totalorder %s73, %s75
      %p79 = scmp.eq.s32.totalorder %s18, 0
      %p80 = por %p78, %p79
      %p81 = scmp.ne.s32.totalorder %s73, %s75
      %p82 = scmp.eq.s32.totalorder %s23, 1
      %p83 = por %p81, %p82
      %p84 = scmp.ne.s32.totalorder %s75, %s76
      %p85 = scmp.eq.s32.totalorder %s23, 0
      %p86 = por %p84, %p85
      %p87 = scmp.ne.s32.totalorder %s75, %s76
      %p88 = scmp.eq.s32.totalorder %s24, 1
      %p89 = por %p87, %p88
      %p91 = scmp.ne.s32.totalorder %s76, %s90
      %p92 = scmp.eq.s32.totalorder %s24, 0
      %p93 = por %p91, %p92
      %s95 = sadd.s32 %s94, 1
      %p98 = scmp.eq.s32.totalorder %s18, 1
      %p99 = scmp.ne.s32.totalorder %s94, %s96
      %p100 = scmp.eq.s32.totalorder %s18, 0
      %p101 = por %p99, %p100
      %p102 = scmp.ne.s32.totalorder %s94, %s96
      %p103 = scmp.eq.s32.totalorder %s23, 1
      %p104 = por %p102, %p103
      %p105 = scmp.ne.s32.totalorder %s96, %s97
      %p106 = scmp.eq.s32.totalorder %s23, 0
      %p107 = por %p105, %p106
      %p108 = scmp.ne.s32.totalorder %s96, %s97
      %p109 = scmp.eq.s32.totalorder %s24, 1
      %p110 = por %p108, %p109
      %p112 = scmp.ne.s32.totalorder %s97, %s111
      %p113 = scmp.eq.s32.totalorder %s24, 0
      %p114 = por %p112, %p113
      %s116 = sadd.s32 %s115, 1
      %p119 = scmp.eq.s32.totalorder %s18, 1
      %p120 = scmp.ne.s32.totalorder %s115, %s117
      %p121 = scmp.eq.s32.totalorder %s18, 0
      %p122 = por %p120, %p121
      %p123 = scmp.ne.s32.totalorder %s115, %s117
      %p124 = scmp.eq.s32.totalorder %s23, 1
      %p125 = por %p123, %p124
      %p126 = scmp.ne.s32.totalorder %s117, %s118
      %p127 = scmp.eq.s32.totalorder %s23, 0
      %p128 = por %p126, %p127
      %p129 = scmp.ne.s32.totalorder %s117, %s118
      %p130 = scmp.eq.s32.totalorder %s24, 1
      %p131 = por %p129, %p130
      %p133 = scmp.ne.s32.totalorder %s118, %s132
      %p134 = scmp.eq.s32.totalorder %s24, 0
      %p135 = por %p133, %p134
      %s136 = ssub.s32 %s18, %s25
      %p137 = scmp.eq.s32.totalorder %s136, 0
      %s139 = sadd.s32 %s138, 1
      %s140 = scalar_select %p137, %s138, %s139
      %p143 = pneg %p137
      %p144 = scmp.eq.s32.totalorder %s18, 1
      %p145 = por %p143, %p144
      %p146 = scmp.ne.s32.totalorder %s138, %s141
      %p147 = scmp.eq.s32.totalorder %s18, 0
      %p148 = por %p146, %p147
      %p149 = scmp.ne.s32.totalorder %s138, %s141
      %p150 = scmp.eq.s32.totalorder %s23, 1
      %p151 = por %p149, %p150
      %p152 = scmp.ne.s32.totalorder %s141, %s142
      %p153 = scmp.eq.s32.totalorder %s23, 0
      %p154 = por %p152, %p153
      %p155 = scmp.ne.s32.totalorder %s141, %s142
      %p156 = scmp.eq.s32.totalorder %s24, 1
      %p157 = por %p155, %p156
      %p159 = scmp.ne.s32.totalorder %s142, %s158
      %p160 = scmp.eq.s32.totalorder %s24, 0
      %p161 = por %p159, %p160
      %p162 = scmp.le.s32.totalorder 1, %s18
      %p163 = scmp.lt.s32.totalorder %s18, 3
      %p164 = pnand %p162, %p163
      %p165 = pneg %p164
      // Predicated region
      $region9: #{tpu_custom_call.1} parent=5 // pred_check
        _
      $region10: #{tpu_custom_call.1} parent=5 // pred_check_branch
        %167 = sbr.rel (%p164) target = $region12
      $region11: #{tpu_custom_call.1} parent=5 // pred_region
        %s168 = ssub.s32 %s18, 1
        // Predicated region
        $region13: #{tpu_custom_call.1} parent=11 // pred_check
          %p169 = pneg %p65
        $region14: #{tpu_custom_call.1} parent=11 // pred_check_branch
          %171 = sbr.rel (%p169) target = $region16
        $region15: #{tpu_custom_call.1} parent=11 // pred_region
          %s173 = ssub.s32 128, 128
          %174 = vsyncadd [#allocation6], %s173
          %s176 = sshll.u32 [#allocation5], 4
          %s177 = int_to_ptr.vmem [resolvable:$true] %s176
          %179 = dma.hbm_to_vmem [thread:$0]  %s1, 128, %s177, [#allocation6]
        $region16: #{tpu_custom_call.1} parent=11 // pred_fallthru
          _
        // Predicated region
        $region17: #{tpu_custom_call.1} parent=11 // pred_check
          %p180 = pneg %p86
        $region18: #{tpu_custom_call.1} parent=11 // pred_check_branch
          %182 = sbr.rel (%p180) target = $region20
        $region19: #{tpu_custom_call.1} parent=11 // pred_region
          _
        $region20: #{tpu_custom_call.1} parent=11 // pred_fallthru
          _
        // Predicated region
        $region21: #{tpu_custom_call.1} parent=11 // pred_check
          %p183 = pneg %p107
        $region22: #{tpu_custom_call.1} parent=11 // pred_check_branch
          %185 = sbr.rel (%p183) target = $region24
        $region23: #{tpu_custom_call.1} parent=11 // pred_region
          _
        $region24: #{tpu_custom_call.1} parent=11 // pred_fallthru
          _
        // Predicated region
        $region25: #{tpu_custom_call.1} parent=11 // pred_check
          %p186 = pneg %p128
        $region26: #{tpu_custom_call.1} parent=11 // pred_check_branch
          %188 = sbr.rel (%p186) target = $region28
        $region27: #{tpu_custom_call.1} parent=11 // pred_region
          _
        $region28: #{tpu_custom_call.1} parent=11 // pred_fallthru
          _
      $region12: #{tpu_custom_call.1} parent=5 // pred_fallthru
        _
      %p189 = scmp.lt.s32.totalorder %s18, 2
      // Predicated region
      $region29: #{tpu_custom_call.1} parent=5 // pred_check
        %p190 = pneg %p189
      $region30: #{tpu_custom_call.1} parent=5 // pred_check_branch
        %192 = sbr.rel (%p190) target = $region32
      $region31: #{tpu_custom_call.1} parent=5 // pred_region
        // Predicated region
        $region33: #{tpu_custom_call.1} parent=31 // pred_check
          %p193 = pneg %p38
        $region34: #{tpu_custom_call.1} parent=31 // pred_check_branch
          %195 = sbr.rel (%p193) target = $region36
        $region35: #{tpu_custom_call.1} parent=31 // pred_region
          %s196 = sand.u32 %s28, 1
          %s197 = scalar_lea.sflag [#allocation3], %s196
          %s198 = sand.u32 %s28, 1
          %s199 = smul.addr %s198, 32
          %s200 = scalar_lea.vmem [#allocation2], %s199
          %s201 = smul.u32 2, %s18
          %s203 = ssub.s32 512, 512
          %204 = vsyncadd %s197, %s203
          %s205 = smul.addr %s201, 2
          %s206 = smul.addr %s205, 128
          %s207 = scalar_lea.hbm %s0, %s206
          %s208 = sshll.u32 %s200, 4
          %s209 = int_to_ptr.vmem [resolvable:$true] %s208
          %214 = dma.hbm_to_vmem [thread:$0]  %s207, 512, %s209, %s197, 256, 256, 16
        $region36: #{tpu_custom_call.1} parent=31 // pred_fallthru
          _
      $region32: #{tpu_custom_call.1} parent=5 // pred_fallthru
        _
      %p215 = scmp.le.s32.totalorder 1, %s18
      %p216 = scmp.lt.s32.totalorder %s18, 3
      %p217 = pnand %p215, %p216
      %p218 = pneg %p217
      // Predicated region
      $region37: #{tpu_custom_call.1} parent=5 // pred_check
        _
      $region38: #{tpu_custom_call.1} parent=5 // pred_check_branch
        %220 = sbr.rel (%p217) target = $region40
      $region39: #{tpu_custom_call.1} parent=5 // pred_region
        %s221 = ssub.s32 %s18, 1
        %s222 = sand.u32 %s31, 1
        %s223 = scalar_lea.sflag [#allocation3], %s222
        %s224 = sand.u32 %s31, 1
        %s225 = smul.addr %s224, 32
        %s226 = scalar_lea.vmem [#allocation2], %s225
        // Predicated region
        $region41: #{tpu_custom_call.1} parent=39 // pred_check
          %p227 = pneg %p44
        $region42: #{tpu_custom_call.1} parent=39 // pred_check_branch
          %229 = sbr.rel (%p227) target = $region44
        $region43: #{tpu_custom_call.1} parent=39 // pred_region
          %230 = dma.done %s223, 512
        $region44: #{tpu_custom_call.1} parent=39 // pred_fallthru
          _
        // Predicated region
        $region45: #{tpu_custom_call.1} parent=39 // pred_check
          %p231 = pneg %p65
        $region46: #{tpu_custom_call.1} parent=39 // pred_check_branch
          %233 = sbr.rel (%p231) target = $region48
        $region47: #{tpu_custom_call.1} parent=39 // pred_region
          %234 = dma.done [#allocation6], 128
        $region48: #{tpu_custom_call.1} parent=39 // pred_fallthru
          _
        %s235 = sand.u32 %s31, 1
        %s236 = scalar_lea.sflag [#allocation3], %s235
        %s237 = sand.u32 %s31, 1
        %s238 = smul.addr %s237, 32
        %s239 = scalar_lea.vmem [#allocation2], %s238
        %p240 = pneg %p44
        %p241 = pneg %p41
        %p242 = pneg %p65
        %p243 = pneg %p62
        %p244 = pneg %p86
        %p245 = pneg %p83
        %p246 = pneg %p107
        %p247 = pneg %p104
        %p248 = pneg %p128
        %p249 = pneg %p125
        %p250 = pneg %p154
        %p251 = pneg %p151
        %s252 = sand.u32 %s141, 1
        %s253 = scalar_lea.sflag [#allocation4], %s252
        %s254 = sand.u32 %s141, 1
        %s255 = smul.addr %s254, 16
        %s256 = scalar_lea.vmem [#allocation7], %s255
        %s257 = smul.u32 2, %s23
        %s258 = smul.u32 2, %s23
        %v259 = vld [vmem:[%s226] sm:$0xff]
        %v260 = vld [vmem:[%s226 + $0x8] sm:$0xff]
        %v261 = vld [vmem:[%s226 + $0x10] sm:$0xff]
        %v262 = vld [vmem:[%s226 + $0x18] sm:$0xff]
        %263 = vxpose.xlu0.b32.start [1/16] %v259, 128
        %264 = vxpose.xlu0.b32.cont [2/16] 0.0, 128
        %265 = vxpose.xlu0.b32.cont [3/16] 0.0, 128
        %266 = vxpose.xlu0.b32.cont [4/16] 0.0, 128
        %267 = vxpose.xlu0.b32.cont [5/16] 0.0, 128
        %268 = vxpose.xlu0.b32.cont [6/16] 0.0, 128
        %269 = vxpose.xlu0.b32.cont [7/16] 0.0, 128
        %270 = vxpose.xlu0.b32.cont [8/16] 0.0, 128
        %271 = vxpose.xlu0.b32.cont [9/16] 0.0, 128
        %272 = vxpose.xlu0.b32.cont [10/16] 0.0, 128
        %273 = vxpose.xlu0.b32.cont [11/16] 0.0, 128
        %274 = vxpose.xlu0.b32.cont [12/16] 0.0, 128
        %275 = vxpose.xlu0.b32.cont [13/16] 0.0, 128
        %276 = vxpose.xlu0.b32.cont [14/16] 0.0, 128
        %277 = vxpose.xlu0.b32.cont [15/16] 0.0, 128
        %278 = vxpose.xlu0.b32.end [16/16] 0.0, 128
        %v279 = vpop.trf.xlu0
        %v280 = vpop.trf.xlu0
        %v281 = vpop.trf.xlu0
        %v282 = vpop.trf.xlu0
        %v283 = vpop.trf.xlu0
        %v284 = vpop.trf.xlu0
        %v285 = vpop.trf.xlu0
        %v286 = vpop.trf.xlu0
        %v287 = vpop.trf.xlu0
        %v288 = vpop.trf.xlu0
        %v289 = vpop.trf.xlu0
        %v290 = vpop.trf.xlu0
        %v291 = vpop.trf.xlu0
        %v292 = vpop.trf.xlu0
        %v293 = vpop.trf.xlu0
        %v294 = vpop.trf.xlu0
        %295 = vxpose.xlu0.b32.start [1/16] %v260, 128
        %296 = vxpose.xlu0.b32.cont [2/16] 0.0, 128
        %297 = vxpose.xlu0.b32.cont [3/16] 0.0, 128
        %298 = vxpose.xlu0.b32.cont [4/16] 0.0, 128
        %299 = vxpose.xlu0.b32.cont [5/16] 0.0, 128
        %300 = vxpose.xlu0.b32.cont [6/16] 0.0, 128
        %301 = vxpose.xlu0.b32.cont [7/16] 0.0, 128
        %302 = vxpose.xlu0.b32.cont [8/16] 0.0, 128
        %303 = vxpose.xlu0.b32.cont [9/16] 0.0, 128
        %304 = vxpose.xlu0.b32.cont [10/16] 0.0, 128
        %305 = vxpose.xlu0.b32.cont [11/16] 0.0, 128
        %306 = vxpose.xlu0.b32.cont [12/16] 0.0, 128
        %307 = vxpose.xlu0.b32.cont [13/16] 0.0, 128
        %308 = vxpose.xlu0.b32.cont [14/16] 0.0, 128
        %309 = vxpose.xlu0.b32.cont [15/16] 0.0, 128
        %310 = vxpose.xlu0.b32.end [16/16] 0.0, 128
        %v311 = vpop.trf.xlu0
        %v312 = vpop.trf.xlu0
        %v313 = vpop.trf.xlu0
        %v314 = vpop.trf.xlu0
        %v315 = vpop.trf.xlu0
        %v316 = vpop.trf.xlu0
        %v317 = vpop.trf.xlu0
        %v318 = vpop.trf.xlu0
        %v319 = vpop.trf.xlu0
        %v320 = vpop.trf.xlu0
        %v321 = vpop.trf.xlu0
        %v322 = vpop.trf.xlu0
        %v323 = vpop.trf.xlu0
        %v324 = vpop.trf.xlu0
        %v325 = vpop.trf.xlu0
        %v326 = vpop.trf.xlu0
        %327 = vxpose.xlu0.b32.start [1/16] %v261, 128
        %328 = vxpose.xlu0.b32.cont [2/16] 0.0, 128
        %329 = vxpose.xlu0.b32.cont [3/16] 0.0, 128
        %330 = vxpose.xlu0.b32.cont [4/16] 0.0, 128
        %331 = vxpose.xlu0.b32.cont [5/16] 0.0, 128
        %332 = vxpose.xlu0.b32.cont [6/16] 0.0, 128
        %333 = vxpose.xlu0.b32.cont [7/16] 0.0, 128
        %334 = vxpose.xlu0.b32.cont [8/16] 0.0, 128
        %335 = vxpose.xlu0.b32.cont [9/16] 0.0, 128
        %336 = vxpose.xlu0.b32.cont [10/16] 0.0, 128
        %337 = vxpose.xlu0.b32.cont [11/16] 0.0, 128
        %338 = vxpose.xlu0.b32.cont [12/16] 0.0, 128
        %339 = vxpose.xlu0.b32.cont [13/16] 0.0, 128
        %340 = vxpose.xlu0.b32.cont [14/16] 0.0, 128
        %341 = vxpose.xlu0.b32.cont [15/16] 0.0, 128
        %342 = vxpose.xlu0.b32.end [16/16] 0.0, 128
        %v343 = vpop.trf.xlu0
        %v344 = vpop.trf.xlu0
        %v345 = vpop.trf.xlu0
        %v346 = vpop.trf.xlu0
        %v347 = vpop.trf.xlu0
        %v348 = vpop.trf.xlu0
        %v349 = vpop.trf.xlu0
        %v350 = vpop.trf.xlu0
        %v351 = vpop.trf.xlu0
        %v352 = vpop.trf.xlu0
        %v353 = vpop.trf.xlu0
        %v354 = vpop.trf.xlu0
        %v355 = vpop.trf.xlu0
        %v356 = vpop.trf.xlu0
        %v357 = vpop.trf.xlu0
        %v358 = vpop.trf.xlu0
        %359 = vxpose.xlu0.b32.start [1/16] %v262, 128
        %360 = vxpose.xlu0.b32.cont [2/16] 0.0, 128
        %361 = vxpose.xlu0.b32.cont [3/16] 0.0, 128
        %362 = vxpose.xlu0.b32.cont [4/16] 0.0, 128
        %363 = vxpose.xlu0.b32.cont [5/16] 0.0, 128
        %364 = vxpose.xlu0.b32.cont [6/16] 0.0, 128
        %365 = vxpose.xlu0.b32.cont [7/16] 0.0, 128
        %366 = vxpose.xlu0.b32.cont [8/16] 0.0, 128
        %367 = vxpose.xlu0.b32.cont [9/16] 0.0, 128
        %368 = vxpose.xlu0.b32.cont [10/16] 0.0, 128
        %369 = vxpose.xlu0.b32.cont [11/16] 0.0, 128
        %370 = vxpose.xlu0.b32.cont [12/16] 0.0, 128
        %371 = vxpose.xlu0.b32.cont [13/16] 0.0, 128
        %372 = vxpose.xlu0.b32.cont [14/16] 0.0, 128
        %373 = vxpose.xlu0.b32.cont [15/16] 0.0, 128
        %374 = vxpose.xlu0.b32.end [16/16] 0.0, 128
        %v375 = vpop.trf.xlu0
        %v376 = vpop.trf.xlu0
        %v377 = vpop.trf.xlu0
        %v378 = vpop.trf.xlu0
        %v379 = vpop.trf.xlu0
        %v380 = vpop.trf.xlu0
        %v381 = vpop.trf.xlu0
        %v382 = vpop.trf.xlu0
        %v383 = vpop.trf.xlu0
        %v384 = vpop.trf.xlu0
        %v385 = vpop.trf.xlu0
        %v386 = vpop.trf.xlu0
        %v387 = vpop.trf.xlu0
        %v388 = vpop.trf.xlu0
        %v389 = vpop.trf.xlu0
        %v390 = vpop.trf.xlu0
        %v391 = vld [vmem:[#allocation5] sm:$0xff]
        %v392 = vld [vmem:[%s2] sm:$0x1]
        %v394 = vlaneseq
        %v395 = vshrl.u32 %v394, 7
        %v396 = vsub.s32 0, %v395
        %v397 = vrot.slane %v392, %v396
        %vm399 = vcmask 64512
        %v401 = vsel %vm399, %v279, 0
        %v404 = vsel %vm399, %v280, 0
        %v407 = vsel %vm399, %v281, 0
        %v410 = vsel %vm399, %v282, 0
        %v413 = vsel %vm399, %v283, 0
        %v416 = vsel %vm399, %v284, 0
        %v419 = vsel %vm399, %v285, 0
        %v422 = vsel %vm399, %v286, 0
        %v425 = vsel %vm399, %v287, 0
        %v428 = vsel %vm399, %v288, 0
        %v431 = vsel %vm399, %v289, 0
        %v434 = vsel %vm399, %v290, 0
        %v437 = vsel %vm399, %v291, 0
        %v440 = vsel %vm399, %v292, 0
        %v443 = vsel %vm399, %v293, 0
        %v446 = vsel %vm399, %v294, 0
        %v449 = vsel %vm399, %v311, 0
        %v452 = vsel %vm399, %v312, 0
        %v455 = vsel %vm399, %v313, 0
        %v458 = vsel %vm399, %v314, 0
        %v461 = vsel %vm399, %v315, 0
        %v464 = vsel %vm399, %v316, 0
        %v467 = vsel %vm399, %v317, 0
        %v470 = vsel %vm399, %v318, 0
        %v473 = vsel %vm399, %v319, 0
        %v476 = vsel %vm399, %v320, 0
        %v479 = vsel %vm399, %v321, 0
        %v482 = vsel %vm399, %v322, 0
        %v485 = vsel %vm399, %v323, 0
        %v488 = vsel %vm399, %v324, 0
        %v491 = vsel %vm399, %v325, 0
        %v494 = vsel %vm399, %v326, 0
        %v497 = vsel %vm399, %v343, 0
        %v500 = vsel %vm399, %v344, 0
        %v503 = vsel %vm399, %v345, 0
        %v506 = vsel %vm399, %v346, 0
        %v509 = vsel %vm399, %v347, 0
        %v512 = vsel %vm399, %v348, 0
        %v515 = vsel %vm399, %v349, 0
        %v518 = vsel %vm399, %v350, 0
        %v521 = vsel %vm399, %v351, 0
        %v524 = vsel %vm399, %v352, 0
        %v527 = vsel %vm399, %v353, 0
        %v530 = vsel %vm399, %v354, 0
        %v533 = vsel %vm399, %v355, 0
        %v536 = vsel %vm399, %v356, 0
        %v539 = vsel %vm399, %v357, 0
        %v542 = vsel %vm399, %v358, 0
        %v545 = vsel %vm399, %v375, 0
        %v548 = vsel %vm399, %v376, 0
        %v551 = vsel %vm399, %v377, 0
        %v554 = vsel %vm399, %v378, 0
        %v557 = vsel %vm399, %v379, 0
        %v560 = vsel %vm399, %v380, 0
        %v563 = vsel %vm399, %v381, 0
        %v566 = vsel %vm399, %v382, 0
        %v569 = vsel %vm399, %v383, 0
        %v572 = vsel %vm399, %v384, 0
        %v575 = vsel %vm399, %v385, 0
        %v578 = vsel %vm399, %v386, 0
        %v581 = vsel %vm399, %v387, 0
        %v584 = vsel %vm399, %v388, 0
        %v587 = vsel %vm399, %v389, 0
        %v590 = vsel %vm399, %v390, 0
        %592 = vmatprep.subr.mxu0 0.0
        %593 = vmatpush1.msra.mxu0 %v391
        %594 = vmatprep.subr.mxu0 0.0
        %595 = vmatpush1.msra.mxu0 0.0
        %596 = vmatprep.subr.mxu0 0.0
        %597 = vmatpush1.msra.mxu0 0.0
        %598 = vmatprep.subr.mxu0 0.0
        %599 = vmatpush1.msra.mxu0 0.0
        %600 = vmatprep.subr.mxu0 0.0
        %601 = vmatpush1.msra.mxu0 0.0
        %602 = vmatprep.subr.mxu0 0.0
        %603 = vmatpush1.msra.mxu0 0.0
        %604 = vmatprep.subr.mxu0 0.0
        %605 = vmatpush1.msra.mxu0 0.0
        %606 = vmatprep.subr.mxu0 0.0
        %607 = vmatpush1.msra.mxu0 0.0
        %608 = vmatprep.subr.mxu0 0.0
        %609 = vmatpush1.msra.mxu0 0.0
        %610 = vmatprep.subr.mxu0 0.0
        %611 = vmatpush1.msra.mxu0 0.0
        %612 = vmatprep.subr.mxu0 0.0
        %613 = vmatpush1.msra.mxu0 0.0
        %614 = vmatprep.subr.mxu0 0.0
        %615 = vmatpush1.msra.mxu0 0.0
        %616 = vmatprep.subr.mxu0 0.0
        %617 = vmatpush1.msra.mxu0 0.0
        %618 = vmatprep.subr.mxu0 0.0
        %619 = vmatpush1.msra.mxu0 0.0
        %620 = vmatprep.subr.mxu0 0.0
        %621 = vmatpush1.msra.mxu0 0.0
        %622 = vmatprep.subr.mxu0 0.0
        %623 = vmatpush1.msra.mxu0 0.0
        %624 = vmatprep.subr.mxu0 0.0
        %625 = vmatpush1.msra.mxu0 0.0
        %626 = vmatprep.subr.mxu0 0.0
        %627 = vmatpush1.msra.mxu0 0.0
        %628 = vmatprep.subr.mxu0 0.0
        %629 = vmatpush1.msra.mxu0 0.0
        %630 = vmatprep.subr.mxu0 0.0
        %631 = vmatpush1.msra.mxu0 0.0
        %632 = vmatprep.subr.mxu0 0.0
        %633 = vmatpush1.msra.mxu0 0.0
        %634 = vmatprep.subr.mxu0 0.0
        %635 = vmatpush1.msra.mxu0 0.0
        %636 = vmatprep.subr.mxu0 0.0
        %637 = vmatpush1.msra.mxu0 0.0
        %638 = vmatprep.subr.mxu0 0.0
        %639 = vmatpush1.msra.mxu0 0.0
        %640 = vmatprep.subr.mxu0 0.0
        %641 = vmatpush1.msra.mxu0 0.0
        %642 = vmatprep.subr.mxu0 0.0
        %643 = vmatpush1.msra.mxu0 0.0
        %644 = vmatprep.subr.mxu0 0.0
        %645 = vmatpush1.msra.mxu0 0.0
        %646 = vmatprep.subr.mxu0 0.0
        %647 = vmatpush1.msra.mxu0 0.0
        %648 = vmatprep.subr.mxu0 0.0
        %649 = vmatpush1.msra.mxu0 0.0
        %650 = vmatprep.subr.mxu0 0.0
        %651 = vmatpush1.msra.mxu0 0.0
        %652 = vmatprep.subr.mxu0 0.0
        %653 = vmatpush1.msra.mxu0 0.0
        %654 = vmatprep.subr.mxu0 0.0
        %655 = vmatpush1.msra.mxu0 0.0
        %656 = vmatprep.mubr.f32.mxu0 0.0
        %657 = vmatmul.mubr.f32.gmra.mrb[0].mxu0 %v401
        %v658 = vpop.f32.mrb[0].mxu0
        %v659 = vadd.f32 %v397, %v658
        %v660 = vpop.f32.mrb[0].mxu0
        %661 = vmatprep.mubr.f32.mxu0 0.0
        %662 = vmatmul.mubr.f32.gmra.mrb[0].mxu0 %v404
        %v663 = vpop.f32.mrb[0].mxu0
        %v664 = vadd.f32 %v397, %v663
        %v665 = vpop.f32.mrb[0].mxu0
        %666 = vmatprep.mubr.f32.mxu0 0.0
        %667 = vmatmul.mubr.f32.gmra.mrb[0].mxu0 %v407
        %v668 = vpop.f32.mrb[0].mxu0
        %v669 = vadd.f32 %v397, %v668
        %v670 = vpop.f32.mrb[0].mxu0
        %671 = vmatprep.mubr.f32.mxu0 0.0
        %672 = vmatmul.mubr.f32.gmra.mrb[0].mxu0 %v410
        %v673 = vpop.f32.mrb[0].mxu0
        %v674 = vadd.f32 %v397, %v673
        %v675 = vpop.f32.mrb[0].mxu0
        %676 = vmatprep.mubr.f32.mxu0 0.0
        %677 = vmatmul.mubr.f32.gmra.mrb[0].mxu0 %v413
        %v678 = vpop.f32.mrb[0].mxu0
        %v679 = vadd.f32 %v397, %v678
        %v680 = vpop.f32.mrb[0].mxu0
        %681 = vmatprep.mubr.f32.mxu0 0.0
        %682 = vmatmul.mubr.f32.gmra.mrb[0].mxu0 %v416
        %v683 = vpop.f32.mrb[0].mxu0
        %v684 = vadd.f32 %v397, %v683
        %v685 = vpop.f32.mrb[0].mxu0
        %686 = vmatprep.mubr.f32.mxu0 0.0
        %687 = vmatmul.mubr.f32.gmra.mrb[0].mxu0 %v419
        %v688 = vpop.f32.mrb[0].mxu0
        %v689 = vadd.f32 %v397, %v688
        %v690 = vpop.f32.mrb[0].mxu0
        %691 = vmatprep.mubr.f32.mxu0 0.0
        %692 = vmatmul.mubr.f32.gmra.mrb[0].mxu0 %v422
        %v693 = vpop.f32.mrb[0].mxu0
        %v694 = vadd.f32 %v397, %v693
        %v695 = vpop.f32.mrb[0].mxu0
        %696 = vmatprep.mubr.f32.mxu0 0.0
        %697 = vmatmul.mubr.f32.gmra.mrb[0].mxu0 %v425
        %v698 = vpop.f32.mrb[0].mxu0
        %v699 = vadd.f32 %v397, %v698
        %v700 = vpop.f32.mrb[0].mxu0
        %701 = vmatprep.mubr.f32.mxu0 0.0
        %702 = vmatmul.mubr.f32.gmra.mrb[0].mxu0 %v428
        %v703 = vpop.f32.mrb[0].mxu0
        %v704 = vadd.f32 %v397, %v703
        %v705 = vpop.f32.mrb[0].mxu0
        %706 = vmatprep.mubr.f32.mxu0 0.0
        %707 = vmatmul.mubr.f32.gmra.mrb[0].mxu0 %v431
        %v708 = vpop.f32.mrb[0].mxu0
        %v709 = vadd.f32 %v397, %v708
        %v710 = vpop.f32.mrb[0].mxu0
        %711 = vmatprep.mubr.f32.mxu0 0.0
        %712 = vmatmul.mubr.f32.gmra.mrb[0].mxu0 %v434
        %v713 = vpop.f32.mrb[0].mxu0
        %v714 = vadd.f32 %v397, %v713
        %v715 = vpop.f32.mrb[0].mxu0
        %716 = vmatprep.mubr.f32.mxu0 0.0
        %717 = vmatmul.mubr.f32.gmra.mrb[0].mxu0 %v437
        %v718 = vpop.f32.mrb[0].mxu0
        %v719 = vadd.f32 %v397, %v718
        %v720 = vpop.f32.mrb[0].mxu0
        %721 = vmatprep.mubr.f32.mxu0 0.0
        %722 = vmatmul.mubr.f32.gmra.mrb[0].mxu0 %v440
        %v723 = vpop.f32.mrb[0].mxu0
        %v724 = vadd.f32 %v397, %v723
        %v725 = vpop.f32.mrb[0].mxu0
        %726 = vmatprep.mubr.f32.mxu0 0.0
        %727 = vmatmul.mubr.f32.gmra.mrb[0].mxu0 %v443
        %v728 = vpop.f32.mrb[0].mxu0
        %v729 = vadd.f32 %v397, %v728
        %v730 = vpop.f32.mrb[0].mxu0
        %731 = vmatprep.mubr.f32.mxu0 0.0
        %732 = vmatmul.mubr.f32.gmra.mrb[0].mxu0 %v446
        %v733 = vpop.f32.mrb[0].mxu0
        %v734 = vadd.f32 %v397, %v733
        %v735 = vpop.f32.mrb[0].mxu0
        %736 = vmatprep.mubr.f32.mxu0 0.0
        %737 = vmatmul.mubr.f32.gmra.mrb[0].mxu0 %v449
        %v738 = vpop.f32.mrb[0].mxu0
        %v739 = vadd.f32 %v397, %v738
        %v740 = vpop.f32.mrb[0].mxu0
        %741 = vmatprep.mubr.f32.mxu0 0.0
        %742 = vmatmul.mubr.f32.gmra.mrb[0].mxu0 %v452
        %v743 = vpop.f32.mrb[0].mxu0
        %v744 = vadd.f32 %v397, %v743
        %v745 = vpop.f32.mrb[0].mxu0
        %746 = vmatprep.mubr.f32.mxu0 0.0
        %747 = vmatmul.mubr.f32.gmra.mrb[0].mxu0 %v455
        %v748 = vpop.f32.mrb[0].mxu0
        %v749 = vadd.f32 %v397, %v748
        %v750 = vpop.f32.mrb[0].mxu0
        %751 = vmatprep.mubr.f32.mxu0 0.0
        %752 = vmatmul.mubr.f32.gmra.mrb[0].mxu0 %v458
        %v753 = vpop.f32.mrb[0].mxu0
        %v754 = vadd.f32 %v397, %v753
        %v755 = vpop.f32.mrb[0].mxu0
        %756 = vmatprep.mubr.f32.mxu0 0.0
        %757 = vmatmul.mubr.f32.gmra.mrb[0].mxu0 %v461
        %v758 = vpop.f32.mrb[0].mxu0
        %v759 = vadd.f32 %v397, %v758
        %v760 = vpop.f32.mrb[0].mxu0
        %761 = vmatprep.mubr.f32.mxu0 0.0
        %762 = vmatmul.mubr.f32.gmra.mrb[0].mxu0 %v464
        %v763 = vpop.f32.mrb[0].mxu0
        %v764 = vadd.f32 %v397, %v763
        %v765 = vpop.f32.mrb[0].mxu0
        %766 = vmatprep.mubr.f32.mxu0 0.0
        %767 = vmatmul.mubr.f32.gmra.mrb[0].mxu0 %v467
        %v768 = vpop.f32.mrb[0].mxu0
        %v769 = vadd.f32 %v397, %v768
        %v770 = vpop.f32.mrb[0].mxu0
        %771 = vmatprep.mubr.f32.mxu0 0.0
        %772 = vmatmul.mubr.f32.gmra.mrb[0].mxu0 %v470
        %v773 = vpop.f32.mrb[0].mxu0
        %v774 = vadd.f32 %v397, %v773
        %v775 = vpop.f32.mrb[0].mxu0
        %776 = vmatprep.mubr.f32.mxu0 0.0
        %777 = vmatmul.mubr.f32.gmra.mrb[0].mxu0 %v473
        %v778 = vpop.f32.mrb[0].mxu0
        %v779 = vadd.f32 %v397, %v778
        %v780 = vpop.f32.mrb[0].mxu0
        %781 = vmatprep.mubr.f32.mxu0 0.0
        %782 = vmatmul.mubr.f32.gmra.mrb[0].mxu0 %v476
        %v783 = vpop.f32.mrb[0].mxu0
        %v784 = vadd.f32 %v397, %v783
        %v785 = vpop.f32.mrb[0].mxu0
        %786 = vmatprep.mubr.f32.mxu0 0.0
        %787 = vmatmul.mubr.f32.gmra.mrb[0].mxu0 %v479
        %v788 = vpop.f32.mrb[0].mxu0
        %v789 = vadd.f32 %v397, %v788
        %v790 = vpop.f32.mrb[0].mxu0
        %791 = vmatprep.mubr.f32.mxu0 0.0
        %792 = vmatmul.mubr.f32.gmra.mrb[0].mxu0 %v482
        %v793 = vpop.f32.mrb[0].mxu0
        %v794 = vadd.f32 %v397, %v793
        %v795 = vpop.f32.mrb[0].mxu0
        %796 = vmatprep.mubr.f32.mxu0 0.0
        %797 = vmatmul.mubr.f32.gmra.mrb[0].mxu0 %v485
        %v798 = vpop.f32.mrb[0].mxu0
        %v799 = vadd.f32 %v397, %v798
        %v800 = vpop.f32.mrb[0].mxu0
        %801 = vmatprep.mubr.f32.mxu0 0.0
        %802 = vmatmul.mubr.f32.gmra.mrb[0].mxu0 %v488
        %v803 = vpop.f32.mrb[0].mxu0
        %v804 = vadd.f32 %v397, %v803
        %v805 = vpop.f32.mrb[0].mxu0
        %806 = vmatprep.mubr.f32.mxu0 0.0
        %807 = vmatmul.mubr.f32.gmra.mrb[0].mxu0 %v491
        %v808 = vpop.f32.mrb[0].mxu0
        %v809 = vadd.f32 %v397, %v808
        %v810 = vpop.f32.mrb[0].mxu0
        %811 = vmatprep.mubr.f32.mxu0 0.0
        %812 = vmatmul.mubr.f32.gmra.mrb[0].mxu0 %v494
        %v813 = vpop.f32.mrb[0].mxu0
        %v814 = vadd.f32 %v397, %v813
        %v815 = vpop.f32.mrb[0].mxu0
        %816 = vmatprep.mubr.f32.mxu0 0.0
        %817 = vmatmul.mubr.f32.gmra.mrb[0].mxu0 %v497
        %v818 = vpop.f32.mrb[0].mxu0
        %v819 = vadd.f32 %v397, %v818
        %v820 = vpop.f32.mrb[0].mxu0
        %821 = vmatprep.mubr.f32.mxu0 0.0
        %822 = vmatmul.mubr.f32.gmra.mrb[0].mxu0 %v500
        %v823 = vpop.f32.mrb[0].mxu0
        %v824 = vadd.f32 %v397, %v823
        %v825 = vpop.f32.mrb[0].mxu0
        %826 = vmatprep.mubr.f32.mxu0 0.0
        %827 = vmatmul.mubr.f32.gmra.mrb[0].mxu0 %v503
        %v828 = vpop.f32.mrb[0].mxu0
        %v829 = vadd.f32 %v397, %v828
        %v830 = vpop.f32.mrb[0].mxu0
        %831 = vmatprep.mubr.f32.mxu0 0.0
        %832 = vmatmul.mubr.f32.gmra.mrb[0].mxu0 %v506
        %v833 = vpop.f32.mrb[0].mxu0
        %v834 = vadd.f32 %v397, %v833
        %v835 = vpop.f32.mrb[0].mxu0
        %836 = vmatprep.mubr.f32.mxu0 0.0
        %837 = vmatmul.mubr.f32.gmra.mrb[0].mxu0 %v509
        %v838 = vpop.f32.mrb[0].mxu0
        %v839 = vadd.f32 %v397, %v838
        %v840 = vpop.f32.mrb[0].mxu0
        %841 = vmatprep.mubr.f32.mxu0 0.0
        %842 = vmatmul.mubr.f32.gmra.mrb[0].mxu0 %v512
        %v843 = vpop.f32.mrb[0].mxu0
        %v844 = vadd.f32 %v397, %v843
        %v845 = vpop.f32.mrb[0].mxu0
        %846 = vmatprep.mubr.f32.mxu0 0.0
        %847 = vmatmul.mubr.f32.gmra.mrb[0].mxu0 %v515
        %v848 = vpop.f32.mrb[0].mxu0
        %v849 = vadd.f32 %v397, %v848
        %v850 = vpop.f32.mrb[0].mxu0
        %851 = vmatprep.mubr.f32.mxu0 0.0
        %852 = vmatmul.mubr.f32.gmra.mrb[0].mxu0 %v518
        %v853 = vpop.f32.mrb[0].mxu0
        %v854 = vadd.f32 %v397, %v853
        %v855 = vpop.f32.mrb[0].mxu0
        %856 = vmatprep.mubr.f32.mxu0 0.0
        %857 = vmatmul.mubr.f32.gmra.mrb[0].mxu0 %v521
        %v858 = vpop.f32.mrb[0].mxu0
        %v859 = vadd.f32 %v397, %v858
        %v860 = vpop.f32.mrb[0].mxu0
        %861 = vmatprep.mubr.f32.mxu0 0.0
        %862 = vmatmul.mubr.f32.gmra.mrb[0].mxu0 %v524
        %v863 = vpop.f32.mrb[0].mxu0
        %v864 = vadd.f32 %v397, %v863
        %v865 = vpop.f32.mrb[0].mxu0
        %866 = vmatprep.mubr.f32.mxu0 0.0
        %867 = vmatmul.mubr.f32.gmra.mrb[0].mxu0 %v527
        %v868 = vpop.f32.mrb[0].mxu0
        %v869 = vadd.f32 %v397, %v868
        %v870 = vpop.f32.mrb[0].mxu0
        %871 = vmatprep.mubr.f32.mxu0 0.0
        %872 = vmatmul.mubr.f32.gmra.mrb[0].mxu0 %v530
        %v873 = vpop.f32.mrb[0].mxu0
        %v874 = vadd.f32 %v397, %v873
        %v875 = vpop.f32.mrb[0].mxu0
        %876 = vmatprep.mubr.f32.mxu0 0.0
        %877 = vmatmul.mubr.f32.gmra.mrb[0].mxu0 %v533
        %v878 = vpop.f32.mrb[0].mxu0
        %v879 = vadd.f32 %v397, %v878
        %v880 = vpop.f32.mrb[0].mxu0
        %881 = vmatprep.mubr.f32.mxu0 0.0
        %882 = vmatmul.mubr.f32.gmra.mrb[0].mxu0 %v536
        %v883 = vpop.f32.mrb[0].mxu0
        %v884 = vadd.f32 %v397, %v883
        %v885 = vpop.f32.mrb[0].mxu0
        %886 = vmatprep.mubr.f32.mxu0 0.0
        %887 = vmatmul.mubr.f32.gmra.mrb[0].mxu0 %v539
        %v888 = vpop.f32.mrb[0].mxu0
        %v889 = vadd.f32 %v397, %v888
        %v890 = vpop.f32.mrb[0].mxu0
        %891 = vmatprep.mubr.f32.mxu0 0.0
        %892 = vmatmul.mubr.f32.gmra.mrb[0].mxu0 %v542
        %v893 = vpop.f32.mrb[0].mxu0
        %v894 = vadd.f32 %v397, %v893
        %v895 = vpop.f32.mrb[0].mxu0
        %896 = vmatprep.mubr.f32.mxu0 0.0
        %897 = vmatmul.mubr.f32.gmra.mrb[0].mxu0 %v545
        %v898 = vpop.f32.mrb[0].mxu0
        %v899 = vadd.f32 %v397, %v898
        %v900 = vpop.f32.mrb[0].mxu0
        %901 = vmatprep.mubr.f32.mxu0 0.0
        %902 = vmatmul.mubr.f32.gmra.mrb[0].mxu0 %v548
        %v903 = vpop.f32.mrb[0].mxu0
        %v904 = vadd.f32 %v397, %v903
        %v905 = vpop.f32.mrb[0].mxu0
        %906 = vmatprep.mubr.f32.mxu0 0.0
        %907 = vmatmul.mubr.f32.gmra.mrb[0].mxu0 %v551
        %v908 = vpop.f32.mrb[0].mxu0
        %v909 = vadd.f32 %v397, %v908
        %v910 = vpop.f32.mrb[0].mxu0
        %911 = vmatprep.mubr.f32.mxu0 0.0
        %912 = vmatmul.mubr.f32.gmra.mrb[0].mxu0 %v554
        %v913 = vpop.f32.mrb[0].mxu0
        %v914 = vadd.f32 %v397, %v913
        %v915 = vpop.f32.mrb[0].mxu0
        %916 = vmatprep.mubr.f32.mxu0 0.0
        %917 = vmatmul.mubr.f32.gmra.mrb[0].mxu0 %v557
        %v918 = vpop.f32.mrb[0].mxu0
        %v919 = vadd.f32 %v397, %v918
        %v920 = vpop.f32.mrb[0].mxu0
        %921 = vmatprep.mubr.f32.mxu0 0.0
        %922 = vmatmul.mubr.f32.gmra.mrb[0].mxu0 %v560
        %v923 = vpop.f32.mrb[0].mxu0
        %v924 = vadd.f32 %v397, %v923
        %v925 = vpop.f32.mrb[0].mxu0
        %926 = vmatprep.mubr.f32.mxu0 0.0
        %927 = vmatmul.mubr.f32.gmra.mrb[0].mxu0 %v563
        %v928 = vpop.f32.mrb[0].mxu0
        %v929 = vadd.f32 %v397, %v928
        %v930 = vpop.f32.mrb[0].mxu0
        %931 = vmatprep.mubr.f32.mxu0 0.0
        %932 = vmatmul.mubr.f32.gmra.mrb[0].mxu0 %v566
        %v933 = vpop.f32.mrb[0].mxu0
        %v934 = vadd.f32 %v397, %v933
        %v935 = vpop.f32.mrb[0].mxu0
        %936 = vmatprep.mubr.f32.mxu0 0.0
        %937 = vmatmul.mubr.f32.gmra.mrb[0].mxu0 %v569
        %v938 = vpop.f32.mrb[0].mxu0
        %v939 = vadd.f32 %v397, %v938
        %v940 = vpop.f32.mrb[0].mxu0
        %941 = vmatprep.mubr.f32.mxu0 0.0
        %942 = vmatmul.mubr.f32.gmra.mrb[0].mxu0 %v572
        %v943 = vpop.f32.mrb[0].mxu0
        %v944 = vadd.f32 %v397, %v943
        %v945 = vpop.f32.mrb[0].mxu0
        %946 = vmatprep.mubr.f32.mxu0 0.0
        %947 = vmatmul.mubr.f32.gmra.mrb[0].mxu0 %v575
        %v948 = vpop.f32.mrb[0].mxu0
        %v949 = vadd.f32 %v397, %v948
        %v950 = vpop.f32.mrb[0].mxu0
        %951 = vmatprep.mubr.f32.mxu0 0.0
        %952 = vmatmul.mubr.f32.gmra.mrb[0].mxu0 %v578
        %v953 = vpop.f32.mrb[0].mxu0
        %v954 = vadd.f32 %v397, %v953
        %v955 = vpop.f32.mrb[0].mxu0
        %956 = vmatprep.mubr.f32.mxu0 0.0
        %957 = vmatmul.mubr.f32.gmra.mrb[0].mxu0 %v581
        %v958 = vpop.f32.mrb[0].mxu0
        %v959 = vadd.f32 %v397, %v958
        %v960 = vpop.f32.mrb[0].mxu0
        %961 = vmatprep.mubr.f32.mxu0 0.0
        %962 = vmatmul.mubr.f32.gmra.mrb[0].mxu0 %v584
        %v963 = vpop.f32.mrb[0].mxu0
        %v964 = vadd.f32 %v397, %v963
        %v965 = vpop.f32.mrb[0].mxu0
        %966 = vmatprep.mubr.f32.mxu0 0.0
        %967 = vmatmul.mubr.f32.gmra.mrb[0].mxu0 %v587
        %v968 = vpop.f32.mrb[0].mxu0
        %v969 = vadd.f32 %v397, %v968
        %v970 = vpop.f32.mrb[0].mxu0
        %971 = vmatprep.mubr.f32.mxu0 0.0
        %972 = vmatmul.mubr.f32.gmra.mrb[0].mxu0 %v590
        %v973 = vpop.f32.mrb[0].mxu0
        %v974 = vadd.f32 %v397, %v973
        %v975 = vpop.f32.mrb[0].mxu0
        %976 = vdwg.mxu0
        %v977 = vmul.f32 %v659, 0.5
        %v978 = vmul.f32 %v664, 0.5
        %v979 = vmul.f32 %v669, 0.5
        %v980 = vmul.f32 %v674, 0.5
        %v981 = vmul.f32 %v679, 0.5
        %v982 = vmul.f32 %v684, 0.5
        %v983 = vmul.f32 %v689, 0.5
        %v984 = vmul.f32 %v694, 0.5
        %v985 = vmul.f32 %v699, 0.5
        %v986 = vmul.f32 %v704, 0.5
        %v987 = vmul.f32 %v709, 0.5
        %v988 = vmul.f32 %v714, 0.5
        %v989 = vmul.f32 %v719, 0.5
        %v990 = vmul.f32 %v724, 0.5
        %v991 = vmul.f32 %v729, 0.5
        %v992 = vmul.f32 %v734, 0.5
        %v993 = vmul.f32 %v739, 0.5
        %v994 = vmul.f32 %v744, 0.5
        %v995 = vmul.f32 %v749, 0.5
        %v996 = vmul.f32 %v754, 0.5
        %v997 = vmul.f32 %v759, 0.5
        %v998 = vmul.f32 %v764, 0.5
        %v999 = vmul.f32 %v769, 0.5
        %v1000 = vmul.f32 %v774, 0.5
        %v1001 = vmul.f32 %v779, 0.5
        %v1002 = vmul.f32 %v784, 0.5
        %v1003 = vmul.f32 %v789, 0.5
        %v1004 = vmul.f32 %v794, 0.5
        %v1005 = vmul.f32 %v799, 0.5
        %v1006 = vmul.f32 %v804, 0.5
        %v1007 = vmul.f32 %v809, 0.5
        %v1008 = vmul.f32 %v814, 0.5
        %v1009 = vmul.f32 %v819, 0.5
        %v1010 = vmul.f32 %v824, 0.5
        %v1011 = vmul.f32 %v829, 0.5
        %v1012 = vmul.f32 %v834, 0.5
        %v1013 = vmul.f32 %v839, 0.5
        %v1014 = vmul.f32 %v844, 0.5
        %v1015 = vmul.f32 %v849, 0.5
        %v1016 = vmul.f32 %v854, 0.5
        %v1017 = vmul.f32 %v859, 0.5
        %v1018 = vmul.f32 %v864, 0.5
        %v1019 = vmul.f32 %v869, 0.5
        %v1020 = vmul.f32 %v874, 0.5
        %v1021 = vmul.f32 %v879, 0.5
        %v1022 = vmul.f32 %v884, 0.5
        %v1023 = vmul.f32 %v889, 0.5
        %v1024 = vmul.f32 %v894, 0.5
        %v1025 = vmul.f32 %v899, 0.5
        %v1026 = vmul.f32 %v904, 0.5
        %v1027 = vmul.f32 %v909, 0.5
        %v1028 = vmul.f32 %v914, 0.5
        %v1029 = vmul.f32 %v919, 0.5
        %v1030 = vmul.f32 %v924, 0.5
        %v1031 = vmul.f32 %v929, 0.5
        %v1032 = vmul.f32 %v934, 0.5
        %v1033 = vmul.f32 %v939, 0.5
        %v1034 = vmul.f32 %v944, 0.5
        %v1035 = vmul.f32 %v949, 0.5
        %v1036 = vmul.f32 %v954, 0.5
        %v1037 = vmul.f32 %v959, 0.5
        %v1038 = vmul.f32 %v964, 0.5
        %v1039 = vmul.f32 %v969, 0.5
        %v1040 = vmul.f32 %v974, 0.5
        %v1041 = vmul.f32 %v659, 0.70710677
        %v1042 = vmul.f32 %v664, 0.70710677
        %v1043 = vmul.f32 %v669, 0.70710677
        %v1044 = vmul.f32 %v674, 0.70710677
        %v1045 = vmul.f32 %v679, 0.70710677
        %v1046 = vmul.f32 %v684, 0.70710677
        %v1047 = vmul.f32 %v689, 0.70710677
        %v1048 = vmul.f32 %v694, 0.70710677
        %v1049 = vmul.f32 %v699, 0.70710677
        %v1050 = vmul.f32 %v704, 0.70710677
        %v1051 = vmul.f32 %v709, 0.70710677
        %v1052 = vmul.f32 %v714, 0.70710677
        %v1053 = vmul.f32 %v719, 0.70710677
        %v1054 = vmul.f32 %v724, 0.70710677
        %v1055 = vmul.f32 %v729, 0.70710677
        %v1056 = vmul.f32 %v734, 0.70710677
        %v1057 = vmul.f32 %v739, 0.70710677
        %v1058 = vmul.f32 %v744, 0.70710677
        %v1059 = vmul.f32 %v749, 0.70710677
        %v1060 = vmul.f32 %v754, 0.70710677
        %v1061 = vmul.f32 %v759, 0.70710677
        %v1062 = vmul.f32 %v764, 0.70710677
        %v1063 = vmul.f32 %v769, 0.70710677
        %v1064 = vmul.f32 %v774, 0.70710677
        %v1065 = vmul.f32 %v779, 0.70710677
        %v1066 = vmul.f32 %v784, 0.70710677
        %v1067 = vmul.f32 %v789, 0.70710677
        %v1068 = vmul.f32 %v794, 0.70710677
        %v1069 = vmul.f32 %v799, 0.70710677
        %v1070 = vmul.f32 %v804, 0.70710677
        %v1071 = vmul.f32 %v809, 0.70710677
        %v1072 = vmul.f32 %v814, 0.70710677
        %v1073 = vmul.f32 %v819, 0.70710677
        %v1074 = vmul.f32 %v824, 0.70710677
        %v1075 = vmul.f32 %v829, 0.70710677
        %v1076 = vmul.f32 %v834, 0.70710677
        %v1077 = vmul.f32 %v839, 0.70710677
        %v1078 = vmul.f32 %v844, 0.70710677
        %v1079 = vmul.f32 %v849, 0.70710677
        %v1080 = vmul.f32 %v854, 0.70710677
        %v1081 = vmul.f32 %v859, 0.70710677
        %v1082 = vmul.f32 %v864, 0.70710677
        %v1083 = vmul.f32 %v869, 0.70710677
        %v1084 = vmul.f32 %v874, 0.70710677
        %v1085 = vmul.f32 %v879, 0.70710677
        %v1086 = vmul.f32 %v884, 0.70710677
        %v1087 = vmul.f32 %v889, 0.70710677
        %v1088 = vmul.f32 %v894, 0.70710677
        %v1089 = vmul.f32 %v899, 0.70710677
        %v1090 = vmul.f32 %v904, 0.70710677
        %v1091 = vmul.f32 %v909, 0.70710677
        %v1092 = vmul.f32 %v914, 0.70710677
        %v1093 = vmul.f32 %v919, 0.70710677
        %v1094 = vmul.f32 %v924, 0.70710677
        %v1095 = vmul.f32 %v929, 0.70710677
        %v1096 = vmul.f32 %v934, 0.70710677
        %v1097 = vmul.f32 %v939, 0.70710677
        %v1098 = vmul.f32 %v944, 0.70710677
        %v1099 = vmul.f32 %v949, 0.70710677
        %v1100 = vmul.f32 %v954, 0.70710677
        %v1101 = vmul.f32 %v959, 0.70710677
        %v1102 = vmul.f32 %v964, 0.70710677
        %v1103 = vmul.f32 %v969, 0.70710677
        %v1104 = vmul.f32 %v974, 0.70710677
        %v1105 = verf.f32.pop %v1041
        %v1106 = verf.f32.pop %v1042
        %v1107 = verf.f32.pop %v1043
        %v1108 = verf.f32.pop %v1044
        %v1109 = verf.f32.pop %v1045
        %v1110 = verf.f32.pop %v1046
        %v1111 = verf.f32.pop %v1047
        %v1112 = verf.f32.pop %v1048
        %v1113 = verf.f32.pop %v1049
        %v1114 = verf.f32.pop %v1050
        %v1115 = verf.f32.pop %v1051
        %v1116 = verf.f32.pop %v1052
        %v1117 = verf.f32.pop %v1053
        %v1118 = verf.f32.pop %v1054
        %v1119 = verf.f32.pop %v1055
        %v1120 = verf.f32.pop %v1056
        %v1121 = verf.f32.pop %v1057
        %v1122 = verf.f32.pop %v1058
        %v1123 = verf.f32.pop %v1059
        %v1124 = verf.f32.pop %v1060
        %v1125 = verf.f32.pop %v1061
        %v1126 = verf.f32.pop %v1062
        %v1127 = verf.f32.pop %v1063
        %v1128 = verf.f32.pop %v1064
        %v1129 = verf.f32.pop %v1065
        %v1130 = verf.f32.pop %v1066
        %v1131 = verf.f32.pop %v1067
        %v1132 = verf.f32.pop %v1068
        %v1133 = verf.f32.pop %v1069
        %v1134 = verf.f32.pop %v1070
        %v1135 = verf.f32.pop %v1071
        %v1136 = verf.f32.pop %v1072
        %v1137 = verf.f32.pop %v1073
        %v1138 = verf.f32.pop %v1074
        %v1139 = verf.f32.pop %v1075
        %v1140 = verf.f32.pop %v1076
        %v1141 = verf.f32.pop %v1077
        %v1142 = verf.f32.pop %v1078
        %v1143 = verf.f32.pop %v1079
        %v1144 = verf.f32.pop %v1080
        %v1145 = verf.f32.pop %v1081
        %v1146 = verf.f32.pop %v1082
        %v1147 = verf.f32.pop %v1083
        %v1148 = verf.f32.pop %v1084
        %v1149 = verf.f32.pop %v1085
        %v1150 = verf.f32.pop %v1086
        %v1151 = verf.f32.pop %v1087
        %v1152 = verf.f32.pop %v1088
        %v1153 = verf.f32.pop %v1089
        %v1154 = verf.f32.pop %v1090
        %v1155 = verf.f32.pop %v1091
        %v1156 = verf.f32.pop %v1092
        %v1157 = verf.f32.pop %v1093
        %v1158 = verf.f32.pop %v1094
        %v1159 = verf.f32.pop %v1095
        %v1160 = verf.f32.pop %v1096
        %v1161 = verf.f32.pop %v1097
        %v1162 = verf.f32.pop %v1098
        %v1163 = verf.f32.pop %v1099
        %v1164 = verf.f32.pop %v1100
        %v1165 = verf.f32.pop %v1101
        %v1166 = verf.f32.pop %v1102
        %v1167 = verf.f32.pop %v1103
        %v1168 = verf.f32.pop %v1104
        %v1169 = vadd.f32 %v1105, 1.0
        %v1170 = vadd.f32 %v1106, 1.0
        %v1171 = vadd.f32 %v1107, 1.0
        %v1172 = vadd.f32 %v1108, 1.0
        %v1173 = vadd.f32 %v1109, 1.0
        %v1174 = vadd.f32 %v1110, 1.0
        %v1175 = vadd.f32 %v1111, 1.0
        %v1176 = vadd.f32 %v1112, 1.0
        %v1177 = vadd.f32 %v1113, 1.0
        %v1178 = vadd.f32 %v1114, 1.0
        %v1179 = vadd.f32 %v1115, 1.0
        %v1180 = vadd.f32 %v1116, 1.0
        %v1181 = vadd.f32 %v1117, 1.0
        %v1182 = vadd.f32 %v1118, 1.0
        %v1183 = vadd.f32 %v1119, 1.0
        %v1184 = vadd.f32 %v1120, 1.0
        %v1185 = vadd.f32 %v1121, 1.0
        %v1186 = vadd.f32 %v1122, 1.0
        %v1187 = vadd.f32 %v1123, 1.0
        %v1188 = vadd.f32 %v1124, 1.0
        %v1189 = vadd.f32 %v1125, 1.0
        %v1190 = vadd.f32 %v1126, 1.0
        %v1191 = vadd.f32 %v1127, 1.0
        %v1192 = vadd.f32 %v1128, 1.0
        %v1193 = vadd.f32 %v1129, 1.0
        %v1194 = vadd.f32 %v1130, 1.0
        %v1195 = vadd.f32 %v1131, 1.0
        %v1196 = vadd.f32 %v1132, 1.0
        %v1197 = vadd.f32 %v1133, 1.0
        %v1198 = vadd.f32 %v1134, 1.0
        %v1199 = vadd.f32 %v1135, 1.0
        %v1200 = vadd.f32 %v1136, 1.0
        %v1201 = vadd.f32 %v1137, 1.0
        %v1202 = vadd.f32 %v1138, 1.0
        %v1203 = vadd.f32 %v1139, 1.0
        %v1204 = vadd.f32 %v1140, 1.0
        %v1205 = vadd.f32 %v1141, 1.0
        %v1206 = vadd.f32 %v1142, 1.0
        %v1207 = vadd.f32 %v1143, 1.0
        %v1208 = vadd.f32 %v1144, 1.0
        %v1209 = vadd.f32 %v1145, 1.0
        %v1210 = vadd.f32 %v1146, 1.0
        %v1211 = vadd.f32 %v1147, 1.0
        %v1212 = vadd.f32 %v1148, 1.0
        %v1213 = vadd.f32 %v1149, 1.0
        %v1214 = vadd.f32 %v1150, 1.0
        %v1215 = vadd.f32 %v1151, 1.0
        %v1216 = vadd.f32 %v1152, 1.0
        %v1217 = vadd.f32 %v1153, 1.0
        %v1218 = vadd.f32 %v1154, 1.0
        %v1219 = vadd.f32 %v1155, 1.0
        %v1220 = vadd.f32 %v1156, 1.0
        %v1221 = vadd.f32 %v1157, 1.0
        %v1222 = vadd.f32 %v1158, 1.0
        %v1223 = vadd.f32 %v1159, 1.0
        %v1224 = vadd.f32 %v1160, 1.0
        %v1225 = vadd.f32 %v1161, 1.0
        %v1226 = vadd.f32 %v1162, 1.0
        %v1227 = vadd.f32 %v1163, 1.0
        %v1228 = vadd.f32 %v1164, 1.0
        %v1229 = vadd.f32 %v1165, 1.0
        %v1230 = vadd.f32 %v1166, 1.0
        %v1231 = vadd.f32 %v1167, 1.0
        %v1232 = vadd.f32 %v1168, 1.0
        %v1233 = vmul.f32 %v977, %v1169
        %v1234 = vmul.f32 %v978, %v1170
        %v1235 = vmul.f32 %v979, %v1171
        %v1236 = vmul.f32 %v980, %v1172
        %v1237 = vmul.f32 %v981, %v1173
        %v1238 = vmul.f32 %v982, %v1174
        %v1239 = vmul.f32 %v983, %v1175
        %v1240 = vmul.f32 %v984, %v1176
        %v1241 = vmul.f32 %v985, %v1177
        %v1242 = vmul.f32 %v986, %v1178
        %v1243 = vmul.f32 %v987, %v1179
        %v1244 = vmul.f32 %v988, %v1180
        %v1245 = vmul.f32 %v989, %v1181
        %v1246 = vmul.f32 %v990, %v1182
        %v1247 = vmul.f32 %v991, %v1183
        %v1248 = vmul.f32 %v992, %v1184
        %v1249 = vmul.f32 %v993, %v1185
        %v1250 = vmul.f32 %v994, %v1186
        %v1251 = vmul.f32 %v995, %v1187
        %v1252 = vmul.f32 %v996, %v1188
        %v1253 = vmul.f32 %v997, %v1189
        %v1254 = vmul.f32 %v998, %v1190
        %v1255 = vmul.f32 %v999, %v1191
        %v1256 = vmul.f32 %v1000, %v1192
        %v1257 = vmul.f32 %v1001, %v1193
        %v1258 = vmul.f32 %v1002, %v1194
        %v1259 = vmul.f32 %v1003, %v1195
        %v1260 = vmul.f32 %v1004, %v1196
        %v1261 = vmul.f32 %v1005, %v1197
        %v1262 = vmul.f32 %v1006, %v1198
        %v1263 = vmul.f32 %v1007, %v1199
        %v1264 = vmul.f32 %v1008, %v1200
        %v1265 = vmul.f32 %v1009, %v1201
        %v1266 = vmul.f32 %v1010, %v1202
        %v1267 = vmul.f32 %v1011, %v1203
        %v1268 = vmul.f32 %v1012, %v1204
        %v1269 = vmul.f32 %v1013, %v1205
        %v1270 = vmul.f32 %v1014, %v1206
        %v1271 = vmul.f32 %v1015, %v1207
        %v1272 = vmul.f32 %v1016, %v1208
        %v1273 = vmul.f32 %v1017, %v1209
        %v1274 = vmul.f32 %v1018, %v1210
        %v1275 = vmul.f32 %v1019, %v1211
        %v1276 = vmul.f32 %v1020, %v1212
        %v1277 = vmul.f32 %v1021, %v1213
        %v1278 = vmul.f32 %v1022, %v1214
        %v1279 = vmul.f32 %v1023, %v1215
        %v1280 = vmul.f32 %v1024, %v1216
        %v1281 = vmul.f32 %v1025, %v1217
        %v1282 = vmul.f32 %v1026, %v1218
        %v1283 = vmul.f32 %v1027, %v1219
        %v1284 = vmul.f32 %v1028, %v1220
        %v1285 = vmul.f32 %v1029, %v1221
        %v1286 = vmul.f32 %v1030, %v1222
        %v1287 = vmul.f32 %v1031, %v1223
        %v1288 = vmul.f32 %v1032, %v1224
        %v1289 = vmul.f32 %v1033, %v1225
        %v1290 = vmul.f32 %v1034, %v1226
        %v1291 = vmul.f32 %v1035, %v1227
        %v1292 = vmul.f32 %v1036, %v1228
        %v1293 = vmul.f32 %v1037, %v1229
        %v1294 = vmul.f32 %v1038, %v1230
        %v1295 = vmul.f32 %v1039, %v1231
        %v1296 = vmul.f32 %v1040, %v1232
        %v1297 = vld [vmem:[%s3] sm:$0x1]
        %v1299 = vlaneseq
        %v1300 = vshrl.u32 %v1299, 7
        %v1301 = vsub.s32 0, %v1300
        %v1302 = vrot.slane %v1297, %v1301
        %v1304 = vmul.f32 %v1233, %v1302
        %v1305 = vmul.f32 %v1234, %v1302
        %v1306 = vmul.f32 %v1235, %v1302
        %v1307 = vmul.f32 %v1236, %v1302
        %v1308 = vmul.f32 %v1237, %v1302
        %v1309 = vmul.f32 %v1238, %v1302
        %v1310 = vmul.f32 %v1239, %v1302
        %v1311 = vmul.f32 %v1240, %v1302
        %v1312 = vmul.f32 %v1241, %v1302
        %v1313 = vmul.f32 %v1242, %v1302
        %v1314 = vmul.f32 %v1243, %v1302
        %v1315 = vmul.f32 %v1244, %v1302
        %v1316 = vmul.f32 %v1245, %v1302
        %v1317 = vmul.f32 %v1246, %v1302
        %v1318 = vmul.f32 %v1247, %v1302
        %v1319 = vmul.f32 %v1248, %v1302
        %v1320 = vmul.f32 %v1249, %v1302
        %v1321 = vmul.f32 %v1250, %v1302
        %v1322 = vmul.f32 %v1251, %v1302
        %v1323 = vmul.f32 %v1252, %v1302
        %v1324 = vmul.f32 %v1253, %v1302
        %v1325 = vmul.f32 %v1254, %v1302
        %v1326 = vmul.f32 %v1255, %v1302
        %v1327 = vmul.f32 %v1256, %v1302
        %v1328 = vmul.f32 %v1257, %v1302
        %v1329 = vmul.f32 %v1258, %v1302
        %v1330 = vmul.f32 %v1259, %v1302
        %v1331 = vmul.f32 %v1260, %v1302
        %v1332 = vmul.f32 %v1261, %v1302
        %v1333 = vmul.f32 %v1262, %v1302
        %v1334 = vmul.f32 %v1263, %v1302
        %v1335 = vmul.f32 %v1264, %v1302
        %v1336 = vmul.f32 %v1265, %v1302
        %v1337 = vmul.f32 %v1266, %v1302
        %v1338 = vmul.f32 %v1267, %v1302
        %v1339 = vmul.f32 %v1268, %v1302
        %v1340 = vmul.f32 %v1269, %v1302
        %v1341 = vmul.f32 %v1270, %v1302
        %v1342 = vmul.f32 %v1271, %v1302
        %v1343 = vmul.f32 %v1272, %v1302
        %v1344 = vmul.f32 %v1273, %v1302
        %v1345 = vmul.f32 %v1274, %v1302
        %v1346 = vmul.f32 %v1275, %v1302
        %v1347 = vmul.f32 %v1276, %v1302
        %v1348 = vmul.f32 %v1277, %v1302
        %v1349 = vmul.f32 %v1278, %v1302
        %v1350 = vmul.f32 %v1279, %v1302
        %v1351 = vmul.f32 %v1280, %v1302
        %v1352 = vmul.f32 %v1281, %v1302
        %v1353 = vmul.f32 %v1282, %v1302
        %v1354 = vmul.f32 %v1283, %v1302
        %v1355 = vmul.f32 %v1284, %v1302
        %v1356 = vmul.f32 %v1285, %v1302
        %v1357 = vmul.f32 %v1286, %v1302
        %v1358 = vmul.f32 %v1287, %v1302
        %v1359 = vmul.f32 %v1288, %v1302
        %v1360 = vmul.f32 %v1289, %v1302
        %v1361 = vmul.f32 %v1290, %v1302
        %v1362 = vmul.f32 %v1291, %v1302
        %v1363 = vmul.f32 %v1292, %v1302
        %v1364 = vmul.f32 %v1293, %v1302
        %v1365 = vmul.f32 %v1294, %v1302
        %v1366 = vmul.f32 %v1295, %v1302
        %v1367 = vmul.f32 %v1296, %v1302
        %vm1368 = vcmask 130048
        %v1369 = vsel %vm1368, %v1304, 0.0
        %1370 = vadd.xlane.f32.xlu0 %v1369
        %v1371 = vpop.xlane.xlu0 %1370
        %v1372 = vsel %vm1368, %v1305, 0.0
        %1373 = vadd.xlane.f32.xlu0 %v1372
        %v1374 = vpop.xlane.xlu0 %1373
        %v1375 = vsel %vm1368, %v1306, 0.0
        %1376 = vadd.xlane.f32.xlu0 %v1375
        %v1377 = vpop.xlane.xlu0 %1376
        %v1378 = vsel %vm1368, %v1307, 0.0
        %1379 = vadd.xlane.f32.xlu0 %v1378
        %v1380 = vpop.xlane.xlu0 %1379
        %v1381 = vsel %vm1368, %v1308, 0.0
        %1382 = vadd.xlane.f32.xlu0 %v1381
        %v1383 = vpop.xlane.xlu0 %1382
        %v1384 = vsel %vm1368, %v1309, 0.0
        %1385 = vadd.xlane.f32.xlu0 %v1384
        %v1386 = vpop.xlane.xlu0 %1385
        %v1387 = vsel %vm1368, %v1310, 0.0
        %1388 = vadd.xlane.f32.xlu0 %v1387
        %v1389 = vpop.xlane.xlu0 %1388
        %v1390 = vsel %vm1368, %v1311, 0.0
        %1391 = vadd.xlane.f32.xlu0 %v1390
        %v1392 = vpop.xlane.xlu0 %1391
        %v1393 = vsel %vm1368, %v1312, 0.0
        %1394 = vadd.xlane.f32.xlu0 %v1393
        %v1395 = vpop.xlane.xlu0 %1394
        %v1396 = vsel %vm1368, %v1313, 0.0
        %1397 = vadd.xlane.f32.xlu0 %v1396
        %v1398 = vpop.xlane.xlu0 %1397
        %v1399 = vsel %vm1368, %v1314, 0.0
        %1400 = vadd.xlane.f32.xlu0 %v1399
        %v1401 = vpop.xlane.xlu0 %1400
        %v1402 = vsel %vm1368, %v1315, 0.0
        %1403 = vadd.xlane.f32.xlu0 %v1402
        %v1404 = vpop.xlane.xlu0 %1403
        %v1405 = vsel %vm1368, %v1316, 0.0
        %1406 = vadd.xlane.f32.xlu0 %v1405
        %v1407 = vpop.xlane.xlu0 %1406
        %v1408 = vsel %vm1368, %v1317, 0.0
        %1409 = vadd.xlane.f32.xlu0 %v1408
        %v1410 = vpop.xlane.xlu0 %1409
        %v1411 = vsel %vm1368, %v1318, 0.0
        %1412 = vadd.xlane.f32.xlu0 %v1411
        %v1413 = vpop.xlane.xlu0 %1412
        %v1414 = vsel %vm1368, %v1319, 0.0
        %1415 = vadd.xlane.f32.xlu0 %v1414
        %v1416 = vpop.xlane.xlu0 %1415
        %v1417 = vsel %vm1368, %v1320, 0.0
        %1418 = vadd.xlane.f32.xlu0 %v1417
        %v1419 = vpop.xlane.xlu0 %1418
        %v1420 = vsel %vm1368, %v1321, 0.0
        %1421 = vadd.xlane.f32.xlu0 %v1420
        %v1422 = vpop.xlane.xlu0 %1421
        %v1423 = vsel %vm1368, %v1322, 0.0
        %1424 = vadd.xlane.f32.xlu0 %v1423
        %v1425 = vpop.xlane.xlu0 %1424
        %v1426 = vsel %vm1368, %v1323, 0.0
        %1427 = vadd.xlane.f32.xlu0 %v1426
        %v1428 = vpop.xlane.xlu0 %1427
        %v1429 = vsel %vm1368, %v1324, 0.0
        %1430 = vadd.xlane.f32.xlu0 %v1429
        %v1431 = vpop.xlane.xlu0 %1430
        %v1432 = vsel %vm1368, %v1325, 0.0
        %1433 = vadd.xlane.f32.xlu0 %v1432
        %v1434 = vpop.xlane.xlu0 %1433
        %v1435 = vsel %vm1368, %v1326, 0.0
        %1436 = vadd.xlane.f32.xlu0 %v1435
        %v1437 = vpop.xlane.xlu0 %1436
        %v1438 = vsel %vm1368, %v1327, 0.0
        %1439 = vadd.xlane.f32.xlu0 %v1438
        %v1440 = vpop.xlane.xlu0 %1439
        %v1441 = vsel %vm1368, %v1328, 0.0
        %1442 = vadd.xlane.f32.xlu0 %v1441
        %v1443 = vpop.xlane.xlu0 %1442
        %v1444 = vsel %vm1368, %v1329, 0.0
        %1445 = vadd.xlane.f32.xlu0 %v1444
        %v1446 = vpop.xlane.xlu0 %1445
        %v1447 = vsel %vm1368, %v1330, 0.0
        %1448 = vadd.xlane.f32.xlu0 %v1447
        %v1449 = vpop.xlane.xlu0 %1448
        %v1450 = vsel %vm1368, %v1331, 0.0
        %1451 = vadd.xlane.f32.xlu0 %v1450
        %v1452 = vpop.xlane.xlu0 %1451
        %v1453 = vsel %vm1368, %v1332, 0.0
        %1454 = vadd.xlane.f32.xlu0 %v1453
        %v1455 = vpop.xlane.xlu0 %1454
        %v1456 = vsel %vm1368, %v1333, 0.0
        %1457 = vadd.xlane.f32.xlu0 %v1456
        %v1458 = vpop.xlane.xlu0 %1457
        %v1459 = vsel %vm1368, %v1334, 0.0
        %1460 = vadd.xlane.f32.xlu0 %v1459
        %v1461 = vpop.xlane.xlu0 %1460
        %v1462 = vsel %vm1368, %v1335, 0.0
        %1463 = vadd.xlane.f32.xlu0 %v1462
        %v1464 = vpop.xlane.xlu0 %1463
        %v1465 = vsel %vm1368, %v1336, 0.0
        %1466 = vadd.xlane.f32.xlu0 %v1465
        %v1467 = vpop.xlane.xlu0 %1466
        %v1468 = vsel %vm1368, %v1337, 0.0
        %1469 = vadd.xlane.f32.xlu0 %v1468
        %v1470 = vpop.xlane.xlu0 %1469
        %v1471 = vsel %vm1368, %v1338, 0.0
        %1472 = vadd.xlane.f32.xlu0 %v1471
        %v1473 = vpop.xlane.xlu0 %1472
        %v1474 = vsel %vm1368, %v1339, 0.0
        %1475 = vadd.xlane.f32.xlu0 %v1474
        %v1476 = vpop.xlane.xlu0 %1475
        %v1477 = vsel %vm1368, %v1340, 0.0
        %1478 = vadd.xlane.f32.xlu0 %v1477
        %v1479 = vpop.xlane.xlu0 %1478
        %v1480 = vsel %vm1368, %v1341, 0.0
        %1481 = vadd.xlane.f32.xlu0 %v1480
        %v1482 = vpop.xlane.xlu0 %1481
        %v1483 = vsel %vm1368, %v1342, 0.0
        %1484 = vadd.xlane.f32.xlu0 %v1483
        %v1485 = vpop.xlane.xlu0 %1484
        %v1486 = vsel %vm1368, %v1343, 0.0
        %1487 = vadd.xlane.f32.xlu0 %v1486
        %v1488 = vpop.xlane.xlu0 %1487
        %v1489 = vsel %vm1368, %v1344, 0.0
        %1490 = vadd.xlane.f32.xlu0 %v1489
        %v1491 = vpop.xlane.xlu0 %1490
        %v1492 = vsel %vm1368, %v1345, 0.0
        %1493 = vadd.xlane.f32.xlu0 %v1492
        %v1494 = vpop.xlane.xlu0 %1493
        %v1495 = vsel %vm1368, %v1346, 0.0
        %1496 = vadd.xlane.f32.xlu0 %v1495
        %v1497 = vpop.xlane.xlu0 %1496
        %v1498 = vsel %vm1368, %v1347, 0.0
        %1499 = vadd.xlane.f32.xlu0 %v1498
        %v1500 = vpop.xlane.xlu0 %1499
        %v1501 = vsel %vm1368, %v1348, 0.0
        %1502 = vadd.xlane.f32.xlu0 %v1501
        %v1503 = vpop.xlane.xlu0 %1502
        %v1504 = vsel %vm1368, %v1349, 0.0
        %1505 = vadd.xlane.f32.xlu0 %v1504
        %v1506 = vpop.xlane.xlu0 %1505
        %v1507 = vsel %vm1368, %v1350, 0.0
        %1508 = vadd.xlane.f32.xlu0 %v1507
        %v1509 = vpop.xlane.xlu0 %1508
        %v1510 = vsel %vm1368, %v1351, 0.0
        %1511 = vadd.xlane.f32.xlu0 %v1510
        %v1512 = vpop.xlane.xlu0 %1511
        %v1513 = vsel %vm1368, %v1352, 0.0
        %1514 = vadd.xlane.f32.xlu0 %v1513
        %v1515 = vpop.xlane.xlu0 %1514
        %v1516 = vsel %vm1368, %v1353, 0.0
        %1517 = vadd.xlane.f32.xlu0 %v1516
        %v1518 = vpop.xlane.xlu0 %1517
        %v1519 = vsel %vm1368, %v1354, 0.0
        %1520 = vadd.xlane.f32.xlu0 %v1519
        %v1521 = vpop.xlane.xlu0 %1520
        %v1522 = vsel %vm1368, %v1355, 0.0
        %1523 = vadd.xlane.f32.xlu0 %v1522
        %v1524 = vpop.xlane.xlu0 %1523
        %v1525 = vsel %vm1368, %v1356, 0.0
        %1526 = vadd.xlane.f32.xlu0 %v1525
        %v1527 = vpop.xlane.xlu0 %1526
        %v1528 = vsel %vm1368, %v1357, 0.0
        %1529 = vadd.xlane.f32.xlu0 %v1528
        %v1530 = vpop.xlane.xlu0 %1529
        %v1531 = vsel %vm1368, %v1358, 0.0
        %1532 = vadd.xlane.f32.xlu0 %v1531
        %v1533 = vpop.xlane.xlu0 %1532
        %v1534 = vsel %vm1368, %v1359, 0.0
        %1535 = vadd.xlane.f32.xlu0 %v1534
        %v1536 = vpop.xlane.xlu0 %1535
        %v1537 = vsel %vm1368, %v1360, 0.0
        %1538 = vadd.xlane.f32.xlu0 %v1537
        %v1539 = vpop.xlane.xlu0 %1538
        %v1540 = vsel %vm1368, %v1361, 0.0
        %1541 = vadd.xlane.f32.xlu0 %v1540
        %v1542 = vpop.xlane.xlu0 %1541
        %v1543 = vsel %vm1368, %v1362, 0.0
        %1544 = vadd.xlane.f32.xlu0 %v1543
        %v1545 = vpop.xlane.xlu0 %1544
        %v1546 = vsel %vm1368, %v1363, 0.0
        %1547 = vadd.xlane.f32.xlu0 %v1546
        %v1548 = vpop.xlane.xlu0 %1547
        %v1549 = vsel %vm1368, %v1364, 0.0
        %1550 = vadd.xlane.f32.xlu0 %v1549
        %v1551 = vpop.xlane.xlu0 %1550
        %v1552 = vsel %vm1368, %v1365, 0.0
        %1553 = vadd.xlane.f32.xlu0 %v1552
        %v1554 = vpop.xlane.xlu0 %1553
        %v1555 = vsel %vm1368, %v1366, 0.0
        %1556 = vadd.xlane.f32.xlu0 %v1555
        %v1557 = vpop.xlane.xlu0 %1556
        %v1558 = vsel %vm1368, %v1367, 0.0
        %1559 = vadd.xlane.f32.xlu0 %v1558
        %v1560 = vpop.xlane.xlu0 %1559
        %1625 = vrot.lane.b32.xlu0 %v1304, 112
        %v1626 = vpop.permute.xlu0 %1625
        %1627 = vrot.lane.b32.xlu0 %v1305, 112
        %v1628 = vpop.permute.xlu0 %1627
        %1629 = vrot.lane.b32.xlu0 %v1306, 112
        %v1630 = vpop.permute.xlu0 %1629
        %1631 = vrot.lane.b32.xlu0 %v1307, 112
        %v1632 = vpop.permute.xlu0 %1631
        %1633 = vrot.lane.b32.xlu0 %v1308, 112
        %v1634 = vpop.permute.xlu0 %1633
        %1635 = vrot.lane.b32.xlu0 %v1309, 112
        %v1636 = vpop.permute.xlu0 %1635
        %1637 = vrot.lane.b32.xlu0 %v1310, 112
        %v1638 = vpop.permute.xlu0 %1637
        %1639 = vrot.lane.b32.xlu0 %v1311, 112
        %v1640 = vpop.permute.xlu0 %1639
        %1641 = vrot.lane.b32.xlu0 %v1312, 112
        %v1642 = vpop.permute.xlu0 %1641
        %1643 = vrot.lane.b32.xlu0 %v1313, 112
        %v1644 = vpop.permute.xlu0 %1643
        %1645 = vrot.lane.b32.xlu0 %v1314, 112
        %v1646 = vpop.permute.xlu0 %1645
        %1647 = vrot.lane.b32.xlu0 %v1315, 112
        %v1648 = vpop.permute.xlu0 %1647
        %1649 = vrot.lane.b32.xlu0 %v1316, 112
        %v1650 = vpop.permute.xlu0 %1649
        %1651 = vrot.lane.b32.xlu0 %v1317, 112
        %v1652 = vpop.permute.xlu0 %1651
        %1653 = vrot.lane.b32.xlu0 %v1318, 112
        %v1654 = vpop.permute.xlu0 %1653
        %1655 = vrot.lane.b32.xlu0 %v1319, 112
        %v1656 = vpop.permute.xlu0 %1655
        %1657 = vrot.lane.b32.xlu0 %v1320, 112
        %v1658 = vpop.permute.xlu0 %1657
        %1659 = vrot.lane.b32.xlu0 %v1321, 112
        %v1660 = vpop.permute.xlu0 %1659
        %1661 = vrot.lane.b32.xlu0 %v1322, 112
        %v1662 = vpop.permute.xlu0 %1661
        %1663 = vrot.lane.b32.xlu0 %v1323, 112
        %v1664 = vpop.permute.xlu0 %1663
        %1665 = vrot.lane.b32.xlu0 %v1324, 112
        %v1666 = vpop.permute.xlu0 %1665
        %1667 = vrot.lane.b32.xlu0 %v1325, 112
        %v1668 = vpop.permute.xlu0 %1667
        %1669 = vrot.lane.b32.xlu0 %v1326, 112
        %v1670 = vpop.permute.xlu0 %1669
        %1671 = vrot.lane.b32.xlu0 %v1327, 112
        %v1672 = vpop.permute.xlu0 %1671
        %1673 = vrot.lane.b32.xlu0 %v1328, 112
        %v1674 = vpop.permute.xlu0 %1673
        %1675 = vrot.lane.b32.xlu0 %v1329, 112
        %v1676 = vpop.permute.xlu0 %1675
        %1677 = vrot.lane.b32.xlu0 %v1330, 112
        %v1678 = vpop.permute.xlu0 %1677
        %1679 = vrot.lane.b32.xlu0 %v1331, 112
        %v1680 = vpop.permute.xlu0 %1679
        %1681 = vrot.lane.b32.xlu0 %v1332, 112
        %v1682 = vpop.permute.xlu0 %1681
        %1683 = vrot.lane.b32.xlu0 %v1333, 112
        %v1684 = vpop.permute.xlu0 %1683
        %1685 = vrot.lane.b32.xlu0 %v1334, 112
        %v1686 = vpop.permute.xlu0 %1685
        %1687 = vrot.lane.b32.xlu0 %v1335, 112
        %v1688 = vpop.permute.xlu0 %1687
        %1689 = vrot.lane.b32.xlu0 %v1336, 112
        %v1690 = vpop.permute.xlu0 %1689
        %1691 = vrot.lane.b32.xlu0 %v1337, 112
        %v1692 = vpop.permute.xlu0 %1691
        %1693 = vrot.lane.b32.xlu0 %v1338, 112
        %v1694 = vpop.permute.xlu0 %1693
        %1695 = vrot.lane.b32.xlu0 %v1339, 112
        %v1696 = vpop.permute.xlu0 %1695
        %1697 = vrot.lane.b32.xlu0 %v1340, 112
        %v1698 = vpop.permute.xlu0 %1697
        %1699 = vrot.lane.b32.xlu0 %v1341, 112
        %v1700 = vpop.permute.xlu0 %1699
        %1701 = vrot.lane.b32.xlu0 %v1342, 112
        %v1702 = vpop.permute.xlu0 %1701
        %1703 = vrot.lane.b32.xlu0 %v1343, 112
        %v1704 = vpop.permute.xlu0 %1703
        %1705 = vrot.lane.b32.xlu0 %v1344, 112
        %v1706 = vpop.permute.xlu0 %1705
        %1707 = vrot.lane.b32.xlu0 %v1345, 112
        %v1708 = vpop.permute.xlu0 %1707
        %1709 = vrot.lane.b32.xlu0 %v1346, 112
        %v1710 = vpop.permute.xlu0 %1709
        %1711 = vrot.lane.b32.xlu0 %v1347, 112
        %v1712 = vpop.permute.xlu0 %1711
        %1713 = vrot.lane.b32.xlu0 %v1348, 112
        %v1714 = vpop.permute.xlu0 %1713
        %1715 = vrot.lane.b32.xlu0 %v1349, 112
        %v1716 = vpop.permute.xlu0 %1715
        %1717 = vrot.lane.b32.xlu0 %v1350, 112
        %v1718 = vpop.permute.xlu0 %1717
        %1719 = vrot.lane.b32.xlu0 %v1351, 112
        %v1720 = vpop.permute.xlu0 %1719
        %1721 = vrot.lane.b32.xlu0 %v1352, 112
        %v1722 = vpop.permute.xlu0 %1721
        %1723 = vrot.lane.b32.xlu0 %v1353, 112
        %v1724 = vpop.permute.xlu0 %1723
        %1725 = vrot.lane.b32.xlu0 %v1354, 112
        %v1726 = vpop.permute.xlu0 %1725
        %1727 = vrot.lane.b32.xlu0 %v1355, 112
        %v1728 = vpop.permute.xlu0 %1727
        %1729 = vrot.lane.b32.xlu0 %v1356, 112
        %v1730 = vpop.permute.xlu0 %1729
        %1731 = vrot.lane.b32.xlu0 %v1357, 112
        %v1732 = vpop.permute.xlu0 %1731
        %1733 = vrot.lane.b32.xlu0 %v1358, 112
        %v1734 = vpop.permute.xlu0 %1733
        %1735 = vrot.lane.b32.xlu0 %v1359, 112
        %v1736 = vpop.permute.xlu0 %1735
        %1737 = vrot.lane.b32.xlu0 %v1360, 112
        %v1738 = vpop.permute.xlu0 %1737
        %1739 = vrot.lane.b32.xlu0 %v1361, 112
        %v1740 = vpop.permute.xlu0 %1739
        %1741 = vrot.lane.b32.xlu0 %v1362, 112
        %v1742 = vpop.permute.xlu0 %1741
        %1743 = vrot.lane.b32.xlu0 %v1363, 112
        %v1744 = vpop.permute.xlu0 %1743
        %1745 = vrot.lane.b32.xlu0 %v1364, 112
        %v1746 = vpop.permute.xlu0 %1745
        %1747 = vrot.lane.b32.xlu0 %v1365, 112
        %v1748 = vpop.permute.xlu0 %1747
        %1749 = vrot.lane.b32.xlu0 %v1366, 112
        %v1750 = vpop.permute.xlu0 %1749
        %1751 = vrot.lane.b32.xlu0 %v1367, 112
        %v1752 = vpop.permute.xlu0 %1751
        %v1817 = vsel %vm1368, %v1626, 0.0
        %1818 = vadd.xlane.f32.xlu0 %v1817
        %v1819 = vpop.xlane.xlu0 %1818
        %v1820 = vsel %vm1368, %v1628, 0.0
        %1821 = vadd.xlane.f32.xlu0 %v1820
        %v1822 = vpop.xlane.xlu0 %1821
        %v1823 = vsel %vm1368, %v1630, 0.0
        %1824 = vadd.xlane.f32.xlu0 %v1823
        %v1825 = vpop.xlane.xlu0 %1824
        %v1826 = vsel %vm1368, %v1632, 0.0
        %1827 = vadd.xlane.f32.xlu0 %v1826
        %v1828 = vpop.xlane.xlu0 %1827
        %v1829 = vsel %vm1368, %v1634, 0.0
        %1830 = vadd.xlane.f32.xlu0 %v1829
        %v1831 = vpop.xlane.xlu0 %1830
        %v1832 = vsel %vm1368, %v1636, 0.0
        %1833 = vadd.xlane.f32.xlu0 %v1832
        %v1834 = vpop.xlane.xlu0 %1833
        %v1835 = vsel %vm1368, %v1638, 0.0
        %1836 = vadd.xlane.f32.xlu0 %v1835
        %v1837 = vpop.xlane.xlu0 %1836
        %v1838 = vsel %vm1368, %v1640, 0.0
        %1839 = vadd.xlane.f32.xlu0 %v1838
        %v1840 = vpop.xlane.xlu0 %1839
        %v1841 = vsel %vm1368, %v1642, 0.0
        %1842 = vadd.xlane.f32.xlu0 %v1841
        %v1843 = vpop.xlane.xlu0 %1842
        %v1844 = vsel %vm1368, %v1644, 0.0
        %1845 = vadd.xlane.f32.xlu0 %v1844
        %v1846 = vpop.xlane.xlu0 %1845
        %v1847 = vsel %vm1368, %v1646, 0.0
        %1848 = vadd.xlane.f32.xlu0 %v1847
        %v1849 = vpop.xlane.xlu0 %1848
        %v1850 = vsel %vm1368, %v1648, 0.0
        %1851 = vadd.xlane.f32.xlu0 %v1850
        %v1852 = vpop.xlane.xlu0 %1851
        %v1853 = vsel %vm1368, %v1650, 0.0
        %1854 = vadd.xlane.f32.xlu0 %v1853
        %v1855 = vpop.xlane.xlu0 %1854
        %v1856 = vsel %vm1368, %v1652, 0.0
        %1857 = vadd.xlane.f32.xlu0 %v1856
        %v1858 = vpop.xlane.xlu0 %1857
        %v1859 = vsel %vm1368, %v1654, 0.0
        %1860 = vadd.xlane.f32.xlu0 %v1859
        %v1861 = vpop.xlane.xlu0 %1860
        %v1862 = vsel %vm1368, %v1656, 0.0
        %1863 = vadd.xlane.f32.xlu0 %v1862
        %v1864 = vpop.xlane.xlu0 %1863
        %v1865 = vsel %vm1368, %v1658, 0.0
        %1866 = vadd.xlane.f32.xlu0 %v1865
        %v1867 = vpop.xlane.xlu0 %1866
        %v1868 = vsel %vm1368, %v1660, 0.0
        %1869 = vadd.xlane.f32.xlu0 %v1868
        %v1870 = vpop.xlane.xlu0 %1869
        %v1871 = vsel %vm1368, %v1662, 0.0
        %1872 = vadd.xlane.f32.xlu0 %v1871
        %v1873 = vpop.xlane.xlu0 %1872
        %v1874 = vsel %vm1368, %v1664, 0.0
        %1875 = vadd.xlane.f32.xlu0 %v1874
        %v1876 = vpop.xlane.xlu0 %1875
        %v1877 = vsel %vm1368, %v1666, 0.0
        %1878 = vadd.xlane.f32.xlu0 %v1877
        %v1879 = vpop.xlane.xlu0 %1878
        %v1880 = vsel %vm1368, %v1668, 0.0
        %1881 = vadd.xlane.f32.xlu0 %v1880
        %v1882 = vpop.xlane.xlu0 %1881
        %v1883 = vsel %vm1368, %v1670, 0.0
        %1884 = vadd.xlane.f32.xlu0 %v1883
        %v1885 = vpop.xlane.xlu0 %1884
        %v1886 = vsel %vm1368, %v1672, 0.0
        %1887 = vadd.xlane.f32.xlu0 %v1886
        %v1888 = vpop.xlane.xlu0 %1887
        %v1889 = vsel %vm1368, %v1674, 0.0
        %1890 = vadd.xlane.f32.xlu0 %v1889
        %v1891 = vpop.xlane.xlu0 %1890
        %v1892 = vsel %vm1368, %v1676, 0.0
        %1893 = vadd.xlane.f32.xlu0 %v1892
        %v1894 = vpop.xlane.xlu0 %1893
        %v1895 = vsel %vm1368, %v1678, 0.0
        %1896 = vadd.xlane.f32.xlu0 %v1895
        %v1897 = vpop.xlane.xlu0 %1896
        %v1898 = vsel %vm1368, %v1680, 0.0
        %1899 = vadd.xlane.f32.xlu0 %v1898
        %v1900 = vpop.xlane.xlu0 %1899
        %v1901 = vsel %vm1368, %v1682, 0.0
        %1902 = vadd.xlane.f32.xlu0 %v1901
        %v1903 = vpop.xlane.xlu0 %1902
        %v1904 = vsel %vm1368, %v1684, 0.0
        %1905 = vadd.xlane.f32.xlu0 %v1904
        %v1906 = vpop.xlane.xlu0 %1905
        %v1907 = vsel %vm1368, %v1686, 0.0
        %1908 = vadd.xlane.f32.xlu0 %v1907
        %v1909 = vpop.xlane.xlu0 %1908
        %v1910 = vsel %vm1368, %v1688, 0.0
        %1911 = vadd.xlane.f32.xlu0 %v1910
        %v1912 = vpop.xlane.xlu0 %1911
        %v1913 = vsel %vm1368, %v1690, 0.0
        %1914 = vadd.xlane.f32.xlu0 %v1913
        %v1915 = vpop.xlane.xlu0 %1914
        %v1916 = vsel %vm1368, %v1692, 0.0
        %1917 = vadd.xlane.f32.xlu0 %v1916
        %v1918 = vpop.xlane.xlu0 %1917
        %v1919 = vsel %vm1368, %v1694, 0.0
        %1920 = vadd.xlane.f32.xlu0 %v1919
        %v1921 = vpop.xlane.xlu0 %1920
        %v1922 = vsel %vm1368, %v1696, 0.0
        %1923 = vadd.xlane.f32.xlu0 %v1922
        %v1924 = vpop.xlane.xlu0 %1923
        %v1925 = vsel %vm1368, %v1698, 0.0
        %1926 = vadd.xlane.f32.xlu0 %v1925
        %v1927 = vpop.xlane.xlu0 %1926
        %v1928 = vsel %vm1368, %v1700, 0.0
        %1929 = vadd.xlane.f32.xlu0 %v1928
        %v1930 = vpop.xlane.xlu0 %1929
        %v1931 = vsel %vm1368, %v1702, 0.0
        %1932 = vadd.xlane.f32.xlu0 %v1931
        %v1933 = vpop.xlane.xlu0 %1932
        %v1934 = vsel %vm1368, %v1704, 0.0
        %1935 = vadd.xlane.f32.xlu0 %v1934
        %v1936 = vpop.xlane.xlu0 %1935
        %v1937 = vsel %vm1368, %v1706, 0.0
        %1938 = vadd.xlane.f32.xlu0 %v1937
        %v1939 = vpop.xlane.xlu0 %1938
        %v1940 = vsel %vm1368, %v1708, 0.0
        %1941 = vadd.xlane.f32.xlu0 %v1940
        %v1942 = vpop.xlane.xlu0 %1941
        %v1943 = vsel %vm1368, %v1710, 0.0
        %1944 = vadd.xlane.f32.xlu0 %v1943
        %v1945 = vpop.xlane.xlu0 %1944
        %v1946 = vsel %vm1368, %v1712, 0.0
        %1947 = vadd.xlane.f32.xlu0 %v1946
        %v1948 = vpop.xlane.xlu0 %1947
        %v1949 = vsel %vm1368, %v1714, 0.0
        %1950 = vadd.xlane.f32.xlu0 %v1949
        %v1951 = vpop.xlane.xlu0 %1950
        %v1952 = vsel %vm1368, %v1716, 0.0
        %1953 = vadd.xlane.f32.xlu0 %v1952
        %v1954 = vpop.xlane.xlu0 %1953
        %v1955 = vsel %vm1368, %v1718, 0.0
        %1956 = vadd.xlane.f32.xlu0 %v1955
        %v1957 = vpop.xlane.xlu0 %1956
        %v1958 = vsel %vm1368, %v1720, 0.0
        %1959 = vadd.xlane.f32.xlu0 %v1958
        %v1960 = vpop.xlane.xlu0 %1959
        %v1961 = vsel %vm1368, %v1722, 0.0
        %1962 = vadd.xlane.f32.xlu0 %v1961
        %v1963 = vpop.xlane.xlu0 %1962
        %v1964 = vsel %vm1368, %v1724, 0.0
        %1965 = vadd.xlane.f32.xlu0 %v1964
        %v1966 = vpop.xlane.xlu0 %1965
        %v1967 = vsel %vm1368, %v1726, 0.0
        %1968 = vadd.xlane.f32.xlu0 %v1967
        %v1969 = vpop.xlane.xlu0 %1968
        %v1970 = vsel %vm1368, %v1728, 0.0
        %1971 = vadd.xlane.f32.xlu0 %v1970
        %v1972 = vpop.xlane.xlu0 %1971
        %v1973 = vsel %vm1368, %v1730, 0.0
        %1974 = vadd.xlane.f32.xlu0 %v1973
        %v1975 = vpop.xlane.xlu0 %1974
        %v1976 = vsel %vm1368, %v1732, 0.0
        %1977 = vadd.xlane.f32.xlu0 %v1976
        %v1978 = vpop.xlane.xlu0 %1977
        %v1979 = vsel %vm1368, %v1734, 0.0
        %1980 = vadd.xlane.f32.xlu0 %v1979
        %v1981 = vpop.xlane.xlu0 %1980
        %v1982 = vsel %vm1368, %v1736, 0.0
        %1983 = vadd.xlane.f32.xlu0 %v1982
        %v1984 = vpop.xlane.xlu0 %1983
        %v1985 = vsel %vm1368, %v1738, 0.0
        %1986 = vadd.xlane.f32.xlu0 %v1985
        %v1987 = vpop.xlane.xlu0 %1986
        %v1988 = vsel %vm1368, %v1740, 0.0
        %1989 = vadd.xlane.f32.xlu0 %v1988
        %v1990 = vpop.xlane.xlu0 %1989
        %v1991 = vsel %vm1368, %v1742, 0.0
        %1992 = vadd.xlane.f32.xlu0 %v1991
        %v1993 = vpop.xlane.xlu0 %1992
        %v1994 = vsel %vm1368, %v1744, 0.0
        %1995 = vadd.xlane.f32.xlu0 %v1994
        %v1996 = vpop.xlane.xlu0 %1995
        %v1997 = vsel %vm1368, %v1746, 0.0
        %1998 = vadd.xlane.f32.xlu0 %v1997
        %v1999 = vpop.xlane.xlu0 %1998
        %v2000 = vsel %vm1368, %v1748, 0.0
        %2001 = vadd.xlane.f32.xlu0 %v2000
        %v2002 = vpop.xlane.xlu0 %2001
        %v2003 = vsel %vm1368, %v1750, 0.0
        %2004 = vadd.xlane.f32.xlu0 %v2003
        %v2005 = vpop.xlane.xlu0 %2004
        %v2006 = vsel %vm1368, %v1752, 0.0
        %2007 = vadd.xlane.f32.xlu0 %v2006
        %v2008 = vpop.xlane.xlu0 %2007
        %2009 = vrot.lane.b32.xlu0 %v1304, 96
        %v2010 = vpop.permute.xlu0 %2009
        %2011 = vrot.lane.b32.xlu0 %v1305, 96
        %v2012 = vpop.permute.xlu0 %2011
        %2013 = vrot.lane.b32.xlu0 %v1306, 96
        %v2014 = vpop.permute.xlu0 %2013
        %2015 = vrot.lane.b32.xlu0 %v1307, 96
        %v2016 = vpop.permute.xlu0 %2015
        %2017 = vrot.lane.b32.xlu0 %v1308, 96
        %v2018 = vpop.permute.xlu0 %2017
        %2019 = vrot.lane.b32.xlu0 %v1309, 96
        %v2020 = vpop.permute.xlu0 %2019
        %2021 = vrot.lane.b32.xlu0 %v1310, 96
        %v2022 = vpop.permute.xlu0 %2021
        %2023 = vrot.lane.b32.xlu0 %v1311, 96
        %v2024 = vpop.permute.xlu0 %2023
        %2025 = vrot.lane.b32.xlu0 %v1312, 96
        %v2026 = vpop.permute.xlu0 %2025
        %2027 = vrot.lane.b32.xlu0 %v1313, 96
        %v2028 = vpop.permute.xlu0 %2027
        %2029 = vrot.lane.b32.xlu0 %v1314, 96
        %v2030 = vpop.permute.xlu0 %2029
        %2031 = vrot.lane.b32.xlu0 %v1315, 96
        %v2032 = vpop.permute.xlu0 %2031
        %2033 = vrot.lane.b32.xlu0 %v1316, 96
        %v2034 = vpop.permute.xlu0 %2033
        %2035 = vrot.lane.b32.xlu0 %v1317, 96
        %v2036 = vpop.permute.xlu0 %2035
        %2037 = vrot.lane.b32.xlu0 %v1318, 96
        %v2038 = vpop.permute.xlu0 %2037
        %2039 = vrot.lane.b32.xlu0 %v1319, 96
        %v2040 = vpop.permute.xlu0 %2039
        %2041 = vrot.lane.b32.xlu0 %v1320, 96
        %v2042 = vpop.permute.xlu0 %2041
        %2043 = vrot.lane.b32.xlu0 %v1321, 96
        %v2044 = vpop.permute.xlu0 %2043
        %2045 = vrot.lane.b32.xlu0 %v1322, 96
        %v2046 = vpop.permute.xlu0 %2045
        %2047 = vrot.lane.b32.xlu0 %v1323, 96
        %v2048 = vpop.permute.xlu0 %2047
        %2049 = vrot.lane.b32.xlu0 %v1324, 96
        %v2050 = vpop.permute.xlu0 %2049
        %2051 = vrot.lane.b32.xlu0 %v1325, 96
        %v2052 = vpop.permute.xlu0 %2051
        %2053 = vrot.lane.b32.xlu0 %v1326, 96
        %v2054 = vpop.permute.xlu0 %2053
        %2055 = vrot.lane.b32.xlu0 %v1327, 96
        %v2056 = vpop.permute.xlu0 %2055
        %2057 = vrot.lane.b32.xlu0 %v1328, 96
        %v2058 = vpop.permute.xlu0 %2057
        %2059 = vrot.lane.b32.xlu0 %v1329, 96
        %v2060 = vpop.permute.xlu0 %2059
        %2061 = vrot.lane.b32.xlu0 %v1330, 96
        %v2062 = vpop.permute.xlu0 %2061
        %2063 = vrot.lane.b32.xlu0 %v1331, 96
        %v2064 = vpop.permute.xlu0 %2063
        %2065 = vrot.lane.b32.xlu0 %v1332, 96
        %v2066 = vpop.permute.xlu0 %2065
        %2067 = vrot.lane.b32.xlu0 %v1333, 96
        %v2068 = vpop.permute.xlu0 %2067
        %2069 = vrot.lane.b32.xlu0 %v1334, 96
        %v2070 = vpop.permute.xlu0 %2069
        %2071 = vrot.lane.b32.xlu0 %v1335, 96
        %v2072 = vpop.permute.xlu0 %2071
        %2073 = vrot.lane.b32.xlu0 %v1336, 96
        %v2074 = vpop.permute.xlu0 %2073
        %2075 = vrot.lane.b32.xlu0 %v1337, 96
        %v2076 = vpop.permute.xlu0 %2075
        %2077 = vrot.lane.b32.xlu0 %v1338, 96
        %v2078 = vpop.permute.xlu0 %2077
        %2079 = vrot.lane.b32.xlu0 %v1339, 96
        %v2080 = vpop.permute.xlu0 %2079
        %2081 = vrot.lane.b32.xlu0 %v1340, 96
        %v2082 = vpop.permute.xlu0 %2081
        %2083 = vrot.lane.b32.xlu0 %v1341, 96
        %v2084 = vpop.permute.xlu0 %2083
        %2085 = vrot.lane.b32.xlu0 %v1342, 96
        %v2086 = vpop.permute.xlu0 %2085
        %2087 = vrot.lane.b32.xlu0 %v1343, 96
        %v2088 = vpop.permute.xlu0 %2087
        %2089 = vrot.lane.b32.xlu0 %v1344, 96
        %v2090 = vpop.permute.xlu0 %2089
        %2091 = vrot.lane.b32.xlu0 %v1345, 96
        %v2092 = vpop.permute.xlu0 %2091
        %2093 = vrot.lane.b32.xlu0 %v1346, 96
        %v2094 = vpop.permute.xlu0 %2093
        %2095 = vrot.lane.b32.xlu0 %v1347, 96
        %v2096 = vpop.permute.xlu0 %2095
        %2097 = vrot.lane.b32.xlu0 %v1348, 96
        %v2098 = vpop.permute.xlu0 %2097
        %2099 = vrot.lane.b32.xlu0 %v1349, 96
        %v2100 = vpop.permute.xlu0 %2099
        %2101 = vrot.lane.b32.xlu0 %v1350, 96
        %v2102 = vpop.permute.xlu0 %2101
        %2103 = vrot.lane.b32.xlu0 %v1351, 96
        %v2104 = vpop.permute.xlu0 %2103
        %2105 = vrot.lane.b32.xlu0 %v1352, 96
        %v2106 = vpop.permute.xlu0 %2105
        %2107 = vrot.lane.b32.xlu0 %v1353, 96
        %v2108 = vpop.permute.xlu0 %2107
        %2109 = vrot.lane.b32.xlu0 %v1354, 96
        %v2110 = vpop.permute.xlu0 %2109
        %2111 = vrot.lane.b32.xlu0 %v1355, 96
        %v2112 = vpop.permute.xlu0 %2111
        %2113 = vrot.lane.b32.xlu0 %v1356, 96
        %v2114 = vpop.permute.xlu0 %2113
        %2115 = vrot.lane.b32.xlu0 %v1357, 96
        %v2116 = vpop.permute.xlu0 %2115
        %2117 = vrot.lane.b32.xlu0 %v1358, 96
        %v2118 = vpop.permute.xlu0 %2117
        %2119 = vrot.lane.b32.xlu0 %v1359, 96
        %v2120 = vpop.permute.xlu0 %2119
        %2121 = vrot.lane.b32.xlu0 %v1360, 96
        %v2122 = vpop.permute.xlu0 %2121
        %2123 = vrot.lane.b32.xlu0 %v1361, 96
        %v2124 = vpop.permute.xlu0 %2123
        %2125 = vrot.lane.b32.xlu0 %v1362, 96
        %v2126 = vpop.permute.xlu0 %2125
        %2127 = vrot.lane.b32.xlu0 %v1363, 96
        %v2128 = vpop.permute.xlu0 %2127
        %2129 = vrot.lane.b32.xlu0 %v1364, 96
        %v2130 = vpop.permute.xlu0 %2129
        %2131 = vrot.lane.b32.xlu0 %v1365, 96
        %v2132 = vpop.permute.xlu0 %2131
        %2133 = vrot.lane.b32.xlu0 %v1366, 96
        %v2134 = vpop.permute.xlu0 %2133
        %2135 = vrot.lane.b32.xlu0 %v1367, 96
        %v2136 = vpop.permute.xlu0 %2135
        %v2201 = vsel %vm1368, %v2010, 0.0
        %2202 = vadd.xlane.f32.xlu0 %v2201
        %v2203 = vpop.xlane.xlu0 %2202
        %v2204 = vsel %vm1368, %v2012, 0.0
        %2205 = vadd.xlane.f32.xlu0 %v2204
        %v2206 = vpop.xlane.xlu0 %2205
        %v2207 = vsel %vm1368, %v2014, 0.0
        %2208 = vadd.xlane.f32.xlu0 %v2207
        %v2209 = vpop.xlane.xlu0 %2208
        %v2210 = vsel %vm1368, %v2016, 0.0
        %2211 = vadd.xlane.f32.xlu0 %v2210
        %v2212 = vpop.xlane.xlu0 %2211
        %v2213 = vsel %vm1368, %v2018, 0.0
        %2214 = vadd.xlane.f32.xlu0 %v2213
        %v2215 = vpop.xlane.xlu0 %2214
        %v2216 = vsel %vm1368, %v2020, 0.0
        %2217 = vadd.xlane.f32.xlu0 %v2216
        %v2218 = vpop.xlane.xlu0 %2217
        %v2219 = vsel %vm1368, %v2022, 0.0
        %2220 = vadd.xlane.f32.xlu0 %v2219
        %v2221 = vpop.xlane.xlu0 %2220
        %v2222 = vsel %vm1368, %v2024, 0.0
        %2223 = vadd.xlane.f32.xlu0 %v2222
        %v2224 = vpop.xlane.xlu0 %2223
        %v2225 = vsel %vm1368, %v2026, 0.0
        %2226 = vadd.xlane.f32.xlu0 %v2225
        %v2227 = vpop.xlane.xlu0 %2226
        %v2228 = vsel %vm1368, %v2028, 0.0
        %2229 = vadd.xlane.f32.xlu0 %v2228
        %v2230 = vpop.xlane.xlu0 %2229
        %v2231 = vsel %vm1368, %v2030, 0.0
        %2232 = vadd.xlane.f32.xlu0 %v2231
        %v2233 = vpop.xlane.xlu0 %2232
        %v2234 = vsel %vm1368, %v2032, 0.0
        %2235 = vadd.xlane.f32.xlu0 %v2234
        %v2236 = vpop.xlane.xlu0 %2235
        %v2237 = vsel %vm1368, %v2034, 0.0
        %2238 = vadd.xlane.f32.xlu0 %v2237
        %v2239 = vpop.xlane.xlu0 %2238
        %v2240 = vsel %vm1368, %v2036, 0.0
        %2241 = vadd.xlane.f32.xlu0 %v2240
        %v2242 = vpop.xlane.xlu0 %2241
        %v2243 = vsel %vm1368, %v2038, 0.0
        %2244 = vadd.xlane.f32.xlu0 %v2243
        %v2245 = vpop.xlane.xlu0 %2244
        %v2246 = vsel %vm1368, %v2040, 0.0
        %2247 = vadd.xlane.f32.xlu0 %v2246
        %v2248 = vpop.xlane.xlu0 %2247
        %v2249 = vsel %vm1368, %v2042, 0.0
        %2250 = vadd.xlane.f32.xlu0 %v2249
        %v2251 = vpop.xlane.xlu0 %2250
        %v2252 = vsel %vm1368, %v2044, 0.0
        %2253 = vadd.xlane.f32.xlu0 %v2252
        %v2254 = vpop.xlane.xlu0 %2253
        %v2255 = vsel %vm1368, %v2046, 0.0
        %2256 = vadd.xlane.f32.xlu0 %v2255
        %v2257 = vpop.xlane.xlu0 %2256
        %v2258 = vsel %vm1368, %v2048, 0.0
        %2259 = vadd.xlane.f32.xlu0 %v2258
        %v2260 = vpop.xlane.xlu0 %2259
        %v2261 = vsel %vm1368, %v2050, 0.0
        %2262 = vadd.xlane.f32.xlu0 %v2261
        %v2263 = vpop.xlane.xlu0 %2262
        %v2264 = vsel %vm1368, %v2052, 0.0
        %2265 = vadd.xlane.f32.xlu0 %v2264
        %v2266 = vpop.xlane.xlu0 %2265
        %v2267 = vsel %vm1368, %v2054, 0.0
        %2268 = vadd.xlane.f32.xlu0 %v2267
        %v2269 = vpop.xlane.xlu0 %2268
        %v2270 = vsel %vm1368, %v2056, 0.0
        %2271 = vadd.xlane.f32.xlu0 %v2270
        %v2272 = vpop.xlane.xlu0 %2271
        %v2273 = vsel %vm1368, %v2058, 0.0
        %2274 = vadd.xlane.f32.xlu0 %v2273
        %v2275 = vpop.xlane.xlu0 %2274
        %v2276 = vsel %vm1368, %v2060, 0.0
        %2277 = vadd.xlane.f32.xlu0 %v2276
        %v2278 = vpop.xlane.xlu0 %2277
        %v2279 = vsel %vm1368, %v2062, 0.0
        %2280 = vadd.xlane.f32.xlu0 %v2279
        %v2281 = vpop.xlane.xlu0 %2280
        %v2282 = vsel %vm1368, %v2064, 0.0
        %2283 = vadd.xlane.f32.xlu0 %v2282
        %v2284 = vpop.xlane.xlu0 %2283
        %v2285 = vsel %vm1368, %v2066, 0.0
        %2286 = vadd.xlane.f32.xlu0 %v2285
        %v2287 = vpop.xlane.xlu0 %2286
        %v2288 = vsel %vm1368, %v2068, 0.0
        %2289 = vadd.xlane.f32.xlu0 %v2288
        %v2290 = vpop.xlane.xlu0 %2289
        %v2291 = vsel %vm1368, %v2070, 0.0
        %2292 = vadd.xlane.f32.xlu0 %v2291
        %v2293 = vpop.xlane.xlu0 %2292
        %v2294 = vsel %vm1368, %v2072, 0.0
        %2295 = vadd.xlane.f32.xlu0 %v2294
        %v2296 = vpop.xlane.xlu0 %2295
        %v2297 = vsel %vm1368, %v2074, 0.0
        %2298 = vadd.xlane.f32.xlu0 %v2297
        %v2299 = vpop.xlane.xlu0 %2298
        %v2300 = vsel %vm1368, %v2076, 0.0
        %2301 = vadd.xlane.f32.xlu0 %v2300
        %v2302 = vpop.xlane.xlu0 %2301
        %v2303 = vsel %vm1368, %v2078, 0.0
        %2304 = vadd.xlane.f32.xlu0 %v2303
        %v2305 = vpop.xlane.xlu0 %2304
        %v2306 = vsel %vm1368, %v2080, 0.0
        %2307 = vadd.xlane.f32.xlu0 %v2306
        %v2308 = vpop.xlane.xlu0 %2307
        %v2309 = vsel %vm1368, %v2082, 0.0
        %2310 = vadd.xlane.f32.xlu0 %v2309
        %v2311 = vpop.xlane.xlu0 %2310
        %v2312 = vsel %vm1368, %v2084, 0.0
        %2313 = vadd.xlane.f32.xlu0 %v2312
        %v2314 = vpop.xlane.xlu0 %2313
        %v2315 = vsel %vm1368, %v2086, 0.0
        %2316 = vadd.xlane.f32.xlu0 %v2315
        %v2317 = vpop.xlane.xlu0 %2316
        %v2318 = vsel %vm1368, %v2088, 0.0
        %2319 = vadd.xlane.f32.xlu0 %v2318
        %v2320 = vpop.xlane.xlu0 %2319
        %v2321 = vsel %vm1368, %v2090, 0.0
        %2322 = vadd.xlane.f32.xlu0 %v2321
        %v2323 = vpop.xlane.xlu0 %2322
        %v2324 = vsel %vm1368, %v2092, 0.0
        %2325 = vadd.xlane.f32.xlu0 %v2324
        %v2326 = vpop.xlane.xlu0 %2325
        %v2327 = vsel %vm1368, %v2094, 0.0
        %2328 = vadd.xlane.f32.xlu0 %v2327
        %v2329 = vpop.xlane.xlu0 %2328
        %v2330 = vsel %vm1368, %v2096, 0.0
        %2331 = vadd.xlane.f32.xlu0 %v2330
        %v2332 = vpop.xlane.xlu0 %2331
        %v2333 = vsel %vm1368, %v2098, 0.0
        %2334 = vadd.xlane.f32.xlu0 %v2333
        %v2335 = vpop.xlane.xlu0 %2334
        %v2336 = vsel %vm1368, %v2100, 0.0
        %2337 = vadd.xlane.f32.xlu0 %v2336
        %v2338 = vpop.xlane.xlu0 %2337
        %v2339 = vsel %vm1368, %v2102, 0.0
        %2340 = vadd.xlane.f32.xlu0 %v2339
        %v2341 = vpop.xlane.xlu0 %2340
        %v2342 = vsel %vm1368, %v2104, 0.0
        %2343 = vadd.xlane.f32.xlu0 %v2342
        %v2344 = vpop.xlane.xlu0 %2343
        %v2345 = vsel %vm1368, %v2106, 0.0
        %2346 = vadd.xlane.f32.xlu0 %v2345
        %v2347 = vpop.xlane.xlu0 %2346
        %v2348 = vsel %vm1368, %v2108, 0.0
        %2349 = vadd.xlane.f32.xlu0 %v2348
        %v2350 = vpop.xlane.xlu0 %2349
        %v2351 = vsel %vm1368, %v2110, 0.0
        %2352 = vadd.xlane.f32.xlu0 %v2351
        %v2353 = vpop.xlane.xlu0 %2352
        %v2354 = vsel %vm1368, %v2112, 0.0
        %2355 = vadd.xlane.f32.xlu0 %v2354
        %v2356 = vpop.xlane.xlu0 %2355
        %v2357 = vsel %vm1368, %v2114, 0.0
        %2358 = vadd.xlane.f32.xlu0 %v2357
        %v2359 = vpop.xlane.xlu0 %2358
        %v2360 = vsel %vm1368, %v2116, 0.0
        %2361 = vadd.xlane.f32.xlu0 %v2360
        %v2362 = vpop.xlane.xlu0 %2361
        %v2363 = vsel %vm1368, %v2118, 0.0
        %2364 = vadd.xlane.f32.xlu0 %v2363
        %v2365 = vpop.xlane.xlu0 %2364
        %v2366 = vsel %vm1368, %v2120, 0.0
        %2367 = vadd.xlane.f32.xlu0 %v2366
        %v2368 = vpop.xlane.xlu0 %2367
        %v2369 = vsel %vm1368, %v2122, 0.0
        %2370 = vadd.xlane.f32.xlu0 %v2369
        %v2371 = vpop.xlane.xlu0 %2370
        %v2372 = vsel %vm1368, %v2124, 0.0
        %2373 = vadd.xlane.f32.xlu0 %v2372
        %v2374 = vpop.xlane.xlu0 %2373
        %v2375 = vsel %vm1368, %v2126, 0.0
        %2376 = vadd.xlane.f32.xlu0 %v2375
        %v2377 = vpop.xlane.xlu0 %2376
        %v2378 = vsel %vm1368, %v2128, 0.0
        %2379 = vadd.xlane.f32.xlu0 %v2378
        %v2380 = vpop.xlane.xlu0 %2379
        %v2381 = vsel %vm1368, %v2130, 0.0
        %2382 = vadd.xlane.f32.xlu0 %v2381
        %v2383 = vpop.xlane.xlu0 %2382
        %v2384 = vsel %vm1368, %v2132, 0.0
        %2385 = vadd.xlane.f32.xlu0 %v2384
        %v2386 = vpop.xlane.xlu0 %2385
        %v2387 = vsel %vm1368, %v2134, 0.0
        %2388 = vadd.xlane.f32.xlu0 %v2387
        %v2389 = vpop.xlane.xlu0 %2388
        %v2390 = vsel %vm1368, %v2136, 0.0
        %2391 = vadd.xlane.f32.xlu0 %v2390
        %v2392 = vpop.xlane.xlu0 %2391
        %2393 = vrot.lane.b32.xlu0 %v1304, 80
        %v2394 = vpop.permute.xlu0 %2393
        %2395 = vrot.lane.b32.xlu0 %v1305, 80
        %v2396 = vpop.permute.xlu0 %2395
        %2397 = vrot.lane.b32.xlu0 %v1306, 80
        %v2398 = vpop.permute.xlu0 %2397
        %2399 = vrot.lane.b32.xlu0 %v1307, 80
        %v2400 = vpop.permute.xlu0 %2399
        %2401 = vrot.lane.b32.xlu0 %v1308, 80
        %v2402 = vpop.permute.xlu0 %2401
        %2403 = vrot.lane.b32.xlu0 %v1309, 80
        %v2404 = vpop.permute.xlu0 %2403
        %2405 = vrot.lane.b32.xlu0 %v1310, 80
        %v2406 = vpop.permute.xlu0 %2405
        %2407 = vrot.lane.b32.xlu0 %v1311, 80
        %v2408 = vpop.permute.xlu0 %2407
        %2409 = vrot.lane.b32.xlu0 %v1312, 80
        %v2410 = vpop.permute.xlu0 %2409
        %2411 = vrot.lane.b32.xlu0 %v1313, 80
        %v2412 = vpop.permute.xlu0 %2411
        %2413 = vrot.lane.b32.xlu0 %v1314, 80
        %v2414 = vpop.permute.xlu0 %2413
        %2415 = vrot.lane.b32.xlu0 %v1315, 80
        %v2416 = vpop.permute.xlu0 %2415
        %2417 = vrot.lane.b32.xlu0 %v1316, 80
        %v2418 = vpop.permute.xlu0 %2417
        %2419 = vrot.lane.b32.xlu0 %v1317, 80
        %v2420 = vpop.permute.xlu0 %2419
        %2421 = vrot.lane.b32.xlu0 %v1318, 80
        %v2422 = vpop.permute.xlu0 %2421
        %2423 = vrot.lane.b32.xlu0 %v1319, 80
        %v2424 = vpop.permute.xlu0 %2423
        %2425 = vrot.lane.b32.xlu0 %v1320, 80
        %v2426 = vpop.permute.xlu0 %2425
        %2427 = vrot.lane.b32.xlu0 %v1321, 80
        %v2428 = vpop.permute.xlu0 %2427
        %2429 = vrot.lane.b32.xlu0 %v1322, 80
        %v2430 = vpop.permute.xlu0 %2429
        %2431 = vrot.lane.b32.xlu0 %v1323, 80
        %v2432 = vpop.permute.xlu0 %2431
        %2433 = vrot.lane.b32.xlu0 %v1324, 80
        %v2434 = vpop.permute.xlu0 %2433
        %2435 = vrot.lane.b32.xlu0 %v1325, 80
        %v2436 = vpop.permute.xlu0 %2435
        %2437 = vrot.lane.b32.xlu0 %v1326, 80
        %v2438 = vpop.permute.xlu0 %2437
        %2439 = vrot.lane.b32.xlu0 %v1327, 80
        %v2440 = vpop.permute.xlu0 %2439
        %2441 = vrot.lane.b32.xlu0 %v1328, 80
        %v2442 = vpop.permute.xlu0 %2441
        %2443 = vrot.lane.b32.xlu0 %v1329, 80
        %v2444 = vpop.permute.xlu0 %2443
        %2445 = vrot.lane.b32.xlu0 %v1330, 80
        %v2446 = vpop.permute.xlu0 %2445
        %2447 = vrot.lane.b32.xlu0 %v1331, 80
        %v2448 = vpop.permute.xlu0 %2447
        %2449 = vrot.lane.b32.xlu0 %v1332, 80
        %v2450 = vpop.permute.xlu0 %2449
        %2451 = vrot.lane.b32.xlu0 %v1333, 80
        %v2452 = vpop.permute.xlu0 %2451
        %2453 = vrot.lane.b32.xlu0 %v1334, 80
        %v2454 = vpop.permute.xlu0 %2453
        %2455 = vrot.lane.b32.xlu0 %v1335, 80
        %v2456 = vpop.permute.xlu0 %2455
        %2457 = vrot.lane.b32.xlu0 %v1336, 80
        %v2458 = vpop.permute.xlu0 %2457
        %2459 = vrot.lane.b32.xlu0 %v1337, 80
        %v2460 = vpop.permute.xlu0 %2459
        %2461 = vrot.lane.b32.xlu0 %v1338, 80
        %v2462 = vpop.permute.xlu0 %2461
        %2463 = vrot.lane.b32.xlu0 %v1339, 80
        %v2464 = vpop.permute.xlu0 %2463
        %2465 = vrot.lane.b32.xlu0 %v1340, 80
        %v2466 = vpop.permute.xlu0 %2465
        %2467 = vrot.lane.b32.xlu0 %v1341, 80
        %v2468 = vpop.permute.xlu0 %2467
        %2469 = vrot.lane.b32.xlu0 %v1342, 80
        %v2470 = vpop.permute.xlu0 %2469
        %2471 = vrot.lane.b32.xlu0 %v1343, 80
        %v2472 = vpop.permute.xlu0 %2471
        %2473 = vrot.lane.b32.xlu0 %v1344, 80
        %v2474 = vpop.permute.xlu0 %2473
        %2475 = vrot.lane.b32.xlu0 %v1345, 80
        %v2476 = vpop.permute.xlu0 %2475
        %2477 = vrot.lane.b32.xlu0 %v1346, 80
        %v2478 = vpop.permute.xlu0 %2477
        %2479 = vrot.lane.b32.xlu0 %v1347, 80
        %v2480 = vpop.permute.xlu0 %2479
        %2481 = vrot.lane.b32.xlu0 %v1348, 80
        %v2482 = vpop.permute.xlu0 %2481
        %2483 = vrot.lane.b32.xlu0 %v1349, 80
        %v2484 = vpop.permute.xlu0 %2483
        %2485 = vrot.lane.b32.xlu0 %v1350, 80
        %v2486 = vpop.permute.xlu0 %2485
        %2487 = vrot.lane.b32.xlu0 %v1351, 80
        %v2488 = vpop.permute.xlu0 %2487
        %2489 = vrot.lane.b32.xlu0 %v1352, 80
        %v2490 = vpop.permute.xlu0 %2489
        %2491 = vrot.lane.b32.xlu0 %v1353, 80
        %v2492 = vpop.permute.xlu0 %2491
        %2493 = vrot.lane.b32.xlu0 %v1354, 80
        %v2494 = vpop.permute.xlu0 %2493
        %2495 = vrot.lane.b32.xlu0 %v1355, 80
        %v2496 = vpop.permute.xlu0 %2495
        %2497 = vrot.lane.b32.xlu0 %v1356, 80
        %v2498 = vpop.permute.xlu0 %2497
        %2499 = vrot.lane.b32.xlu0 %v1357, 80
        %v2500 = vpop.permute.xlu0 %2499
        %2501 = vrot.lane.b32.xlu0 %v1358, 80
        %v2502 = vpop.permute.xlu0 %2501
        %2503 = vrot.lane.b32.xlu0 %v1359, 80
        %v2504 = vpop.permute.xlu0 %2503
        %2505 = vrot.lane.b32.xlu0 %v1360, 80
        %v2506 = vpop.permute.xlu0 %2505
        %2507 = vrot.lane.b32.xlu0 %v1361, 80
        %v2508 = vpop.permute.xlu0 %2507
        %2509 = vrot.lane.b32.xlu0 %v1362, 80
        %v2510 = vpop.permute.xlu0 %2509
        %2511 = vrot.lane.b32.xlu0 %v1363, 80
        %v2512 = vpop.permute.xlu0 %2511
        %2513 = vrot.lane.b32.xlu0 %v1364, 80
        %v2514 = vpop.permute.xlu0 %2513
        %2515 = vrot.lane.b32.xlu0 %v1365, 80
        %v2516 = vpop.permute.xlu0 %2515
        %2517 = vrot.lane.b32.xlu0 %v1366, 80
        %v2518 = vpop.permute.xlu0 %2517
        %2519 = vrot.lane.b32.xlu0 %v1367, 80
        %v2520 = vpop.permute.xlu0 %2519
        %v2585 = vsel %vm1368, %v2394, 0.0
        %2586 = vadd.xlane.f32.xlu0 %v2585
        %v2587 = vpop.xlane.xlu0 %2586
        %v2588 = vsel %vm1368, %v2396, 0.0
        %2589 = vadd.xlane.f32.xlu0 %v2588
        %v2590 = vpop.xlane.xlu0 %2589
        %v2591 = vsel %vm1368, %v2398, 0.0
        %2592 = vadd.xlane.f32.xlu0 %v2591
        %v2593 = vpop.xlane.xlu0 %2592
        %v2594 = vsel %vm1368, %v2400, 0.0
        %2595 = vadd.xlane.f32.xlu0 %v2594
        %v2596 = vpop.xlane.xlu0 %2595
        %v2597 = vsel %vm1368, %v2402, 0.0
        %2598 = vadd.xlane.f32.xlu0 %v2597
        %v2599 = vpop.xlane.xlu0 %2598
        %v2600 = vsel %vm1368, %v2404, 0.0
        %2601 = vadd.xlane.f32.xlu0 %v2600
        %v2602 = vpop.xlane.xlu0 %2601
        %v2603 = vsel %vm1368, %v2406, 0.0
        %2604 = vadd.xlane.f32.xlu0 %v2603
        %v2605 = vpop.xlane.xlu0 %2604
        %v2606 = vsel %vm1368, %v2408, 0.0
        %2607 = vadd.xlane.f32.xlu0 %v2606
        %v2608 = vpop.xlane.xlu0 %2607
        %v2609 = vsel %vm1368, %v2410, 0.0
        %2610 = vadd.xlane.f32.xlu0 %v2609
        %v2611 = vpop.xlane.xlu0 %2610
        %v2612 = vsel %vm1368, %v2412, 0.0
        %2613 = vadd.xlane.f32.xlu0 %v2612
        %v2614 = vpop.xlane.xlu0 %2613
        %v2615 = vsel %vm1368, %v2414, 0.0
        %2616 = vadd.xlane.f32.xlu0 %v2615
        %v2617 = vpop.xlane.xlu0 %2616
        %v2618 = vsel %vm1368, %v2416, 0.0
        %2619 = vadd.xlane.f32.xlu0 %v2618
        %v2620 = vpop.xlane.xlu0 %2619
        %v2621 = vsel %vm1368, %v2418, 0.0
        %2622 = vadd.xlane.f32.xlu0 %v2621
        %v2623 = vpop.xlane.xlu0 %2622
        %v2624 = vsel %vm1368, %v2420, 0.0
        %2625 = vadd.xlane.f32.xlu0 %v2624
        %v2626 = vpop.xlane.xlu0 %2625
        %v2627 = vsel %vm1368, %v2422, 0.0
        %2628 = vadd.xlane.f32.xlu0 %v2627
        %v2629 = vpop.xlane.xlu0 %2628
        %v2630 = vsel %vm1368, %v2424, 0.0
        %2631 = vadd.xlane.f32.xlu0 %v2630
        %v2632 = vpop.xlane.xlu0 %2631
        %v2633 = vsel %vm1368, %v2426, 0.0
        %2634 = vadd.xlane.f32.xlu0 %v2633
        %v2635 = vpop.xlane.xlu0 %2634
        %v2636 = vsel %vm1368, %v2428, 0.0
        %2637 = vadd.xlane.f32.xlu0 %v2636
        %v2638 = vpop.xlane.xlu0 %2637
        %v2639 = vsel %vm1368, %v2430, 0.0
        %2640 = vadd.xlane.f32.xlu0 %v2639
        %v2641 = vpop.xlane.xlu0 %2640
        %v2642 = vsel %vm1368, %v2432, 0.0
        %2643 = vadd.xlane.f32.xlu0 %v2642
        %v2644 = vpop.xlane.xlu0 %2643
        %v2645 = vsel %vm1368, %v2434, 0.0
        %2646 = vadd.xlane.f32.xlu0 %v2645
        %v2647 = vpop.xlane.xlu0 %2646
        %v2648 = vsel %vm1368, %v2436, 0.0
        %2649 = vadd.xlane.f32.xlu0 %v2648
        %v2650 = vpop.xlane.xlu0 %2649
        %v2651 = vsel %vm1368, %v2438, 0.0
        %2652 = vadd.xlane.f32.xlu0 %v2651
        %v2653 = vpop.xlane.xlu0 %2652
        %v2654 = vsel %vm1368, %v2440, 0.0
        %2655 = vadd.xlane.f32.xlu0 %v2654
        %v2656 = vpop.xlane.xlu0 %2655
        %v2657 = vsel %vm1368, %v2442, 0.0
        %2658 = vadd.xlane.f32.xlu0 %v2657
        %v2659 = vpop.xlane.xlu0 %2658
        %v2660 = vsel %vm1368, %v2444, 0.0
        %2661 = vadd.xlane.f32.xlu0 %v2660
        %v2662 = vpop.xlane.xlu0 %2661
        %v2663 = vsel %vm1368, %v2446, 0.0
        %2664 = vadd.xlane.f32.xlu0 %v2663
        %v2665 = vpop.xlane.xlu0 %2664
        %v2666 = vsel %vm1368, %v2448, 0.0
        %2667 = vadd.xlane.f32.xlu0 %v2666
        %v2668 = vpop.xlane.xlu0 %2667
        %v2669 = vsel %vm1368, %v2450, 0.0
        %2670 = vadd.xlane.f32.xlu0 %v2669
        %v2671 = vpop.xlane.xlu0 %2670
        %v2672 = vsel %vm1368, %v2452, 0.0
        %2673 = vadd.xlane.f32.xlu0 %v2672
        %v2674 = vpop.xlane.xlu0 %2673
        %v2675 = vsel %vm1368, %v2454, 0.0
        %2676 = vadd.xlane.f32.xlu0 %v2675
        %v2677 = vpop.xlane.xlu0 %2676
        %v2678 = vsel %vm1368, %v2456, 0.0
        %2679 = vadd.xlane.f32.xlu0 %v2678
        %v2680 = vpop.xlane.xlu0 %2679
        %v2681 = vsel %vm1368, %v2458, 0.0
        %2682 = vadd.xlane.f32.xlu0 %v2681
        %v2683 = vpop.xlane.xlu0 %2682
        %v2684 = vsel %vm1368, %v2460, 0.0
        %2685 = vadd.xlane.f32.xlu0 %v2684
        %v2686 = vpop.xlane.xlu0 %2685
        %v2687 = vsel %vm1368, %v2462, 0.0
        %2688 = vadd.xlane.f32.xlu0 %v2687
        %v2689 = vpop.xlane.xlu0 %2688
        %v2690 = vsel %vm1368, %v2464, 0.0
        %2691 = vadd.xlane.f32.xlu0 %v2690
        %v2692 = vpop.xlane.xlu0 %2691
        %v2693 = vsel %vm1368, %v2466, 0.0
        %2694 = vadd.xlane.f32.xlu0 %v2693
        %v2695 = vpop.xlane.xlu0 %2694
        %v2696 = vsel %vm1368, %v2468, 0.0
        %2697 = vadd.xlane.f32.xlu0 %v2696
        %v2698 = vpop.xlane.xlu0 %2697
        %v2699 = vsel %vm1368, %v2470, 0.0
        %2700 = vadd.xlane.f32.xlu0 %v2699
        %v2701 = vpop.xlane.xlu0 %2700
        %v2702 = vsel %vm1368, %v2472, 0.0
        %2703 = vadd.xlane.f32.xlu0 %v2702
        %v2704 = vpop.xlane.xlu0 %2703
        %v2705 = vsel %vm1368, %v2474, 0.0
        %2706 = vadd.xlane.f32.xlu0 %v2705
        %v2707 = vpop.xlane.xlu0 %2706
        %v2708 = vsel %vm1368, %v2476, 0.0
        %2709 = vadd.xlane.f32.xlu0 %v2708
        %v2710 = vpop.xlane.xlu0 %2709
        %v2711 = vsel %vm1368, %v2478, 0.0
        %2712 = vadd.xlane.f32.xlu0 %v2711
        %v2713 = vpop.xlane.xlu0 %2712
        %v2714 = vsel %vm1368, %v2480, 0.0
        %2715 = vadd.xlane.f32.xlu0 %v2714
        %v2716 = vpop.xlane.xlu0 %2715
        %v2717 = vsel %vm1368, %v2482, 0.0
        %2718 = vadd.xlane.f32.xlu0 %v2717
        %v2719 = vpop.xlane.xlu0 %2718
        %v2720 = vsel %vm1368, %v2484, 0.0
        %2721 = vadd.xlane.f32.xlu0 %v2720
        %v2722 = vpop.xlane.xlu0 %2721
        %v2723 = vsel %vm1368, %v2486, 0.0
        %2724 = vadd.xlane.f32.xlu0 %v2723
        %v2725 = vpop.xlane.xlu0 %2724
        %v2726 = vsel %vm1368, %v2488, 0.0
        %2727 = vadd.xlane.f32.xlu0 %v2726
        %v2728 = vpop.xlane.xlu0 %2727
        %v2729 = vsel %vm1368, %v2490, 0.0
        %2730 = vadd.xlane.f32.xlu0 %v2729
        %v2731 = vpop.xlane.xlu0 %2730
        %v2732 = vsel %vm1368, %v2492, 0.0
        %2733 = vadd.xlane.f32.xlu0 %v2732
        %v2734 = vpop.xlane.xlu0 %2733
        %v2735 = vsel %vm1368, %v2494, 0.0
        %2736 = vadd.xlane.f32.xlu0 %v2735
        %v2737 = vpop.xlane.xlu0 %2736
        %v2738 = vsel %vm1368, %v2496, 0.0
        %2739 = vadd.xlane.f32.xlu0 %v2738
        %v2740 = vpop.xlane.xlu0 %2739
        %v2741 = vsel %vm1368, %v2498, 0.0
        %2742 = vadd.xlane.f32.xlu0 %v2741
        %v2743 = vpop.xlane.xlu0 %2742
        %v2744 = vsel %vm1368, %v2500, 0.0
        %2745 = vadd.xlane.f32.xlu0 %v2744
        %v2746 = vpop.xlane.xlu0 %2745
        %v2747 = vsel %vm1368, %v2502, 0.0
        %2748 = vadd.xlane.f32.xlu0 %v2747
        %v2749 = vpop.xlane.xlu0 %2748
        %v2750 = vsel %vm1368, %v2504, 0.0
        %2751 = vadd.xlane.f32.xlu0 %v2750
        %v2752 = vpop.xlane.xlu0 %2751
        %v2753 = vsel %vm1368, %v2506, 0.0
        %2754 = vadd.xlane.f32.xlu0 %v2753
        %v2755 = vpop.xlane.xlu0 %2754
        %v2756 = vsel %vm1368, %v2508, 0.0
        %2757 = vadd.xlane.f32.xlu0 %v2756
        %v2758 = vpop.xlane.xlu0 %2757
        %v2759 = vsel %vm1368, %v2510, 0.0
        %2760 = vadd.xlane.f32.xlu0 %v2759
        %v2761 = vpop.xlane.xlu0 %2760
        %v2762 = vsel %vm1368, %v2512, 0.0
        %2763 = vadd.xlane.f32.xlu0 %v2762
        %v2764 = vpop.xlane.xlu0 %2763
        %v2765 = vsel %vm1368, %v2514, 0.0
        %2766 = vadd.xlane.f32.xlu0 %v2765
        %v2767 = vpop.xlane.xlu0 %2766
        %v2768 = vsel %vm1368, %v2516, 0.0
        %2769 = vadd.xlane.f32.xlu0 %v2768
        %v2770 = vpop.xlane.xlu0 %2769
        %v2771 = vsel %vm1368, %v2518, 0.0
        %2772 = vadd.xlane.f32.xlu0 %v2771
        %v2773 = vpop.xlane.xlu0 %2772
        %v2774 = vsel %vm1368, %v2520, 0.0
        %2775 = vadd.xlane.f32.xlu0 %v2774
        %v2776 = vpop.xlane.xlu0 %2775
        %2777 = vrot.lane.b32.xlu0 %v1304, 64
        %v2778 = vpop.permute.xlu0 %2777
        %2779 = vrot.lane.b32.xlu0 %v1305, 64
        %v2780 = vpop.permute.xlu0 %2779
        %2781 = vrot.lane.b32.xlu0 %v1306, 64
        %v2782 = vpop.permute.xlu0 %2781
        %2783 = vrot.lane.b32.xlu0 %v1307, 64
        %v2784 = vpop.permute.xlu0 %2783
        %2785 = vrot.lane.b32.xlu0 %v1308, 64
        %v2786 = vpop.permute.xlu0 %2785
        %2787 = vrot.lane.b32.xlu0 %v1309, 64
        %v2788 = vpop.permute.xlu0 %2787
        %2789 = vrot.lane.b32.xlu0 %v1310, 64
        %v2790 = vpop.permute.xlu0 %2789
        %2791 = vrot.lane.b32.xlu0 %v1311, 64
        %v2792 = vpop.permute.xlu0 %2791
        %2793 = vrot.lane.b32.xlu0 %v1312, 64
        %v2794 = vpop.permute.xlu0 %2793
        %2795 = vrot.lane.b32.xlu0 %v1313, 64
        %v2796 = vpop.permute.xlu0 %2795
        %2797 = vrot.lane.b32.xlu0 %v1314, 64
        %v2798 = vpop.permute.xlu0 %2797
        %2799 = vrot.lane.b32.xlu0 %v1315, 64
        %v2800 = vpop.permute.xlu0 %2799
        %2801 = vrot.lane.b32.xlu0 %v1316, 64
        %v2802 = vpop.permute.xlu0 %2801
        %2803 = vrot.lane.b32.xlu0 %v1317, 64
        %v2804 = vpop.permute.xlu0 %2803
        %2805 = vrot.lane.b32.xlu0 %v1318, 64
        %v2806 = vpop.permute.xlu0 %2805
        %2807 = vrot.lane.b32.xlu0 %v1319, 64
        %v2808 = vpop.permute.xlu0 %2807
        %2809 = vrot.lane.b32.xlu0 %v1320, 64
        %v2810 = vpop.permute.xlu0 %2809
        %2811 = vrot.lane.b32.xlu0 %v1321, 64
        %v2812 = vpop.permute.xlu0 %2811
        %2813 = vrot.lane.b32.xlu0 %v1322, 64
        %v2814 = vpop.permute.xlu0 %2813
        %2815 = vrot.lane.b32.xlu0 %v1323, 64
        %v2816 = vpop.permute.xlu0 %2815
        %2817 = vrot.lane.b32.xlu0 %v1324, 64
        %v2818 = vpop.permute.xlu0 %2817
        %2819 = vrot.lane.b32.xlu0 %v1325, 64
        %v2820 = vpop.permute.xlu0 %2819
        %2821 = vrot.lane.b32.xlu0 %v1326, 64
        %v2822 = vpop.permute.xlu0 %2821
        %2823 = vrot.lane.b32.xlu0 %v1327, 64
        %v2824 = vpop.permute.xlu0 %2823
        %2825 = vrot.lane.b32.xlu0 %v1328, 64
        %v2826 = vpop.permute.xlu0 %2825
        %2827 = vrot.lane.b32.xlu0 %v1329, 64
        %v2828 = vpop.permute.xlu0 %2827
        %2829 = vrot.lane.b32.xlu0 %v1330, 64
        %v2830 = vpop.permute.xlu0 %2829
        %2831 = vrot.lane.b32.xlu0 %v1331, 64
        %v2832 = vpop.permute.xlu0 %2831
        %2833 = vrot.lane.b32.xlu0 %v1332, 64
        %v2834 = vpop.permute.xlu0 %2833
        %2835 = vrot.lane.b32.xlu0 %v1333, 64
        %v2836 = vpop.permute.xlu0 %2835
        %2837 = vrot.lane.b32.xlu0 %v1334, 64
        %v2838 = vpop.permute.xlu0 %2837
        %2839 = vrot.lane.b32.xlu0 %v1335, 64
        %v2840 = vpop.permute.xlu0 %2839
        %2841 = vrot.lane.b32.xlu0 %v1336, 64
        %v2842 = vpop.permute.xlu0 %2841
        %2843 = vrot.lane.b32.xlu0 %v1337, 64
        %v2844 = vpop.permute.xlu0 %2843
        %2845 = vrot.lane.b32.xlu0 %v1338, 64
        %v2846 = vpop.permute.xlu0 %2845
        %2847 = vrot.lane.b32.xlu0 %v1339, 64
        %v2848 = vpop.permute.xlu0 %2847
        %2849 = vrot.lane.b32.xlu0 %v1340, 64
        %v2850 = vpop.permute.xlu0 %2849
        %2851 = vrot.lane.b32.xlu0 %v1341, 64
        %v2852 = vpop.permute.xlu0 %2851
        %2853 = vrot.lane.b32.xlu0 %v1342, 64
        %v2854 = vpop.permute.xlu0 %2853
        %2855 = vrot.lane.b32.xlu0 %v1343, 64
        %v2856 = vpop.permute.xlu0 %2855
        %2857 = vrot.lane.b32.xlu0 %v1344, 64
        %v2858 = vpop.permute.xlu0 %2857
        %2859 = vrot.lane.b32.xlu0 %v1345, 64
        %v2860 = vpop.permute.xlu0 %2859
        %2861 = vrot.lane.b32.xlu0 %v1346, 64
        %v2862 = vpop.permute.xlu0 %2861
        %2863 = vrot.lane.b32.xlu0 %v1347, 64
        %v2864 = vpop.permute.xlu0 %2863
        %2865 = vrot.lane.b32.xlu0 %v1348, 64
        %v2866 = vpop.permute.xlu0 %2865
        %2867 = vrot.lane.b32.xlu0 %v1349, 64
        %v2868 = vpop.permute.xlu0 %2867
        %2869 = vrot.lane.b32.xlu0 %v1350, 64
        %v2870 = vpop.permute.xlu0 %2869
        %2871 = vrot.lane.b32.xlu0 %v1351, 64
        %v2872 = vpop.permute.xlu0 %2871
        %2873 = vrot.lane.b32.xlu0 %v1352, 64
        %v2874 = vpop.permute.xlu0 %2873
        %2875 = vrot.lane.b32.xlu0 %v1353, 64
        %v2876 = vpop.permute.xlu0 %2875
        %2877 = vrot.lane.b32.xlu0 %v1354, 64
        %v2878 = vpop.permute.xlu0 %2877
        %2879 = vrot.lane.b32.xlu0 %v1355, 64
        %v2880 = vpop.permute.xlu0 %2879
        %2881 = vrot.lane.b32.xlu0 %v1356, 64
        %v2882 = vpop.permute.xlu0 %2881
        %2883 = vrot.lane.b32.xlu0 %v1357, 64
        %v2884 = vpop.permute.xlu0 %2883
        %2885 = vrot.lane.b32.xlu0 %v1358, 64
        %v2886 = vpop.permute.xlu0 %2885
        %2887 = vrot.lane.b32.xlu0 %v1359, 64
        %v2888 = vpop.permute.xlu0 %2887
        %2889 = vrot.lane.b32.xlu0 %v1360, 64
        %v2890 = vpop.permute.xlu0 %2889
        %2891 = vrot.lane.b32.xlu0 %v1361, 64
        %v2892 = vpop.permute.xlu0 %2891
        %2893 = vrot.lane.b32.xlu0 %v1362, 64
        %v2894 = vpop.permute.xlu0 %2893
        %2895 = vrot.lane.b32.xlu0 %v1363, 64
        %v2896 = vpop.permute.xlu0 %2895
        %2897 = vrot.lane.b32.xlu0 %v1364, 64
        %v2898 = vpop.permute.xlu0 %2897
        %2899 = vrot.lane.b32.xlu0 %v1365, 64
        %v2900 = vpop.permute.xlu0 %2899
        %2901 = vrot.lane.b32.xlu0 %v1366, 64
        %v2902 = vpop.permute.xlu0 %2901
        %2903 = vrot.lane.b32.xlu0 %v1367, 64
        %v2904 = vpop.permute.xlu0 %2903
        %v2969 = vsel %vm1368, %v2778, 0.0
        %2970 = vadd.xlane.f32.xlu0 %v2969
        %v2971 = vpop.xlane.xlu0 %2970
        %v2972 = vsel %vm1368, %v2780, 0.0
        %2973 = vadd.xlane.f32.xlu0 %v2972
        %v2974 = vpop.xlane.xlu0 %2973
        %v2975 = vsel %vm1368, %v2782, 0.0
        %2976 = vadd.xlane.f32.xlu0 %v2975
        %v2977 = vpop.xlane.xlu0 %2976
        %v2978 = vsel %vm1368, %v2784, 0.0
        %2979 = vadd.xlane.f32.xlu0 %v2978
        %v2980 = vpop.xlane.xlu0 %2979
        %v2981 = vsel %vm1368, %v2786, 0.0
        %2982 = vadd.xlane.f32.xlu0 %v2981
        %v2983 = vpop.xlane.xlu0 %2982
        %v2984 = vsel %vm1368, %v2788, 0.0
        %2985 = vadd.xlane.f32.xlu0 %v2984
        %v2986 = vpop.xlane.xlu0 %2985
        %v2987 = vsel %vm1368, %v2790, 0.0
        %2988 = vadd.xlane.f32.xlu0 %v2987
        %v2989 = vpop.xlane.xlu0 %2988
        %v2990 = vsel %vm1368, %v2792, 0.0
        %2991 = vadd.xlane.f32.xlu0 %v2990
        %v2992 = vpop.xlane.xlu0 %2991
        %v2993 = vsel %vm1368, %v2794, 0.0
        %2994 = vadd.xlane.f32.xlu0 %v2993
        %v2995 = vpop.xlane.xlu0 %2994
        %v2996 = vsel %vm1368, %v2796, 0.0
        %2997 = vadd.xlane.f32.xlu0 %v2996
        %v2998 = vpop.xlane.xlu0 %2997
        %v2999 = vsel %vm1368, %v2798, 0.0
        %3000 = vadd.xlane.f32.xlu0 %v2999
        %v3001 = vpop.xlane.xlu0 %3000
        %v3002 = vsel %vm1368, %v2800, 0.0
        %3003 = vadd.xlane.f32.xlu0 %v3002
        %v3004 = vpop.xlane.xlu0 %3003
        %v3005 = vsel %vm1368, %v2802, 0.0
        %3006 = vadd.xlane.f32.xlu0 %v3005
        %v3007 = vpop.xlane.xlu0 %3006
        %v3008 = vsel %vm1368, %v2804, 0.0
        %3009 = vadd.xlane.f32.xlu0 %v3008
        %v3010 = vpop.xlane.xlu0 %3009
        %v3011 = vsel %vm1368, %v2806, 0.0
        %3012 = vadd.xlane.f32.xlu0 %v3011
        %v3013 = vpop.xlane.xlu0 %3012
        %v3014 = vsel %vm1368, %v2808, 0.0
        %3015 = vadd.xlane.f32.xlu0 %v3014
        %v3016 = vpop.xlane.xlu0 %3015
        %v3017 = vsel %vm1368, %v2810, 0.0
        %3018 = vadd.xlane.f32.xlu0 %v3017
        %v3019 = vpop.xlane.xlu0 %3018
        %v3020 = vsel %vm1368, %v2812, 0.0
        %3021 = vadd.xlane.f32.xlu0 %v3020
        %v3022 = vpop.xlane.xlu0 %3021
        %v3023 = vsel %vm1368, %v2814, 0.0
        %3024 = vadd.xlane.f32.xlu0 %v3023
        %v3025 = vpop.xlane.xlu0 %3024
        %v3026 = vsel %vm1368, %v2816, 0.0
        %3027 = vadd.xlane.f32.xlu0 %v3026
        %v3028 = vpop.xlane.xlu0 %3027
        %v3029 = vsel %vm1368, %v2818, 0.0
        %3030 = vadd.xlane.f32.xlu0 %v3029
        %v3031 = vpop.xlane.xlu0 %3030
        %v3032 = vsel %vm1368, %v2820, 0.0
        %3033 = vadd.xlane.f32.xlu0 %v3032
        %v3034 = vpop.xlane.xlu0 %3033
        %v3035 = vsel %vm1368, %v2822, 0.0
        %3036 = vadd.xlane.f32.xlu0 %v3035
        %v3037 = vpop.xlane.xlu0 %3036
        %v3038 = vsel %vm1368, %v2824, 0.0
        %3039 = vadd.xlane.f32.xlu0 %v3038
        %v3040 = vpop.xlane.xlu0 %3039
        %v3041 = vsel %vm1368, %v2826, 0.0
        %3042 = vadd.xlane.f32.xlu0 %v3041
        %v3043 = vpop.xlane.xlu0 %3042
        %v3044 = vsel %vm1368, %v2828, 0.0
        %3045 = vadd.xlane.f32.xlu0 %v3044
        %v3046 = vpop.xlane.xlu0 %3045
        %v3047 = vsel %vm1368, %v2830, 0.0
        %3048 = vadd.xlane.f32.xlu0 %v3047
        %v3049 = vpop.xlane.xlu0 %3048
        %v3050 = vsel %vm1368, %v2832, 0.0
        %3051 = vadd.xlane.f32.xlu0 %v3050
        %v3052 = vpop.xlane.xlu0 %3051
        %v3053 = vsel %vm1368, %v2834, 0.0
        %3054 = vadd.xlane.f32.xlu0 %v3053
        %v3055 = vpop.xlane.xlu0 %3054
        %v3056 = vsel %vm1368, %v2836, 0.0
        %3057 = vadd.xlane.f32.xlu0 %v3056
        %v3058 = vpop.xlane.xlu0 %3057
        %v3059 = vsel %vm1368, %v2838, 0.0
        %3060 = vadd.xlane.f32.xlu0 %v3059
        %v3061 = vpop.xlane.xlu0 %3060
        %v3062 = vsel %vm1368, %v2840, 0.0
        %3063 = vadd.xlane.f32.xlu0 %v3062
        %v3064 = vpop.xlane.xlu0 %3063
        %v3065 = vsel %vm1368, %v2842, 0.0
        %3066 = vadd.xlane.f32.xlu0 %v3065
        %v3067 = vpop.xlane.xlu0 %3066
        %v3068 = vsel %vm1368, %v2844, 0.0
        %3069 = vadd.xlane.f32.xlu0 %v3068
        %v3070 = vpop.xlane.xlu0 %3069
        %v3071 = vsel %vm1368, %v2846, 0.0
        %3072 = vadd.xlane.f32.xlu0 %v3071
        %v3073 = vpop.xlane.xlu0 %3072
        %v3074 = vsel %vm1368, %v2848, 0.0
        %3075 = vadd.xlane.f32.xlu0 %v3074
        %v3076 = vpop.xlane.xlu0 %3075
        %v3077 = vsel %vm1368, %v2850, 0.0
        %3078 = vadd.xlane.f32.xlu0 %v3077
        %v3079 = vpop.xlane.xlu0 %3078
        %v3080 = vsel %vm1368, %v2852, 0.0
        %3081 = vadd.xlane.f32.xlu0 %v3080
        %v3082 = vpop.xlane.xlu0 %3081
        %v3083 = vsel %vm1368, %v2854, 0.0
        %3084 = vadd.xlane.f32.xlu0 %v3083
        %v3085 = vpop.xlane.xlu0 %3084
        %v3086 = vsel %vm1368, %v2856, 0.0
        %3087 = vadd.xlane.f32.xlu0 %v3086
        %v3088 = vpop.xlane.xlu0 %3087
        %v3089 = vsel %vm1368, %v2858, 0.0
        %3090 = vadd.xlane.f32.xlu0 %v3089
        %v3091 = vpop.xlane.xlu0 %3090
        %v3092 = vsel %vm1368, %v2860, 0.0
        %3093 = vadd.xlane.f32.xlu0 %v3092
        %v3094 = vpop.xlane.xlu0 %3093
        %v3095 = vsel %vm1368, %v2862, 0.0
        %3096 = vadd.xlane.f32.xlu0 %v3095
        %v3097 = vpop.xlane.xlu0 %3096
        %v3098 = vsel %vm1368, %v2864, 0.0
        %3099 = vadd.xlane.f32.xlu0 %v3098
        %v3100 = vpop.xlane.xlu0 %3099
        %v3101 = vsel %vm1368, %v2866, 0.0
        %3102 = vadd.xlane.f32.xlu0 %v3101
        %v3103 = vpop.xlane.xlu0 %3102
        %v3104 = vsel %vm1368, %v2868, 0.0
        %3105 = vadd.xlane.f32.xlu0 %v3104
        %v3106 = vpop.xlane.xlu0 %3105
        %v3107 = vsel %vm1368, %v2870, 0.0
        %3108 = vadd.xlane.f32.xlu0 %v3107
        %v3109 = vpop.xlane.xlu0 %3108
        %v3110 = vsel %vm1368, %v2872, 0.0
        %3111 = vadd.xlane.f32.xlu0 %v3110
        %v3112 = vpop.xlane.xlu0 %3111
        %v3113 = vsel %vm1368, %v2874, 0.0
        %3114 = vadd.xlane.f32.xlu0 %v3113
        %v3115 = vpop.xlane.xlu0 %3114
        %v3116 = vsel %vm1368, %v2876, 0.0
        %3117 = vadd.xlane.f32.xlu0 %v3116
        %v3118 = vpop.xlane.xlu0 %3117
        %v3119 = vsel %vm1368, %v2878, 0.0
        %3120 = vadd.xlane.f32.xlu0 %v3119
        %v3121 = vpop.xlane.xlu0 %3120
        %v3122 = vsel %vm1368, %v2880, 0.0
        %3123 = vadd.xlane.f32.xlu0 %v3122
        %v3124 = vpop.xlane.xlu0 %3123
        %v3125 = vsel %vm1368, %v2882, 0.0
        %3126 = vadd.xlane.f32.xlu0 %v3125
        %v3127 = vpop.xlane.xlu0 %3126
        %v3128 = vsel %vm1368, %v2884, 0.0
        %3129 = vadd.xlane.f32.xlu0 %v3128
        %v3130 = vpop.xlane.xlu0 %3129
        %v3131 = vsel %vm1368, %v2886, 0.0
        %3132 = vadd.xlane.f32.xlu0 %v3131
        %v3133 = vpop.xlane.xlu0 %3132
        %v3134 = vsel %vm1368, %v2888, 0.0
        %3135 = vadd.xlane.f32.xlu0 %v3134
        %v3136 = vpop.xlane.xlu0 %3135
        %v3137 = vsel %vm1368, %v2890, 0.0
        %3138 = vadd.xlane.f32.xlu0 %v3137
        %v3139 = vpop.xlane.xlu0 %3138
        %v3140 = vsel %vm1368, %v2892, 0.0
        %3141 = vadd.xlane.f32.xlu0 %v3140
        %v3142 = vpop.xlane.xlu0 %3141
        %v3143 = vsel %vm1368, %v2894, 0.0
        %3144 = vadd.xlane.f32.xlu0 %v3143
        %v3145 = vpop.xlane.xlu0 %3144
        %v3146 = vsel %vm1368, %v2896, 0.0
        %3147 = vadd.xlane.f32.xlu0 %v3146
        %v3148 = vpop.xlane.xlu0 %3147
        %v3149 = vsel %vm1368, %v2898, 0.0
        %3150 = vadd.xlane.f32.xlu0 %v3149
        %v3151 = vpop.xlane.xlu0 %3150
        %v3152 = vsel %vm1368, %v2900, 0.0
        %3153 = vadd.xlane.f32.xlu0 %v3152
        %v3154 = vpop.xlane.xlu0 %3153
        %v3155 = vsel %vm1368, %v2902, 0.0
        %3156 = vadd.xlane.f32.xlu0 %v3155
        %v3157 = vpop.xlane.xlu0 %3156
        %v3158 = vsel %vm1368, %v2904, 0.0
        %3159 = vadd.xlane.f32.xlu0 %v3158
        %v3160 = vpop.xlane.xlu0 %3159
        %3161 = vrot.lane.b32.xlu0 %v1304, 48
        %v3162 = vpop.permute.xlu0 %3161
        %3163 = vrot.lane.b32.xlu0 %v1305, 48
        %v3164 = vpop.permute.xlu0 %3163
        %3165 = vrot.lane.b32.xlu0 %v1306, 48
        %v3166 = vpop.permute.xlu0 %3165
        %3167 = vrot.lane.b32.xlu0 %v1307, 48
        %v3168 = vpop.permute.xlu0 %3167
        %3169 = vrot.lane.b32.xlu0 %v1308, 48
        %v3170 = vpop.permute.xlu0 %3169
        %3171 = vrot.lane.b32.xlu0 %v1309, 48
        %v3172 = vpop.permute.xlu0 %3171
        %3173 = vrot.lane.b32.xlu0 %v1310, 48
        %v3174 = vpop.permute.xlu0 %3173
        %3175 = vrot.lane.b32.xlu0 %v1311, 48
        %v3176 = vpop.permute.xlu0 %3175
        %3177 = vrot.lane.b32.xlu0 %v1312, 48
        %v3178 = vpop.permute.xlu0 %3177
        %3179 = vrot.lane.b32.xlu0 %v1313, 48
        %v3180 = vpop.permute.xlu0 %3179
        %3181 = vrot.lane.b32.xlu0 %v1314, 48
        %v3182 = vpop.permute.xlu0 %3181
        %3183 = vrot.lane.b32.xlu0 %v1315, 48
        %v3184 = vpop.permute.xlu0 %3183
        %3185 = vrot.lane.b32.xlu0 %v1316, 48
        %v3186 = vpop.permute.xlu0 %3185
        %3187 = vrot.lane.b32.xlu0 %v1317, 48
        %v3188 = vpop.permute.xlu0 %3187
        %3189 = vrot.lane.b32.xlu0 %v1318, 48
        %v3190 = vpop.permute.xlu0 %3189
        %3191 = vrot.lane.b32.xlu0 %v1319, 48
        %v3192 = vpop.permute.xlu0 %3191
        %3193 = vrot.lane.b32.xlu0 %v1320, 48
        %v3194 = vpop.permute.xlu0 %3193
        %3195 = vrot.lane.b32.xlu0 %v1321, 48
        %v3196 = vpop.permute.xlu0 %3195
        %3197 = vrot.lane.b32.xlu0 %v1322, 48
        %v3198 = vpop.permute.xlu0 %3197
        %3199 = vrot.lane.b32.xlu0 %v1323, 48
        %v3200 = vpop.permute.xlu0 %3199
        %3201 = vrot.lane.b32.xlu0 %v1324, 48
        %v3202 = vpop.permute.xlu0 %3201
        %3203 = vrot.lane.b32.xlu0 %v1325, 48
        %v3204 = vpop.permute.xlu0 %3203
        %3205 = vrot.lane.b32.xlu0 %v1326, 48
        %v3206 = vpop.permute.xlu0 %3205
        %3207 = vrot.lane.b32.xlu0 %v1327, 48
        %v3208 = vpop.permute.xlu0 %3207
        %3209 = vrot.lane.b32.xlu0 %v1328, 48
        %v3210 = vpop.permute.xlu0 %3209
        %3211 = vrot.lane.b32.xlu0 %v1329, 48
        %v3212 = vpop.permute.xlu0 %3211
        %3213 = vrot.lane.b32.xlu0 %v1330, 48
        %v3214 = vpop.permute.xlu0 %3213
        %3215 = vrot.lane.b32.xlu0 %v1331, 48
        %v3216 = vpop.permute.xlu0 %3215
        %3217 = vrot.lane.b32.xlu0 %v1332, 48
        %v3218 = vpop.permute.xlu0 %3217
        %3219 = vrot.lane.b32.xlu0 %v1333, 48
        %v3220 = vpop.permute.xlu0 %3219
        %3221 = vrot.lane.b32.xlu0 %v1334, 48
        %v3222 = vpop.permute.xlu0 %3221
        %3223 = vrot.lane.b32.xlu0 %v1335, 48
        %v3224 = vpop.permute.xlu0 %3223
        %3225 = vrot.lane.b32.xlu0 %v1336, 48
        %v3226 = vpop.permute.xlu0 %3225
        %3227 = vrot.lane.b32.xlu0 %v1337, 48
        %v3228 = vpop.permute.xlu0 %3227
        %3229 = vrot.lane.b32.xlu0 %v1338, 48
        %v3230 = vpop.permute.xlu0 %3229
        %3231 = vrot.lane.b32.xlu0 %v1339, 48
        %v3232 = vpop.permute.xlu0 %3231
        %3233 = vrot.lane.b32.xlu0 %v1340, 48
        %v3234 = vpop.permute.xlu0 %3233
        %3235 = vrot.lane.b32.xlu0 %v1341, 48
        %v3236 = vpop.permute.xlu0 %3235
        %3237 = vrot.lane.b32.xlu0 %v1342, 48
        %v3238 = vpop.permute.xlu0 %3237
        %3239 = vrot.lane.b32.xlu0 %v1343, 48
        %v3240 = vpop.permute.xlu0 %3239
        %3241 = vrot.lane.b32.xlu0 %v1344, 48
        %v3242 = vpop.permute.xlu0 %3241
        %3243 = vrot.lane.b32.xlu0 %v1345, 48
        %v3244 = vpop.permute.xlu0 %3243
        %3245 = vrot.lane.b32.xlu0 %v1346, 48
        %v3246 = vpop.permute.xlu0 %3245
        %3247 = vrot.lane.b32.xlu0 %v1347, 48
        %v3248 = vpop.permute.xlu0 %3247
        %3249 = vrot.lane.b32.xlu0 %v1348, 48
        %v3250 = vpop.permute.xlu0 %3249
        %3251 = vrot.lane.b32.xlu0 %v1349, 48
        %v3252 = vpop.permute.xlu0 %3251
        %3253 = vrot.lane.b32.xlu0 %v1350, 48
        %v3254 = vpop.permute.xlu0 %3253
        %3255 = vrot.lane.b32.xlu0 %v1351, 48
        %v3256 = vpop.permute.xlu0 %3255
        %3257 = vrot.lane.b32.xlu0 %v1352, 48
        %v3258 = vpop.permute.xlu0 %3257
        %3259 = vrot.lane.b32.xlu0 %v1353, 48
        %v3260 = vpop.permute.xlu0 %3259
        %3261 = vrot.lane.b32.xlu0 %v1354, 48
        %v3262 = vpop.permute.xlu0 %3261
        %3263 = vrot.lane.b32.xlu0 %v1355, 48
        %v3264 = vpop.permute.xlu0 %3263
        %3265 = vrot.lane.b32.xlu0 %v1356, 48
        %v3266 = vpop.permute.xlu0 %3265
        %3267 = vrot.lane.b32.xlu0 %v1357, 48
        %v3268 = vpop.permute.xlu0 %3267
        %3269 = vrot.lane.b32.xlu0 %v1358, 48
        %v3270 = vpop.permute.xlu0 %3269
        %3271 = vrot.lane.b32.xlu0 %v1359, 48
        %v3272 = vpop.permute.xlu0 %3271
        %3273 = vrot.lane.b32.xlu0 %v1360, 48
        %v3274 = vpop.permute.xlu0 %3273
        %3275 = vrot.lane.b32.xlu0 %v1361, 48
        %v3276 = vpop.permute.xlu0 %3275
        %3277 = vrot.lane.b32.xlu0 %v1362, 48
        %v3278 = vpop.permute.xlu0 %3277
        %3279 = vrot.lane.b32.xlu0 %v1363, 48
        %v3280 = vpop.permute.xlu0 %3279
        %3281 = vrot.lane.b32.xlu0 %v1364, 48
        %v3282 = vpop.permute.xlu0 %3281
        %3283 = vrot.lane.b32.xlu0 %v1365, 48
        %v3284 = vpop.permute.xlu0 %3283
        %3285 = vrot.lane.b32.xlu0 %v1366, 48
        %v3286 = vpop.permute.xlu0 %3285
        %3287 = vrot.lane.b32.xlu0 %v1367, 48
        %v3288 = vpop.permute.xlu0 %3287
        %v3353 = vsel %vm1368, %v3162, 0.0
        %3354 = vadd.xlane.f32.xlu0 %v3353
        %v3355 = vpop.xlane.xlu0 %3354
        %v3356 = vsel %vm1368, %v3164, 0.0
        %3357 = vadd.xlane.f32.xlu0 %v3356
        %v3358 = vpop.xlane.xlu0 %3357
        %v3359 = vsel %vm1368, %v3166, 0.0
        %3360 = vadd.xlane.f32.xlu0 %v3359
        %v3361 = vpop.xlane.xlu0 %3360
        %v3362 = vsel %vm1368, %v3168, 0.0
        %3363 = vadd.xlane.f32.xlu0 %v3362
        %v3364 = vpop.xlane.xlu0 %3363
        %v3365 = vsel %vm1368, %v3170, 0.0
        %3366 = vadd.xlane.f32.xlu0 %v3365
        %v3367 = vpop.xlane.xlu0 %3366
        %v3368 = vsel %vm1368, %v3172, 0.0
        %3369 = vadd.xlane.f32.xlu0 %v3368
        %v3370 = vpop.xlane.xlu0 %3369
        %v3371 = vsel %vm1368, %v3174, 0.0
        %3372 = vadd.xlane.f32.xlu0 %v3371
        %v3373 = vpop.xlane.xlu0 %3372
        %v3374 = vsel %vm1368, %v3176, 0.0
        %3375 = vadd.xlane.f32.xlu0 %v3374
        %v3376 = vpop.xlane.xlu0 %3375
        %v3377 = vsel %vm1368, %v3178, 0.0
        %3378 = vadd.xlane.f32.xlu0 %v3377
        %v3379 = vpop.xlane.xlu0 %3378
        %v3380 = vsel %vm1368, %v3180, 0.0
        %3381 = vadd.xlane.f32.xlu0 %v3380
        %v3382 = vpop.xlane.xlu0 %3381
        %v3383 = vsel %vm1368, %v3182, 0.0
        %3384 = vadd.xlane.f32.xlu0 %v3383
        %v3385 = vpop.xlane.xlu0 %3384
        %v3386 = vsel %vm1368, %v3184, 0.0
        %3387 = vadd.xlane.f32.xlu0 %v3386
        %v3388 = vpop.xlane.xlu0 %3387
        %v3389 = vsel %vm1368, %v3186, 0.0
        %3390 = vadd.xlane.f32.xlu0 %v3389
        %v3391 = vpop.xlane.xlu0 %3390
        %v3392 = vsel %vm1368, %v3188, 0.0
        %3393 = vadd.xlane.f32.xlu0 %v3392
        %v3394 = vpop.xlane.xlu0 %3393
        %v3395 = vsel %vm1368, %v3190, 0.0
        %3396 = vadd.xlane.f32.xlu0 %v3395
        %v3397 = vpop.xlane.xlu0 %3396
        %v3398 = vsel %vm1368, %v3192, 0.0
        %3399 = vadd.xlane.f32.xlu0 %v3398
        %v3400 = vpop.xlane.xlu0 %3399
        %v3401 = vsel %vm1368, %v3194, 0.0
        %3402 = vadd.xlane.f32.xlu0 %v3401
        %v3403 = vpop.xlane.xlu0 %3402
        %v3404 = vsel %vm1368, %v3196, 0.0
        %3405 = vadd.xlane.f32.xlu0 %v3404
        %v3406 = vpop.xlane.xlu0 %3405
        %v3407 = vsel %vm1368, %v3198, 0.0
        %3408 = vadd.xlane.f32.xlu0 %v3407
        %v3409 = vpop.xlane.xlu0 %3408
        %v3410 = vsel %vm1368, %v3200, 0.0
        %3411 = vadd.xlane.f32.xlu0 %v3410
        %v3412 = vpop.xlane.xlu0 %3411
        %v3413 = vsel %vm1368, %v3202, 0.0
        %3414 = vadd.xlane.f32.xlu0 %v3413
        %v3415 = vpop.xlane.xlu0 %3414
        %v3416 = vsel %vm1368, %v3204, 0.0
        %3417 = vadd.xlane.f32.xlu0 %v3416
        %v3418 = vpop.xlane.xlu0 %3417
        %v3419 = vsel %vm1368, %v3206, 0.0
        %3420 = vadd.xlane.f32.xlu0 %v3419
        %v3421 = vpop.xlane.xlu0 %3420
        %v3422 = vsel %vm1368, %v3208, 0.0
        %3423 = vadd.xlane.f32.xlu0 %v3422
        %v3424 = vpop.xlane.xlu0 %3423
        %v3425 = vsel %vm1368, %v3210, 0.0
        %3426 = vadd.xlane.f32.xlu0 %v3425
        %v3427 = vpop.xlane.xlu0 %3426
        %v3428 = vsel %vm1368, %v3212, 0.0
        %3429 = vadd.xlane.f32.xlu0 %v3428
        %v3430 = vpop.xlane.xlu0 %3429
        %v3431 = vsel %vm1368, %v3214, 0.0
        %3432 = vadd.xlane.f32.xlu0 %v3431
        %v3433 = vpop.xlane.xlu0 %3432
        %v3434 = vsel %vm1368, %v3216, 0.0
        %3435 = vadd.xlane.f32.xlu0 %v3434
        %v3436 = vpop.xlane.xlu0 %3435
        %v3437 = vsel %vm1368, %v3218, 0.0
        %3438 = vadd.xlane.f32.xlu0 %v3437
        %v3439 = vpop.xlane.xlu0 %3438
        %v3440 = vsel %vm1368, %v3220, 0.0
        %3441 = vadd.xlane.f32.xlu0 %v3440
        %v3442 = vpop.xlane.xlu0 %3441
        %v3443 = vsel %vm1368, %v3222, 0.0
        %3444 = vadd.xlane.f32.xlu0 %v3443
        %v3445 = vpop.xlane.xlu0 %3444
        %v3446 = vsel %vm1368, %v3224, 0.0
        %3447 = vadd.xlane.f32.xlu0 %v3446
        %v3448 = vpop.xlane.xlu0 %3447
        %v3449 = vsel %vm1368, %v3226, 0.0
        %3450 = vadd.xlane.f32.xlu0 %v3449
        %v3451 = vpop.xlane.xlu0 %3450
        %v3452 = vsel %vm1368, %v3228, 0.0
        %3453 = vadd.xlane.f32.xlu0 %v3452
        %v3454 = vpop.xlane.xlu0 %3453
        %v3455 = vsel %vm1368, %v3230, 0.0
        %3456 = vadd.xlane.f32.xlu0 %v3455
        %v3457 = vpop.xlane.xlu0 %3456
        %v3458 = vsel %vm1368, %v3232, 0.0
        %3459 = vadd.xlane.f32.xlu0 %v3458
        %v3460 = vpop.xlane.xlu0 %3459
        %v3461 = vsel %vm1368, %v3234, 0.0
        %3462 = vadd.xlane.f32.xlu0 %v3461
        %v3463 = vpop.xlane.xlu0 %3462
        %v3464 = vsel %vm1368, %v3236, 0.0
        %3465 = vadd.xlane.f32.xlu0 %v3464
        %v3466 = vpop.xlane.xlu0 %3465
        %v3467 = vsel %vm1368, %v3238, 0.0
        %3468 = vadd.xlane.f32.xlu0 %v3467
        %v3469 = vpop.xlane.xlu0 %3468
        %v3470 = vsel %vm1368, %v3240, 0.0
        %3471 = vadd.xlane.f32.xlu0 %v3470
        %v3472 = vpop.xlane.xlu0 %3471
        %v3473 = vsel %vm1368, %v3242, 0.0
        %3474 = vadd.xlane.f32.xlu0 %v3473
        %v3475 = vpop.xlane.xlu0 %3474
        %v3476 = vsel %vm1368, %v3244, 0.0
        %3477 = vadd.xlane.f32.xlu0 %v3476
        %v3478 = vpop.xlane.xlu0 %3477
        %v3479 = vsel %vm1368, %v3246, 0.0
        %3480 = vadd.xlane.f32.xlu0 %v3479
        %v3481 = vpop.xlane.xlu0 %3480
        %v3482 = vsel %vm1368, %v3248, 0.0
        %3483 = vadd.xlane.f32.xlu0 %v3482
        %v3484 = vpop.xlane.xlu0 %3483
        %v3485 = vsel %vm1368, %v3250, 0.0
        %3486 = vadd.xlane.f32.xlu0 %v3485
        %v3487 = vpop.xlane.xlu0 %3486
        %v3488 = vsel %vm1368, %v3252, 0.0
        %3489 = vadd.xlane.f32.xlu0 %v3488
        %v3490 = vpop.xlane.xlu0 %3489
        %v3491 = vsel %vm1368, %v3254, 0.0
        %3492 = vadd.xlane.f32.xlu0 %v3491
        %v3493 = vpop.xlane.xlu0 %3492
        %v3494 = vsel %vm1368, %v3256, 0.0
        %3495 = vadd.xlane.f32.xlu0 %v3494
        %v3496 = vpop.xlane.xlu0 %3495
        %v3497 = vsel %vm1368, %v3258, 0.0
        %3498 = vadd.xlane.f32.xlu0 %v3497
        %v3499 = vpop.xlane.xlu0 %3498
        %v3500 = vsel %vm1368, %v3260, 0.0
        %3501 = vadd.xlane.f32.xlu0 %v3500
        %v3502 = vpop.xlane.xlu0 %3501
        %v3503 = vsel %vm1368, %v3262, 0.0
        %3504 = vadd.xlane.f32.xlu0 %v3503
        %v3505 = vpop.xlane.xlu0 %3504
        %v3506 = vsel %vm1368, %v3264, 0.0
        %3507 = vadd.xlane.f32.xlu0 %v3506
        %v3508 = vpop.xlane.xlu0 %3507
        %v3509 = vsel %vm1368, %v3266, 0.0
        %3510 = vadd.xlane.f32.xlu0 %v3509
        %v3511 = vpop.xlane.xlu0 %3510
        %v3512 = vsel %vm1368, %v3268, 0.0
        %3513 = vadd.xlane.f32.xlu0 %v3512
        %v3514 = vpop.xlane.xlu0 %3513
        %v3515 = vsel %vm1368, %v3270, 0.0
        %3516 = vadd.xlane.f32.xlu0 %v3515
        %v3517 = vpop.xlane.xlu0 %3516
        %v3518 = vsel %vm1368, %v3272, 0.0
        %3519 = vadd.xlane.f32.xlu0 %v3518
        %v3520 = vpop.xlane.xlu0 %3519
        %v3521 = vsel %vm1368, %v3274, 0.0
        %3522 = vadd.xlane.f32.xlu0 %v3521
        %v3523 = vpop.xlane.xlu0 %3522
        %v3524 = vsel %vm1368, %v3276, 0.0
        %3525 = vadd.xlane.f32.xlu0 %v3524
        %v3526 = vpop.xlane.xlu0 %3525
        %v3527 = vsel %vm1368, %v3278, 0.0
        %3528 = vadd.xlane.f32.xlu0 %v3527
        %v3529 = vpop.xlane.xlu0 %3528
        %v3530 = vsel %vm1368, %v3280, 0.0
        %3531 = vadd.xlane.f32.xlu0 %v3530
        %v3532 = vpop.xlane.xlu0 %3531
        %v3533 = vsel %vm1368, %v3282, 0.0
        %3534 = vadd.xlane.f32.xlu0 %v3533
        %v3535 = vpop.xlane.xlu0 %3534
        %v3536 = vsel %vm1368, %v3284, 0.0
        %3537 = vadd.xlane.f32.xlu0 %v3536
        %v3538 = vpop.xlane.xlu0 %3537
        %v3539 = vsel %vm1368, %v3286, 0.0
        %3540 = vadd.xlane.f32.xlu0 %v3539
        %v3541 = vpop.xlane.xlu0 %3540
        %v3542 = vsel %vm1368, %v3288, 0.0
        %3543 = vadd.xlane.f32.xlu0 %v3542
        %v3544 = vpop.xlane.xlu0 %3543
        %3545 = vrot.lane.b32.xlu0 %v1304, 32
        %v3546 = vpop.permute.xlu0 %3545
        %3547 = vrot.lane.b32.xlu0 %v1305, 32
        %v3548 = vpop.permute.xlu0 %3547
        %3549 = vrot.lane.b32.xlu0 %v1306, 32
        %v3550 = vpop.permute.xlu0 %3549
        %3551 = vrot.lane.b32.xlu0 %v1307, 32
        %v3552 = vpop.permute.xlu0 %3551
        %3553 = vrot.lane.b32.xlu0 %v1308, 32
        %v3554 = vpop.permute.xlu0 %3553
        %3555 = vrot.lane.b32.xlu0 %v1309, 32
        %v3556 = vpop.permute.xlu0 %3555
        %3557 = vrot.lane.b32.xlu0 %v1310, 32
        %v3558 = vpop.permute.xlu0 %3557
        %3559 = vrot.lane.b32.xlu0 %v1311, 32
        %v3560 = vpop.permute.xlu0 %3559
        %3561 = vrot.lane.b32.xlu0 %v1312, 32
        %v3562 = vpop.permute.xlu0 %3561
        %3563 = vrot.lane.b32.xlu0 %v1313, 32
        %v3564 = vpop.permute.xlu0 %3563
        %3565 = vrot.lane.b32.xlu0 %v1314, 32
        %v3566 = vpop.permute.xlu0 %3565
        %3567 = vrot.lane.b32.xlu0 %v1315, 32
        %v3568 = vpop.permute.xlu0 %3567
        %3569 = vrot.lane.b32.xlu0 %v1316, 32
        %v3570 = vpop.permute.xlu0 %3569
        %3571 = vrot.lane.b32.xlu0 %v1317, 32
        %v3572 = vpop.permute.xlu0 %3571
        %3573 = vrot.lane.b32.xlu0 %v1318, 32
        %v3574 = vpop.permute.xlu0 %3573
        %3575 = vrot.lane.b32.xlu0 %v1319, 32
        %v3576 = vpop.permute.xlu0 %3575
        %3577 = vrot.lane.b32.xlu0 %v1320, 32
        %v3578 = vpop.permute.xlu0 %3577
        %3579 = vrot.lane.b32.xlu0 %v1321, 32
        %v3580 = vpop.permute.xlu0 %3579
        %3581 = vrot.lane.b32.xlu0 %v1322, 32
        %v3582 = vpop.permute.xlu0 %3581
        %3583 = vrot.lane.b32.xlu0 %v1323, 32
        %v3584 = vpop.permute.xlu0 %3583
        %3585 = vrot.lane.b32.xlu0 %v1324, 32
        %v3586 = vpop.permute.xlu0 %3585
        %3587 = vrot.lane.b32.xlu0 %v1325, 32
        %v3588 = vpop.permute.xlu0 %3587
        %3589 = vrot.lane.b32.xlu0 %v1326, 32
        %v3590 = vpop.permute.xlu0 %3589
        %3591 = vrot.lane.b32.xlu0 %v1327, 32
        %v3592 = vpop.permute.xlu0 %3591
        %3593 = vrot.lane.b32.xlu0 %v1328, 32
        %v3594 = vpop.permute.xlu0 %3593
        %3595 = vrot.lane.b32.xlu0 %v1329, 32
        %v3596 = vpop.permute.xlu0 %3595
        %3597 = vrot.lane.b32.xlu0 %v1330, 32
        %v3598 = vpop.permute.xlu0 %3597
        %3599 = vrot.lane.b32.xlu0 %v1331, 32
        %v3600 = vpop.permute.xlu0 %3599
        %3601 = vrot.lane.b32.xlu0 %v1332, 32
        %v3602 = vpop.permute.xlu0 %3601
        %3603 = vrot.lane.b32.xlu0 %v1333, 32
        %v3604 = vpop.permute.xlu0 %3603
        %3605 = vrot.lane.b32.xlu0 %v1334, 32
        %v3606 = vpop.permute.xlu0 %3605
        %3607 = vrot.lane.b32.xlu0 %v1335, 32
        %v3608 = vpop.permute.xlu0 %3607
        %3609 = vrot.lane.b32.xlu0 %v1336, 32
        %v3610 = vpop.permute.xlu0 %3609
        %3611 = vrot.lane.b32.xlu0 %v1337, 32
        %v3612 = vpop.permute.xlu0 %3611
        %3613 = vrot.lane.b32.xlu0 %v1338, 32
        %v3614 = vpop.permute.xlu0 %3613
        %3615 = vrot.lane.b32.xlu0 %v1339, 32
        %v3616 = vpop.permute.xlu0 %3615
        %3617 = vrot.lane.b32.xlu0 %v1340, 32
        %v3618 = vpop.permute.xlu0 %3617
        %3619 = vrot.lane.b32.xlu0 %v1341, 32
        %v3620 = vpop.permute.xlu0 %3619
        %3621 = vrot.lane.b32.xlu0 %v1342, 32
        %v3622 = vpop.permute.xlu0 %3621
        %3623 = vrot.lane.b32.xlu0 %v1343, 32
        %v3624 = vpop.permute.xlu0 %3623
        %3625 = vrot.lane.b32.xlu0 %v1344, 32
        %v3626 = vpop.permute.xlu0 %3625
        %3627 = vrot.lane.b32.xlu0 %v1345, 32
        %v3628 = vpop.permute.xlu0 %3627
        %3629 = vrot.lane.b32.xlu0 %v1346, 32
        %v3630 = vpop.permute.xlu0 %3629
        %3631 = vrot.lane.b32.xlu0 %v1347, 32
        %v3632 = vpop.permute.xlu0 %3631
        %3633 = vrot.lane.b32.xlu0 %v1348, 32
        %v3634 = vpop.permute.xlu0 %3633
        %3635 = vrot.lane.b32.xlu0 %v1349, 32
        %v3636 = vpop.permute.xlu0 %3635
        %3637 = vrot.lane.b32.xlu0 %v1350, 32
        %v3638 = vpop.permute.xlu0 %3637
        %3639 = vrot.lane.b32.xlu0 %v1351, 32
        %v3640 = vpop.permute.xlu0 %3639
        %3641 = vrot.lane.b32.xlu0 %v1352, 32
        %v3642 = vpop.permute.xlu0 %3641
        %3643 = vrot.lane.b32.xlu0 %v1353, 32
        %v3644 = vpop.permute.xlu0 %3643
        %3645 = vrot.lane.b32.xlu0 %v1354, 32
        %v3646 = vpop.permute.xlu0 %3645
        %3647 = vrot.lane.b32.xlu0 %v1355, 32
        %v3648 = vpop.permute.xlu0 %3647
        %3649 = vrot.lane.b32.xlu0 %v1356, 32
        %v3650 = vpop.permute.xlu0 %3649
        %3651 = vrot.lane.b32.xlu0 %v1357, 32
        %v3652 = vpop.permute.xlu0 %3651
        %3653 = vrot.lane.b32.xlu0 %v1358, 32
        %v3654 = vpop.permute.xlu0 %3653
        %3655 = vrot.lane.b32.xlu0 %v1359, 32
        %v3656 = vpop.permute.xlu0 %3655
        %3657 = vrot.lane.b32.xlu0 %v1360, 32
        %v3658 = vpop.permute.xlu0 %3657
        %3659 = vrot.lane.b32.xlu0 %v1361, 32
        %v3660 = vpop.permute.xlu0 %3659
        %3661 = vrot.lane.b32.xlu0 %v1362, 32
        %v3662 = vpop.permute.xlu0 %3661
        %3663 = vrot.lane.b32.xlu0 %v1363, 32
        %v3664 = vpop.permute.xlu0 %3663
        %3665 = vrot.lane.b32.xlu0 %v1364, 32
        %v3666 = vpop.permute.xlu0 %3665
        %3667 = vrot.lane.b32.xlu0 %v1365, 32
        %v3668 = vpop.permute.xlu0 %3667
        %3669 = vrot.lane.b32.xlu0 %v1366, 32
        %v3670 = vpop.permute.xlu0 %3669
        %3671 = vrot.lane.b32.xlu0 %v1367, 32
        %v3672 = vpop.permute.xlu0 %3671
        %v3737 = vsel %vm1368, %v3546, 0.0
        %3738 = vadd.xlane.f32.xlu0 %v3737
        %v3739 = vpop.xlane.xlu0 %3738
        %v3740 = vsel %vm1368, %v3548, 0.0
        %3741 = vadd.xlane.f32.xlu0 %v3740
        %v3742 = vpop.xlane.xlu0 %3741
        %v3743 = vsel %vm1368, %v3550, 0.0
        %3744 = vadd.xlane.f32.xlu0 %v3743
        %v3745 = vpop.xlane.xlu0 %3744
        %v3746 = vsel %vm1368, %v3552, 0.0
        %3747 = vadd.xlane.f32.xlu0 %v3746
        %v3748 = vpop.xlane.xlu0 %3747
        %v3749 = vsel %vm1368, %v3554, 0.0
        %3750 = vadd.xlane.f32.xlu0 %v3749
        %v3751 = vpop.xlane.xlu0 %3750
        %v3752 = vsel %vm1368, %v3556, 0.0
        %3753 = vadd.xlane.f32.xlu0 %v3752
        %v3754 = vpop.xlane.xlu0 %3753
        %v3755 = vsel %vm1368, %v3558, 0.0
        %3756 = vadd.xlane.f32.xlu0 %v3755
        %v3757 = vpop.xlane.xlu0 %3756
        %v3758 = vsel %vm1368, %v3560, 0.0
        %3759 = vadd.xlane.f32.xlu0 %v3758
        %v3760 = vpop.xlane.xlu0 %3759
        %v3761 = vsel %vm1368, %v3562, 0.0
        %3762 = vadd.xlane.f32.xlu0 %v3761
        %v3763 = vpop.xlane.xlu0 %3762
        %v3764 = vsel %vm1368, %v3564, 0.0
        %3765 = vadd.xlane.f32.xlu0 %v3764
        %v3766 = vpop.xlane.xlu0 %3765
        %v3767 = vsel %vm1368, %v3566, 0.0
        %3768 = vadd.xlane.f32.xlu0 %v3767
        %v3769 = vpop.xlane.xlu0 %3768
        %v3770 = vsel %vm1368, %v3568, 0.0
        %3771 = vadd.xlane.f32.xlu0 %v3770
        %v3772 = vpop.xlane.xlu0 %3771
        %v3773 = vsel %vm1368, %v3570, 0.0
        %3774 = vadd.xlane.f32.xlu0 %v3773
        %v3775 = vpop.xlane.xlu0 %3774
        %v3776 = vsel %vm1368, %v3572, 0.0
        %3777 = vadd.xlane.f32.xlu0 %v3776
        %v3778 = vpop.xlane.xlu0 %3777
        %v3779 = vsel %vm1368, %v3574, 0.0
        %3780 = vadd.xlane.f32.xlu0 %v3779
        %v3781 = vpop.xlane.xlu0 %3780
        %v3782 = vsel %vm1368, %v3576, 0.0
        %3783 = vadd.xlane.f32.xlu0 %v3782
        %v3784 = vpop.xlane.xlu0 %3783
        %v3785 = vsel %vm1368, %v3578, 0.0
        %3786 = vadd.xlane.f32.xlu0 %v3785
        %v3787 = vpop.xlane.xlu0 %3786
        %v3788 = vsel %vm1368, %v3580, 0.0
        %3789 = vadd.xlane.f32.xlu0 %v3788
        %v3790 = vpop.xlane.xlu0 %3789
        %v3791 = vsel %vm1368, %v3582, 0.0
        %3792 = vadd.xlane.f32.xlu0 %v3791
        %v3793 = vpop.xlane.xlu0 %3792
        %v3794 = vsel %vm1368, %v3584, 0.0
        %3795 = vadd.xlane.f32.xlu0 %v3794
        %v3796 = vpop.xlane.xlu0 %3795
        %v3797 = vsel %vm1368, %v3586, 0.0
        %3798 = vadd.xlane.f32.xlu0 %v3797
        %v3799 = vpop.xlane.xlu0 %3798
        %v3800 = vsel %vm1368, %v3588, 0.0
        %3801 = vadd.xlane.f32.xlu0 %v3800
        %v3802 = vpop.xlane.xlu0 %3801
        %v3803 = vsel %vm1368, %v3590, 0.0
        %3804 = vadd.xlane.f32.xlu0 %v3803
        %v3805 = vpop.xlane.xlu0 %3804
        %v3806 = vsel %vm1368, %v3592, 0.0
        %3807 = vadd.xlane.f32.xlu0 %v3806
        %v3808 = vpop.xlane.xlu0 %3807
        %v3809 = vsel %vm1368, %v3594, 0.0
        %3810 = vadd.xlane.f32.xlu0 %v3809
        %v3811 = vpop.xlane.xlu0 %3810
        %v3812 = vsel %vm1368, %v3596, 0.0
        %3813 = vadd.xlane.f32.xlu0 %v3812
        %v3814 = vpop.xlane.xlu0 %3813
        %v3815 = vsel %vm1368, %v3598, 0.0
        %3816 = vadd.xlane.f32.xlu0 %v3815
        %v3817 = vpop.xlane.xlu0 %3816
        %v3818 = vsel %vm1368, %v3600, 0.0
        %3819 = vadd.xlane.f32.xlu0 %v3818
        %v3820 = vpop.xlane.xlu0 %3819
        %v3821 = vsel %vm1368, %v3602, 0.0
        %3822 = vadd.xlane.f32.xlu0 %v3821
        %v3823 = vpop.xlane.xlu0 %3822
        %v3824 = vsel %vm1368, %v3604, 0.0
        %3825 = vadd.xlane.f32.xlu0 %v3824
        %v3826 = vpop.xlane.xlu0 %3825
        %v3827 = vsel %vm1368, %v3606, 0.0
        %3828 = vadd.xlane.f32.xlu0 %v3827
        %v3829 = vpop.xlane.xlu0 %3828
        %v3830 = vsel %vm1368, %v3608, 0.0
        %3831 = vadd.xlane.f32.xlu0 %v3830
        %v3832 = vpop.xlane.xlu0 %3831
        %v3833 = vsel %vm1368, %v3610, 0.0
        %3834 = vadd.xlane.f32.xlu0 %v3833
        %v3835 = vpop.xlane.xlu0 %3834
        %v3836 = vsel %vm1368, %v3612, 0.0
        %3837 = vadd.xlane.f32.xlu0 %v3836
        %v3838 = vpop.xlane.xlu0 %3837
        %v3839 = vsel %vm1368, %v3614, 0.0
        %3840 = vadd.xlane.f32.xlu0 %v3839
        %v3841 = vpop.xlane.xlu0 %3840
        %v3842 = vsel %vm1368, %v3616, 0.0
        %3843 = vadd.xlane.f32.xlu0 %v3842
        %v3844 = vpop.xlane.xlu0 %3843
        %v3845 = vsel %vm1368, %v3618, 0.0
        %3846 = vadd.xlane.f32.xlu0 %v3845
        %v3847 = vpop.xlane.xlu0 %3846
        %v3848 = vsel %vm1368, %v3620, 0.0
        %3849 = vadd.xlane.f32.xlu0 %v3848
        %v3850 = vpop.xlane.xlu0 %3849
        %v3851 = vsel %vm1368, %v3622, 0.0
        %3852 = vadd.xlane.f32.xlu0 %v3851
        %v3853 = vpop.xlane.xlu0 %3852
        %v3854 = vsel %vm1368, %v3624, 0.0
        %3855 = vadd.xlane.f32.xlu0 %v3854
        %v3856 = vpop.xlane.xlu0 %3855
        %v3857 = vsel %vm1368, %v3626, 0.0
        %3858 = vadd.xlane.f32.xlu0 %v3857
        %v3859 = vpop.xlane.xlu0 %3858
        %v3860 = vsel %vm1368, %v3628, 0.0
        %3861 = vadd.xlane.f32.xlu0 %v3860
        %v3862 = vpop.xlane.xlu0 %3861
        %v3863 = vsel %vm1368, %v3630, 0.0
        %3864 = vadd.xlane.f32.xlu0 %v3863
        %v3865 = vpop.xlane.xlu0 %3864
        %v3866 = vsel %vm1368, %v3632, 0.0
        %3867 = vadd.xlane.f32.xlu0 %v3866
        %v3868 = vpop.xlane.xlu0 %3867
        %v3869 = vsel %vm1368, %v3634, 0.0
        %3870 = vadd.xlane.f32.xlu0 %v3869
        %v3871 = vpop.xlane.xlu0 %3870
        %v3872 = vsel %vm1368, %v3636, 0.0
        %3873 = vadd.xlane.f32.xlu0 %v3872
        %v3874 = vpop.xlane.xlu0 %3873
        %v3875 = vsel %vm1368, %v3638, 0.0
        %3876 = vadd.xlane.f32.xlu0 %v3875
        %v3877 = vpop.xlane.xlu0 %3876
        %v3878 = vsel %vm1368, %v3640, 0.0
        %3879 = vadd.xlane.f32.xlu0 %v3878
        %v3880 = vpop.xlane.xlu0 %3879
        %v3881 = vsel %vm1368, %v3642, 0.0
        %3882 = vadd.xlane.f32.xlu0 %v3881
        %v3883 = vpop.xlane.xlu0 %3882
        %v3884 = vsel %vm1368, %v3644, 0.0
        %3885 = vadd.xlane.f32.xlu0 %v3884
        %v3886 = vpop.xlane.xlu0 %3885
        %v3887 = vsel %vm1368, %v3646, 0.0
        %3888 = vadd.xlane.f32.xlu0 %v3887
        %v3889 = vpop.xlane.xlu0 %3888
        %v3890 = vsel %vm1368, %v3648, 0.0
        %3891 = vadd.xlane.f32.xlu0 %v3890
        %v3892 = vpop.xlane.xlu0 %3891
        %v3893 = vsel %vm1368, %v3650, 0.0
        %3894 = vadd.xlane.f32.xlu0 %v3893
        %v3895 = vpop.xlane.xlu0 %3894
        %v3896 = vsel %vm1368, %v3652, 0.0
        %3897 = vadd.xlane.f32.xlu0 %v3896
        %v3898 = vpop.xlane.xlu0 %3897
        %v3899 = vsel %vm1368, %v3654, 0.0
        %3900 = vadd.xlane.f32.xlu0 %v3899
        %v3901 = vpop.xlane.xlu0 %3900
        %v3902 = vsel %vm1368, %v3656, 0.0
        %3903 = vadd.xlane.f32.xlu0 %v3902
        %v3904 = vpop.xlane.xlu0 %3903
        %v3905 = vsel %vm1368, %v3658, 0.0
        %3906 = vadd.xlane.f32.xlu0 %v3905
        %v3907 = vpop.xlane.xlu0 %3906
        %v3908 = vsel %vm1368, %v3660, 0.0
        %3909 = vadd.xlane.f32.xlu0 %v3908
        %v3910 = vpop.xlane.xlu0 %3909
        %v3911 = vsel %vm1368, %v3662, 0.0
        %3912 = vadd.xlane.f32.xlu0 %v3911
        %v3913 = vpop.xlane.xlu0 %3912
        %v3914 = vsel %vm1368, %v3664, 0.0
        %3915 = vadd.xlane.f32.xlu0 %v3914
        %v3916 = vpop.xlane.xlu0 %3915
        %v3917 = vsel %vm1368, %v3666, 0.0
        %3918 = vadd.xlane.f32.xlu0 %v3917
        %v3919 = vpop.xlane.xlu0 %3918
        %v3920 = vsel %vm1368, %v3668, 0.0
        %3921 = vadd.xlane.f32.xlu0 %v3920
        %v3922 = vpop.xlane.xlu0 %3921
        %v3923 = vsel %vm1368, %v3670, 0.0
        %3924 = vadd.xlane.f32.xlu0 %v3923
        %v3925 = vpop.xlane.xlu0 %3924
        %v3926 = vsel %vm1368, %v3672, 0.0
        %3927 = vadd.xlane.f32.xlu0 %v3926
        %v3928 = vpop.xlane.xlu0 %3927
        %3929 = vrot.lane.b32.xlu0 %v1304, 16
        %v3930 = vpop.permute.xlu0 %3929
        %3931 = vrot.lane.b32.xlu0 %v1305, 16
        %v3932 = vpop.permute.xlu0 %3931
        %3933 = vrot.lane.b32.xlu0 %v1306, 16
        %v3934 = vpop.permute.xlu0 %3933
        %3935 = vrot.lane.b32.xlu0 %v1307, 16
        %v3936 = vpop.permute.xlu0 %3935
        %3937 = vrot.lane.b32.xlu0 %v1308, 16
        %v3938 = vpop.permute.xlu0 %3937
        %3939 = vrot.lane.b32.xlu0 %v1309, 16
        %v3940 = vpop.permute.xlu0 %3939
        %3941 = vrot.lane.b32.xlu0 %v1310, 16
        %v3942 = vpop.permute.xlu0 %3941
        %3943 = vrot.lane.b32.xlu0 %v1311, 16
        %v3944 = vpop.permute.xlu0 %3943
        %3945 = vrot.lane.b32.xlu0 %v1312, 16
        %v3946 = vpop.permute.xlu0 %3945
        %3947 = vrot.lane.b32.xlu0 %v1313, 16
        %v3948 = vpop.permute.xlu0 %3947
        %3949 = vrot.lane.b32.xlu0 %v1314, 16
        %v3950 = vpop.permute.xlu0 %3949
        %3951 = vrot.lane.b32.xlu0 %v1315, 16
        %v3952 = vpop.permute.xlu0 %3951
        %3953 = vrot.lane.b32.xlu0 %v1316, 16
        %v3954 = vpop.permute.xlu0 %3953
        %3955 = vrot.lane.b32.xlu0 %v1317, 16
        %v3956 = vpop.permute.xlu0 %3955
        %3957 = vrot.lane.b32.xlu0 %v1318, 16
        %v3958 = vpop.permute.xlu0 %3957
        %3959 = vrot.lane.b32.xlu0 %v1319, 16
        %v3960 = vpop.permute.xlu0 %3959
        %3961 = vrot.lane.b32.xlu0 %v1320, 16
        %v3962 = vpop.permute.xlu0 %3961
        %3963 = vrot.lane.b32.xlu0 %v1321, 16
        %v3964 = vpop.permute.xlu0 %3963
        %3965 = vrot.lane.b32.xlu0 %v1322, 16
        %v3966 = vpop.permute.xlu0 %3965
        %3967 = vrot.lane.b32.xlu0 %v1323, 16
        %v3968 = vpop.permute.xlu0 %3967
        %3969 = vrot.lane.b32.xlu0 %v1324, 16
        %v3970 = vpop.permute.xlu0 %3969
        %3971 = vrot.lane.b32.xlu0 %v1325, 16
        %v3972 = vpop.permute.xlu0 %3971
        %3973 = vrot.lane.b32.xlu0 %v1326, 16
        %v3974 = vpop.permute.xlu0 %3973
        %3975 = vrot.lane.b32.xlu0 %v1327, 16
        %v3976 = vpop.permute.xlu0 %3975
        %3977 = vrot.lane.b32.xlu0 %v1328, 16
        %v3978 = vpop.permute.xlu0 %3977
        %3979 = vrot.lane.b32.xlu0 %v1329, 16
        %v3980 = vpop.permute.xlu0 %3979
        %3981 = vrot.lane.b32.xlu0 %v1330, 16
        %v3982 = vpop.permute.xlu0 %3981
        %3983 = vrot.lane.b32.xlu0 %v1331, 16
        %v3984 = vpop.permute.xlu0 %3983
        %3985 = vrot.lane.b32.xlu0 %v1332, 16
        %v3986 = vpop.permute.xlu0 %3985
        %3987 = vrot.lane.b32.xlu0 %v1333, 16
        %v3988 = vpop.permute.xlu0 %3987
        %3989 = vrot.lane.b32.xlu0 %v1334, 16
        %v3990 = vpop.permute.xlu0 %3989
        %3991 = vrot.lane.b32.xlu0 %v1335, 16
        %v3992 = vpop.permute.xlu0 %3991
        %3993 = vrot.lane.b32.xlu0 %v1336, 16
        %v3994 = vpop.permute.xlu0 %3993
        %3995 = vrot.lane.b32.xlu0 %v1337, 16
        %v3996 = vpop.permute.xlu0 %3995
        %3997 = vrot.lane.b32.xlu0 %v1338, 16
        %v3998 = vpop.permute.xlu0 %3997
        %3999 = vrot.lane.b32.xlu0 %v1339, 16
        %v4000 = vpop.permute.xlu0 %3999
        %4001 = vrot.lane.b32.xlu0 %v1340, 16
        %v4002 = vpop.permute.xlu0 %4001
        %4003 = vrot.lane.b32.xlu0 %v1341, 16
        %v4004 = vpop.permute.xlu0 %4003
        %4005 = vrot.lane.b32.xlu0 %v1342, 16
        %v4006 = vpop.permute.xlu0 %4005
        %4007 = vrot.lane.b32.xlu0 %v1343, 16
        %v4008 = vpop.permute.xlu0 %4007
        %4009 = vrot.lane.b32.xlu0 %v1344, 16
        %v4010 = vpop.permute.xlu0 %4009
        %4011 = vrot.lane.b32.xlu0 %v1345, 16
        %v4012 = vpop.permute.xlu0 %4011
        %4013 = vrot.lane.b32.xlu0 %v1346, 16
        %v4014 = vpop.permute.xlu0 %4013
        %4015 = vrot.lane.b32.xlu0 %v1347, 16
        %v4016 = vpop.permute.xlu0 %4015
        %4017 = vrot.lane.b32.xlu0 %v1348, 16
        %v4018 = vpop.permute.xlu0 %4017
        %4019 = vrot.lane.b32.xlu0 %v1349, 16
        %v4020 = vpop.permute.xlu0 %4019
        %4021 = vrot.lane.b32.xlu0 %v1350, 16
        %v4022 = vpop.permute.xlu0 %4021
        %4023 = vrot.lane.b32.xlu0 %v1351, 16
        %v4024 = vpop.permute.xlu0 %4023
        %4025 = vrot.lane.b32.xlu0 %v1352, 16
        %v4026 = vpop.permute.xlu0 %4025
        %4027 = vrot.lane.b32.xlu0 %v1353, 16
        %v4028 = vpop.permute.xlu0 %4027
        %4029 = vrot.lane.b32.xlu0 %v1354, 16
        %v4030 = vpop.permute.xlu0 %4029
        %4031 = vrot.lane.b32.xlu0 %v1355, 16
        %v4032 = vpop.permute.xlu0 %4031
        %4033 = vrot.lane.b32.xlu0 %v1356, 16
        %v4034 = vpop.permute.xlu0 %4033
        %4035 = vrot.lane.b32.xlu0 %v1357, 16
        %v4036 = vpop.permute.xlu0 %4035
        %4037 = vrot.lane.b32.xlu0 %v1358, 16
        %v4038 = vpop.permute.xlu0 %4037
        %4039 = vrot.lane.b32.xlu0 %v1359, 16
        %v4040 = vpop.permute.xlu0 %4039
        %4041 = vrot.lane.b32.xlu0 %v1360, 16
        %v4042 = vpop.permute.xlu0 %4041
        %4043 = vrot.lane.b32.xlu0 %v1361, 16
        %v4044 = vpop.permute.xlu0 %4043
        %4045 = vrot.lane.b32.xlu0 %v1362, 16
        %v4046 = vpop.permute.xlu0 %4045
        %4047 = vrot.lane.b32.xlu0 %v1363, 16
        %v4048 = vpop.permute.xlu0 %4047
        %4049 = vrot.lane.b32.xlu0 %v1364, 16
        %v4050 = vpop.permute.xlu0 %4049
        %4051 = vrot.lane.b32.xlu0 %v1365, 16
        %v4052 = vpop.permute.xlu0 %4051
        %4053 = vrot.lane.b32.xlu0 %v1366, 16
        %v4054 = vpop.permute.xlu0 %4053
        %4055 = vrot.lane.b32.xlu0 %v1367, 16
        %v4056 = vpop.permute.xlu0 %4055
        %v4121 = vsel %vm1368, %v3930, 0.0
        %4122 = vadd.xlane.f32.xlu0 %v4121
        %v4123 = vpop.xlane.xlu0 %4122
        %v4124 = vsel %vm1368, %v3932, 0.0
        %4125 = vadd.xlane.f32.xlu0 %v4124
        %v4126 = vpop.xlane.xlu0 %4125
        %v4127 = vsel %vm1368, %v3934, 0.0
        %4128 = vadd.xlane.f32.xlu0 %v4127
        %v4129 = vpop.xlane.xlu0 %4128
        %v4130 = vsel %vm1368, %v3936, 0.0
        %4131 = vadd.xlane.f32.xlu0 %v4130
        %v4132 = vpop.xlane.xlu0 %4131
        %v4133 = vsel %vm1368, %v3938, 0.0
        %4134 = vadd.xlane.f32.xlu0 %v4133
        %v4135 = vpop.xlane.xlu0 %4134
        %v4136 = vsel %vm1368, %v3940, 0.0
        %4137 = vadd.xlane.f32.xlu0 %v4136
        %v4138 = vpop.xlane.xlu0 %4137
        %v4139 = vsel %vm1368, %v3942, 0.0
        %4140 = vadd.xlane.f32.xlu0 %v4139
        %v4141 = vpop.xlane.xlu0 %4140
        %v4142 = vsel %vm1368, %v3944, 0.0
        %4143 = vadd.xlane.f32.xlu0 %v4142
        %v4144 = vpop.xlane.xlu0 %4143
        %v4145 = vsel %vm1368, %v3946, 0.0
        %4146 = vadd.xlane.f32.xlu0 %v4145
        %v4147 = vpop.xlane.xlu0 %4146
        %v4148 = vsel %vm1368, %v3948, 0.0
        %4149 = vadd.xlane.f32.xlu0 %v4148
        %v4150 = vpop.xlane.xlu0 %4149
        %v4151 = vsel %vm1368, %v3950, 0.0
        %4152 = vadd.xlane.f32.xlu0 %v4151
        %v4153 = vpop.xlane.xlu0 %4152
        %v4154 = vsel %vm1368, %v3952, 0.0
        %4155 = vadd.xlane.f32.xlu0 %v4154
        %v4156 = vpop.xlane.xlu0 %4155
        %v4157 = vsel %vm1368, %v3954, 0.0
        %4158 = vadd.xlane.f32.xlu0 %v4157
        %v4159 = vpop.xlane.xlu0 %4158
        %v4160 = vsel %vm1368, %v3956, 0.0
        %4161 = vadd.xlane.f32.xlu0 %v4160
        %v4162 = vpop.xlane.xlu0 %4161
        %v4163 = vsel %vm1368, %v3958, 0.0
        %4164 = vadd.xlane.f32.xlu0 %v4163
        %v4165 = vpop.xlane.xlu0 %4164
        %v4166 = vsel %vm1368, %v3960, 0.0
        %4167 = vadd.xlane.f32.xlu0 %v4166
        %v4168 = vpop.xlane.xlu0 %4167
        %v4169 = vsel %vm1368, %v3962, 0.0
        %4170 = vadd.xlane.f32.xlu0 %v4169
        %v4171 = vpop.xlane.xlu0 %4170
        %v4172 = vsel %vm1368, %v3964, 0.0
        %4173 = vadd.xlane.f32.xlu0 %v4172
        %v4174 = vpop.xlane.xlu0 %4173
        %v4175 = vsel %vm1368, %v3966, 0.0
        %4176 = vadd.xlane.f32.xlu0 %v4175
        %v4177 = vpop.xlane.xlu0 %4176
        %v4178 = vsel %vm1368, %v3968, 0.0
        %4179 = vadd.xlane.f32.xlu0 %v4178
        %v4180 = vpop.xlane.xlu0 %4179
        %v4181 = vsel %vm1368, %v3970, 0.0
        %4182 = vadd.xlane.f32.xlu0 %v4181
        %v4183 = vpop.xlane.xlu0 %4182
        %v4184 = vsel %vm1368, %v3972, 0.0
        %4185 = vadd.xlane.f32.xlu0 %v4184
        %v4186 = vpop.xlane.xlu0 %4185
        %v4187 = vsel %vm1368, %v3974, 0.0
        %4188 = vadd.xlane.f32.xlu0 %v4187
        %v4189 = vpop.xlane.xlu0 %4188
        %v4190 = vsel %vm1368, %v3976, 0.0
        %4191 = vadd.xlane.f32.xlu0 %v4190
        %v4192 = vpop.xlane.xlu0 %4191
        %v4193 = vsel %vm1368, %v3978, 0.0
        %4194 = vadd.xlane.f32.xlu0 %v4193
        %v4195 = vpop.xlane.xlu0 %4194
        %v4196 = vsel %vm1368, %v3980, 0.0
        %4197 = vadd.xlane.f32.xlu0 %v4196
        %v4198 = vpop.xlane.xlu0 %4197
        %v4199 = vsel %vm1368, %v3982, 0.0
        %4200 = vadd.xlane.f32.xlu0 %v4199
        %v4201 = vpop.xlane.xlu0 %4200
        %v4202 = vsel %vm1368, %v3984, 0.0
        %4203 = vadd.xlane.f32.xlu0 %v4202
        %v4204 = vpop.xlane.xlu0 %4203
        %v4205 = vsel %vm1368, %v3986, 0.0
        %4206 = vadd.xlane.f32.xlu0 %v4205
        %v4207 = vpop.xlane.xlu0 %4206
        %v4208 = vsel %vm1368, %v3988, 0.0
        %4209 = vadd.xlane.f32.xlu0 %v4208
        %v4210 = vpop.xlane.xlu0 %4209
        %v4211 = vsel %vm1368, %v3990, 0.0
        %4212 = vadd.xlane.f32.xlu0 %v4211
        %v4213 = vpop.xlane.xlu0 %4212
        %v4214 = vsel %vm1368, %v3992, 0.0
        %4215 = vadd.xlane.f32.xlu0 %v4214
        %v4216 = vpop.xlane.xlu0 %4215
        %v4217 = vsel %vm1368, %v3994, 0.0
        %4218 = vadd.xlane.f32.xlu0 %v4217
        %v4219 = vpop.xlane.xlu0 %4218
        %v4220 = vsel %vm1368, %v3996, 0.0
        %4221 = vadd.xlane.f32.xlu0 %v4220
        %v4222 = vpop.xlane.xlu0 %4221
        %v4223 = vsel %vm1368, %v3998, 0.0
        %4224 = vadd.xlane.f32.xlu0 %v4223
        %v4225 = vpop.xlane.xlu0 %4224
        %v4226 = vsel %vm1368, %v4000, 0.0
        %4227 = vadd.xlane.f32.xlu0 %v4226
        %v4228 = vpop.xlane.xlu0 %4227
        %v4229 = vsel %vm1368, %v4002, 0.0
        %4230 = vadd.xlane.f32.xlu0 %v4229
        %v4231 = vpop.xlane.xlu0 %4230
        %v4232 = vsel %vm1368, %v4004, 0.0
        %4233 = vadd.xlane.f32.xlu0 %v4232
        %v4234 = vpop.xlane.xlu0 %4233
        %v4235 = vsel %vm1368, %v4006, 0.0
        %4236 = vadd.xlane.f32.xlu0 %v4235
        %v4237 = vpop.xlane.xlu0 %4236
        %v4238 = vsel %vm1368, %v4008, 0.0
        %4239 = vadd.xlane.f32.xlu0 %v4238
        %v4240 = vpop.xlane.xlu0 %4239
        %v4241 = vsel %vm1368, %v4010, 0.0
        %4242 = vadd.xlane.f32.xlu0 %v4241
        %v4243 = vpop.xlane.xlu0 %4242
        %v4244 = vsel %vm1368, %v4012, 0.0
        %4245 = vadd.xlane.f32.xlu0 %v4244
        %v4246 = vpop.xlane.xlu0 %4245
        %v4247 = vsel %vm1368, %v4014, 0.0
        %4248 = vadd.xlane.f32.xlu0 %v4247
        %v4249 = vpop.xlane.xlu0 %4248
        %v4250 = vsel %vm1368, %v4016, 0.0
        %4251 = vadd.xlane.f32.xlu0 %v4250
        %v4252 = vpop.xlane.xlu0 %4251
        %v4253 = vsel %vm1368, %v4018, 0.0
        %4254 = vadd.xlane.f32.xlu0 %v4253
        %v4255 = vpop.xlane.xlu0 %4254
        %v4256 = vsel %vm1368, %v4020, 0.0
        %4257 = vadd.xlane.f32.xlu0 %v4256
        %v4258 = vpop.xlane.xlu0 %4257
        %v4259 = vsel %vm1368, %v4022, 0.0
        %4260 = vadd.xlane.f32.xlu0 %v4259
        %v4261 = vpop.xlane.xlu0 %4260
        %v4262 = vsel %vm1368, %v4024, 0.0
        %4263 = vadd.xlane.f32.xlu0 %v4262
        %v4264 = vpop.xlane.xlu0 %4263
        %v4265 = vsel %vm1368, %v4026, 0.0
        %4266 = vadd.xlane.f32.xlu0 %v4265
        %v4267 = vpop.xlane.xlu0 %4266
        %v4268 = vsel %vm1368, %v4028, 0.0
        %4269 = vadd.xlane.f32.xlu0 %v4268
        %v4270 = vpop.xlane.xlu0 %4269
        %v4271 = vsel %vm1368, %v4030, 0.0
        %4272 = vadd.xlane.f32.xlu0 %v4271
        %v4273 = vpop.xlane.xlu0 %4272
        %v4274 = vsel %vm1368, %v4032, 0.0
        %4275 = vadd.xlane.f32.xlu0 %v4274
        %v4276 = vpop.xlane.xlu0 %4275
        %v4277 = vsel %vm1368, %v4034, 0.0
        %4278 = vadd.xlane.f32.xlu0 %v4277
        %v4279 = vpop.xlane.xlu0 %4278
        %v4280 = vsel %vm1368, %v4036, 0.0
        %4281 = vadd.xlane.f32.xlu0 %v4280
        %v4282 = vpop.xlane.xlu0 %4281
        %v4283 = vsel %vm1368, %v4038, 0.0
        %4284 = vadd.xlane.f32.xlu0 %v4283
        %v4285 = vpop.xlane.xlu0 %4284
        %v4286 = vsel %vm1368, %v4040, 0.0
        %4287 = vadd.xlane.f32.xlu0 %v4286
        %v4288 = vpop.xlane.xlu0 %4287
        %v4289 = vsel %vm1368, %v4042, 0.0
        %4290 = vadd.xlane.f32.xlu0 %v4289
        %v4291 = vpop.xlane.xlu0 %4290
        %v4292 = vsel %vm1368, %v4044, 0.0
        %4293 = vadd.xlane.f32.xlu0 %v4292
        %v4294 = vpop.xlane.xlu0 %4293
        %v4295 = vsel %vm1368, %v4046, 0.0
        %4296 = vadd.xlane.f32.xlu0 %v4295
        %v4297 = vpop.xlane.xlu0 %4296
        %v4298 = vsel %vm1368, %v4048, 0.0
        %4299 = vadd.xlane.f32.xlu0 %v4298
        %v4300 = vpop.xlane.xlu0 %4299
        %v4301 = vsel %vm1368, %v4050, 0.0
        %4302 = vadd.xlane.f32.xlu0 %v4301
        %v4303 = vpop.xlane.xlu0 %4302
        %v4304 = vsel %vm1368, %v4052, 0.0
        %4305 = vadd.xlane.f32.xlu0 %v4304
        %v4306 = vpop.xlane.xlu0 %4305
        %v4307 = vsel %vm1368, %v4054, 0.0
        %4308 = vadd.xlane.f32.xlu0 %v4307
        %v4309 = vpop.xlane.xlu0 %4308
        %v4310 = vsel %vm1368, %v4056, 0.0
        %4311 = vadd.xlane.f32.xlu0 %v4310
        %v4312 = vpop.xlane.xlu0 %4311
        %vm4313 = vcmask 7168
        %v4314 = vsel %vm4313, %v1371, %v1819
        %v4315 = vsel %vm4313, %v1374, %v1822
        %v4316 = vsel %vm4313, %v1377, %v1825
        %v4317 = vsel %vm4313, %v1380, %v1828
        %v4318 = vsel %vm4313, %v1383, %v1831
        %v4319 = vsel %vm4313, %v1386, %v1834
        %v4320 = vsel %vm4313, %v1389, %v1837
        %v4321 = vsel %vm4313, %v1392, %v1840
        %v4322 = vsel %vm4313, %v1395, %v1843
        %v4323 = vsel %vm4313, %v1398, %v1846
        %v4324 = vsel %vm4313, %v1401, %v1849
        %v4325 = vsel %vm4313, %v1404, %v1852
        %v4326 = vsel %vm4313, %v1407, %v1855
        %v4327 = vsel %vm4313, %v1410, %v1858
        %v4328 = vsel %vm4313, %v1413, %v1861
        %v4329 = vsel %vm4313, %v1416, %v1864
        %v4330 = vsel %vm4313, %v1419, %v1867
        %v4331 = vsel %vm4313, %v1422, %v1870
        %v4332 = vsel %vm4313, %v1425, %v1873
        %v4333 = vsel %vm4313, %v1428, %v1876
        %v4334 = vsel %vm4313, %v1431, %v1879
        %v4335 = vsel %vm4313, %v1434, %v1882
        %v4336 = vsel %vm4313, %v1437, %v1885
        %v4337 = vsel %vm4313, %v1440, %v1888
        %v4338 = vsel %vm4313, %v1443, %v1891
        %v4339 = vsel %vm4313, %v1446, %v1894
        %v4340 = vsel %vm4313, %v1449, %v1897
        %v4341 = vsel %vm4313, %v1452, %v1900
        %v4342 = vsel %vm4313, %v1455, %v1903
        %v4343 = vsel %vm4313, %v1458, %v1906
        %v4344 = vsel %vm4313, %v1461, %v1909
        %v4345 = vsel %vm4313, %v1464, %v1912
        %v4346 = vsel %vm4313, %v1467, %v1915
        %v4347 = vsel %vm4313, %v1470, %v1918
        %v4348 = vsel %vm4313, %v1473, %v1921
        %v4349 = vsel %vm4313, %v1476, %v1924
        %v4350 = vsel %vm4313, %v1479, %v1927
        %v4351 = vsel %vm4313, %v1482, %v1930
        %v4352 = vsel %vm4313, %v1485, %v1933
        %v4353 = vsel %vm4313, %v1488, %v1936
        %v4354 = vsel %vm4313, %v1491, %v1939
        %v4355 = vsel %vm4313, %v1494, %v1942
        %v4356 = vsel %vm4313, %v1497, %v1945
        %v4357 = vsel %vm4313, %v1500, %v1948
        %v4358 = vsel %vm4313, %v1503, %v1951
        %v4359 = vsel %vm4313, %v1506, %v1954
        %v4360 = vsel %vm4313, %v1509, %v1957
        %v4361 = vsel %vm4313, %v1512, %v1960
        %v4362 = vsel %vm4313, %v1515, %v1963
        %v4363 = vsel %vm4313, %v1518, %v1966
        %v4364 = vsel %vm4313, %v1521, %v1969
        %v4365 = vsel %vm4313, %v1524, %v1972
        %v4366 = vsel %vm4313, %v1527, %v1975
        %v4367 = vsel %vm4313, %v1530, %v1978
        %v4368 = vsel %vm4313, %v1533, %v1981
        %v4369 = vsel %vm4313, %v1536, %v1984
        %v4370 = vsel %vm4313, %v1539, %v1987
        %v4371 = vsel %vm4313, %v1542, %v1990
        %v4372 = vsel %vm4313, %v1545, %v1993
        %v4373 = vsel %vm4313, %v1548, %v1996
        %v4374 = vsel %vm4313, %v1551, %v1999
        %v4375 = vsel %vm4313, %v1554, %v2002
        %v4376 = vsel %vm4313, %v1557, %v2005
        %v4377 = vsel %vm4313, %v1560, %v2008
        %vm4378 = vcmask 15360
        %v4379 = vsel %vm4378, %v4314, %v2203
        %v4380 = vsel %vm4378, %v4315, %v2206
        %v4381 = vsel %vm4378, %v4316, %v2209
        %v4382 = vsel %vm4378, %v4317, %v2212
        %v4383 = vsel %vm4378, %v4318, %v2215
        %v4384 = vsel %vm4378, %v4319, %v2218
        %v4385 = vsel %vm4378, %v4320, %v2221
        %v4386 = vsel %vm4378, %v4321, %v2224
        %v4387 = vsel %vm4378, %v4322, %v2227
        %v4388 = vsel %vm4378, %v4323, %v2230
        %v4389 = vsel %vm4378, %v4324, %v2233
        %v4390 = vsel %vm4378, %v4325, %v2236
        %v4391 = vsel %vm4378, %v4326, %v2239
        %v4392 = vsel %vm4378, %v4327, %v2242
        %v4393 = vsel %vm4378, %v4328, %v2245
        %v4394 = vsel %vm4378, %v4329, %v2248
        %v4395 = vsel %vm4378, %v4330, %v2251
        %v4396 = vsel %vm4378, %v4331, %v2254
        %v4397 = vsel %vm4378, %v4332, %v2257
        %v4398 = vsel %vm4378, %v4333, %v2260
        %v4399 = vsel %vm4378, %v4334, %v2263
        %v4400 = vsel %vm4378, %v4335, %v2266
        %v4401 = vsel %vm4378, %v4336, %v2269
        %v4402 = vsel %vm4378, %v4337, %v2272
        %v4403 = vsel %vm4378, %v4338, %v2275
        %v4404 = vsel %vm4378, %v4339, %v2278
        %v4405 = vsel %vm4378, %v4340, %v2281
        %v4406 = vsel %vm4378, %v4341, %v2284
        %v4407 = vsel %vm4378, %v4342, %v2287
        %v4408 = vsel %vm4378, %v4343, %v2290
        %v4409 = vsel %vm4378, %v4344, %v2293
        %v4410 = vsel %vm4378, %v4345, %v2296
        %v4411 = vsel %vm4378, %v4346, %v2299
        %v4412 = vsel %vm4378, %v4347, %v2302
        %v4413 = vsel %vm4378, %v4348, %v2305
        %v4414 = vsel %vm4378, %v4349, %v2308
        %v4415 = vsel %vm4378, %v4350, %v2311
        %v4416 = vsel %vm4378, %v4351, %v2314
        %v4417 = vsel %vm4378, %v4352, %v2317
        %v4418 = vsel %vm4378, %v4353, %v2320
        %v4419 = vsel %vm4378, %v4354, %v2323
        %v4420 = vsel %vm4378, %v4355, %v2326
        %v4421 = vsel %vm4378, %v4356, %v2329
        %v4422 = vsel %vm4378, %v4357, %v2332
        %v4423 = vsel %vm4378, %v4358, %v2335
        %v4424 = vsel %vm4378, %v4359, %v2338
        %v4425 = vsel %vm4378, %v4360, %v2341
        %v4426 = vsel %vm4378, %v4361, %v2344
        %v4427 = vsel %vm4378, %v4362, %v2347
        %v4428 = vsel %vm4378, %v4363, %v2350
        %v4429 = vsel %vm4378, %v4364, %v2353
        %v4430 = vsel %vm4378, %v4365, %v2356
        %v4431 = vsel %vm4378, %v4366, %v2359
        %v4432 = vsel %vm4378, %v4367, %v2362
        %v4433 = vsel %vm4378, %v4368, %v2365
        %v4434 = vsel %vm4378, %v4369, %v2368
        %v4435 = vsel %vm4378, %v4370, %v2371
        %v4436 = vsel %vm4378, %v4371, %v2374
        %v4437 = vsel %vm4378, %v4372, %v2377
        %v4438 = vsel %vm4378, %v4373, %v2380
        %v4439 = vsel %vm4378, %v4374, %v2383
        %v4440 = vsel %vm4378, %v4375, %v2386
        %v4441 = vsel %vm4378, %v4376, %v2389
        %v4442 = vsel %vm4378, %v4377, %v2392
        %vm4443 = vcmask 23552
        %v4444 = vsel %vm4443, %v4379, %v2587
        %v4445 = vsel %vm4443, %v4380, %v2590
        %v4446 = vsel %vm4443, %v4381, %v2593
        %v4447 = vsel %vm4443, %v4382, %v2596
        %v4448 = vsel %vm4443, %v4383, %v2599
        %v4449 = vsel %vm4443, %v4384, %v2602
        %v4450 = vsel %vm4443, %v4385, %v2605
        %v4451 = vsel %vm4443, %v4386, %v2608
        %v4452 = vsel %vm4443, %v4387, %v2611
        %v4453 = vsel %vm4443, %v4388, %v2614
        %v4454 = vsel %vm4443, %v4389, %v2617
        %v4455 = vsel %vm4443, %v4390, %v2620
        %v4456 = vsel %vm4443, %v4391, %v2623
        %v4457 = vsel %vm4443, %v4392, %v2626
        %v4458 = vsel %vm4443, %v4393, %v2629
        %v4459 = vsel %vm4443, %v4394, %v2632
        %v4460 = vsel %vm4443, %v4395, %v2635
        %v4461 = vsel %vm4443, %v4396, %v2638
        %v4462 = vsel %vm4443, %v4397, %v2641
        %v4463 = vsel %vm4443, %v4398, %v2644
        %v4464 = vsel %vm4443, %v4399, %v2647
        %v4465 = vsel %vm4443, %v4400, %v2650
        %v4466 = vsel %vm4443, %v4401, %v2653
        %v4467 = vsel %vm4443, %v4402, %v2656
        %v4468 = vsel %vm4443, %v4403, %v2659
        %v4469 = vsel %vm4443, %v4404, %v2662
        %v4470 = vsel %vm4443, %v4405, %v2665
        %v4471 = vsel %vm4443, %v4406, %v2668
        %v4472 = vsel %vm4443, %v4407, %v2671
        %v4473 = vsel %vm4443, %v4408, %v2674
        %v4474 = vsel %vm4443, %v4409, %v2677
        %v4475 = vsel %vm4443, %v4410, %v2680
        %v4476 = vsel %vm4443, %v4411, %v2683
        %v4477 = vsel %vm4443, %v4412, %v2686
        %v4478 = vsel %vm4443, %v4413, %v2689
        %v4479 = vsel %vm4443, %v4414, %v2692
        %v4480 = vsel %vm4443, %v4415, %v2695
        %v4481 = vsel %vm4443, %v4416, %v2698
        %v4482 = vsel %vm4443, %v4417, %v2701
        %v4483 = vsel %vm4443, %v4418, %v2704
        %v4484 = vsel %vm4443, %v4419, %v2707
        %v4485 = vsel %vm4443, %v4420, %v2710
        %v4486 = vsel %vm4443, %v4421, %v2713
        %v4487 = vsel %vm4443, %v4422, %v2716
        %v4488 = vsel %vm4443, %v4423, %v2719
        %v4489 = vsel %vm4443, %v4424, %v2722
        %v4490 = vsel %vm4443, %v4425, %v2725
        %v4491 = vsel %vm4443, %v4426, %v2728
        %v4492 = vsel %vm4443, %v4427, %v2731
        %v4493 = vsel %vm4443, %v4428, %v2734
        %v4494 = vsel %vm4443, %v4429, %v2737
        %v4495 = vsel %vm4443, %v4430, %v2740
        %v4496 = vsel %vm4443, %v4431, %v2743
        %v4497 = vsel %vm4443, %v4432, %v2746
        %v4498 = vsel %vm4443, %v4433, %v2749
        %v4499 = vsel %vm4443, %v4434, %v2752
        %v4500 = vsel %vm4443, %v4435, %v2755
        %v4501 = vsel %vm4443, %v4436, %v2758
        %v4502 = vsel %vm4443, %v4437, %v2761
        %v4503 = vsel %vm4443, %v4438, %v2764
        %v4504 = vsel %vm4443, %v4439, %v2767
        %v4505 = vsel %vm4443, %v4440, %v2770
        %v4506 = vsel %vm4443, %v4441, %v2773
        %v4507 = vsel %vm4443, %v4442, %v2776
        %vm4508 = vcmask 31744
        %v4509 = vsel %vm4508, %v4444, %v2971
        %v4510 = vsel %vm4508, %v4445, %v2974
        %v4511 = vsel %vm4508, %v4446, %v2977
        %v4512 = vsel %vm4508, %v4447, %v2980
        %v4513 = vsel %vm4508, %v4448, %v2983
        %v4514 = vsel %vm4508, %v4449, %v2986
        %v4515 = vsel %vm4508, %v4450, %v2989
        %v4516 = vsel %vm4508, %v4451, %v2992
        %v4517 = vsel %vm4508, %v4452, %v2995
        %v4518 = vsel %vm4508, %v4453, %v2998
        %v4519 = vsel %vm4508, %v4454, %v3001
        %v4520 = vsel %vm4508, %v4455, %v3004
        %v4521 = vsel %vm4508, %v4456, %v3007
        %v4522 = vsel %vm4508, %v4457, %v3010
        %v4523 = vsel %vm4508, %v4458, %v3013
        %v4524 = vsel %vm4508, %v4459, %v3016
        %v4525 = vsel %vm4508, %v4460, %v3019
        %v4526 = vsel %vm4508, %v4461, %v3022
        %v4527 = vsel %vm4508, %v4462, %v3025
        %v4528 = vsel %vm4508, %v4463, %v3028
        %v4529 = vsel %vm4508, %v4464, %v3031
        %v4530 = vsel %vm4508, %v4465, %v3034
        %v4531 = vsel %vm4508, %v4466, %v3037
        %v4532 = vsel %vm4508, %v4467, %v3040
        %v4533 = vsel %vm4508, %v4468, %v3043
        %v4534 = vsel %vm4508, %v4469, %v3046
        %v4535 = vsel %vm4508, %v4470, %v3049
        %v4536 = vsel %vm4508, %v4471, %v3052
        %v4537 = vsel %vm4508, %v4472, %v3055
        %v4538 = vsel %vm4508, %v4473, %v3058
        %v4539 = vsel %vm4508, %v4474, %v3061
        %v4540 = vsel %vm4508, %v4475, %v3064
        %v4541 = vsel %vm4508, %v4476, %v3067
        %v4542 = vsel %vm4508, %v4477, %v3070
        %v4543 = vsel %vm4508, %v4478, %v3073
        %v4544 = vsel %vm4508, %v4479, %v3076
        %v4545 = vsel %vm4508, %v4480, %v3079
        %v4546 = vsel %vm4508, %v4481, %v3082
        %v4547 = vsel %vm4508, %v4482, %v3085
        %v4548 = vsel %vm4508, %v4483, %v3088
        %v4549 = vsel %vm4508, %v4484, %v3091
        %v4550 = vsel %vm4508, %v4485, %v3094
        %v4551 = vsel %vm4508, %v4486, %v3097
        %v4552 = vsel %vm4508, %v4487, %v3100
        %v4553 = vsel %vm4508, %v4488, %v3103
        %v4554 = vsel %vm4508, %v4489, %v3106
        %v4555 = vsel %vm4508, %v4490, %v3109
        %v4556 = vsel %vm4508, %v4491, %v3112
        %v4557 = vsel %vm4508, %v4492, %v3115
        %v4558 = vsel %vm4508, %v4493, %v3118
        %v4559 = vsel %vm4508, %v4494, %v3121
        %v4560 = vsel %vm4508, %v4495, %v3124
        %v4561 = vsel %vm4508, %v4496, %v3127
        %v4562 = vsel %vm4508, %v4497, %v3130
        %v4563 = vsel %vm4508, %v4498, %v3133
        %v4564 = vsel %vm4508, %v4499, %v3136
        %v4565 = vsel %vm4508, %v4500, %v3139
        %v4566 = vsel %vm4508, %v4501, %v3142
        %v4567 = vsel %vm4508, %v4502, %v3145
        %v4568 = vsel %vm4508, %v4503, %v3148
        %v4569 = vsel %vm4508, %v4504, %v3151
        %v4570 = vsel %vm4508, %v4505, %v3154
        %v4571 = vsel %vm4508, %v4506, %v3157
        %v4572 = vsel %vm4508, %v4507, %v3160
        %vm4573 = vcmask 39936
        %v4574 = vsel %vm4573, %v4509, %v3355
        %v4575 = vsel %vm4573, %v4510, %v3358
        %v4576 = vsel %vm4573, %v4511, %v3361
        %v4577 = vsel %vm4573, %v4512, %v3364
        %v4578 = vsel %vm4573, %v4513, %v3367
        %v4579 = vsel %vm4573, %v4514, %v3370
        %v4580 = vsel %vm4573, %v4515, %v3373
        %v4581 = vsel %vm4573, %v4516, %v3376
        %v4582 = vsel %vm4573, %v4517, %v3379
        %v4583 = vsel %vm4573, %v4518, %v3382
        %v4584 = vsel %vm4573, %v4519, %v3385
        %v4585 = vsel %vm4573, %v4520, %v3388
        %v4586 = vsel %vm4573, %v4521, %v3391
        %v4587 = vsel %vm4573, %v4522, %v3394
        %v4588 = vsel %vm4573, %v4523, %v3397
        %v4589 = vsel %vm4573, %v4524, %v3400
        %v4590 = vsel %vm4573, %v4525, %v3403
        %v4591 = vsel %vm4573, %v4526, %v3406
        %v4592 = vsel %vm4573, %v4527, %v3409
        %v4593 = vsel %vm4573, %v4528, %v3412
        %v4594 = vsel %vm4573, %v4529, %v3415
        %v4595 = vsel %vm4573, %v4530, %v3418
        %v4596 = vsel %vm4573, %v4531, %v3421
        %v4597 = vsel %vm4573, %v4532, %v3424
        %v4598 = vsel %vm4573, %v4533, %v3427
        %v4599 = vsel %vm4573, %v4534, %v3430
        %v4600 = vsel %vm4573, %v4535, %v3433
        %v4601 = vsel %vm4573, %v4536, %v3436
        %v4602 = vsel %vm4573, %v4537, %v3439
        %v4603 = vsel %vm4573, %v4538, %v3442
        %v4604 = vsel %vm4573, %v4539, %v3445
        %v4605 = vsel %vm4573, %v4540, %v3448
        %v4606 = vsel %vm4573, %v4541, %v3451
        %v4607 = vsel %vm4573, %v4542, %v3454
        %v4608 = vsel %vm4573, %v4543, %v3457
        %v4609 = vsel %vm4573, %v4544, %v3460
        %v4610 = vsel %vm4573, %v4545, %v3463
        %v4611 = vsel %vm4573, %v4546, %v3466
        %v4612 = vsel %vm4573, %v4547, %v3469
        %v4613 = vsel %vm4573, %v4548, %v3472
        %v4614 = vsel %vm4573, %v4549, %v3475
        %v4615 = vsel %vm4573, %v4550, %v3478
        %v4616 = vsel %vm4573, %v4551, %v3481
        %v4617 = vsel %vm4573, %v4552, %v3484
        %v4618 = vsel %vm4573, %v4553, %v3487
        %v4619 = vsel %vm4573, %v4554, %v3490
        %v4620 = vsel %vm4573, %v4555, %v3493
        %v4621 = vsel %vm4573, %v4556, %v3496
        %v4622 = vsel %vm4573, %v4557, %v3499
        %v4623 = vsel %vm4573, %v4558, %v3502
        %v4624 = vsel %vm4573, %v4559, %v3505
        %v4625 = vsel %vm4573, %v4560, %v3508
        %v4626 = vsel %vm4573, %v4561, %v3511
        %v4627 = vsel %vm4573, %v4562, %v3514
        %v4628 = vsel %vm4573, %v4563, %v3517
        %v4629 = vsel %vm4573, %v4564, %v3520
        %v4630 = vsel %vm4573, %v4565, %v3523
        %v4631 = vsel %vm4573, %v4566, %v3526
        %v4632 = vsel %vm4573, %v4567, %v3529
        %v4633 = vsel %vm4573, %v4568, %v3532
        %v4634 = vsel %vm4573, %v4569, %v3535
        %v4635 = vsel %vm4573, %v4570, %v3538
        %v4636 = vsel %vm4573, %v4571, %v3541
        %v4637 = vsel %vm4573, %v4572, %v3544
        %vm4638 = vcmask 48128
        %v4639 = vsel %vm4638, %v4574, %v3739
        %v4640 = vsel %vm4638, %v4575, %v3742
        %v4641 = vsel %vm4638, %v4576, %v3745
        %v4642 = vsel %vm4638, %v4577, %v3748
        %v4643 = vsel %vm4638, %v4578, %v3751
        %v4644 = vsel %vm4638, %v4579, %v3754
        %v4645 = vsel %vm4638, %v4580, %v3757
        %v4646 = vsel %vm4638, %v4581, %v3760
        %v4647 = vsel %vm4638, %v4582, %v3763
        %v4648 = vsel %vm4638, %v4583, %v3766
        %v4649 = vsel %vm4638, %v4584, %v3769
        %v4650 = vsel %vm4638, %v4585, %v3772
        %v4651 = vsel %vm4638, %v4586, %v3775
        %v4652 = vsel %vm4638, %v4587, %v3778
        %v4653 = vsel %vm4638, %v4588, %v3781
        %v4654 = vsel %vm4638, %v4589, %v3784
        %v4655 = vsel %vm4638, %v4590, %v3787
        %v4656 = vsel %vm4638, %v4591, %v3790
        %v4657 = vsel %vm4638, %v4592, %v3793
        %v4658 = vsel %vm4638, %v4593, %v3796
        %v4659 = vsel %vm4638, %v4594, %v3799
        %v4660 = vsel %vm4638, %v4595, %v3802
        %v4661 = vsel %vm4638, %v4596, %v3805
        %v4662 = vsel %vm4638, %v4597, %v3808
        %v4663 = vsel %vm4638, %v4598, %v3811
        %v4664 = vsel %vm4638, %v4599, %v3814
        %v4665 = vsel %vm4638, %v4600, %v3817
        %v4666 = vsel %vm4638, %v4601, %v3820
        %v4667 = vsel %vm4638, %v4602, %v3823
        %v4668 = vsel %vm4638, %v4603, %v3826
        %v4669 = vsel %vm4638, %v4604, %v3829
        %v4670 = vsel %vm4638, %v4605, %v3832
        %v4671 = vsel %vm4638, %v4606, %v3835
        %v4672 = vsel %vm4638, %v4607, %v3838
        %v4673 = vsel %vm4638, %v4608, %v3841
        %v4674 = vsel %vm4638, %v4609, %v3844
        %v4675 = vsel %vm4638, %v4610, %v3847
        %v4676 = vsel %vm4638, %v4611, %v3850
        %v4677 = vsel %vm4638, %v4612, %v3853
        %v4678 = vsel %vm4638, %v4613, %v3856
        %v4679 = vsel %vm4638, %v4614, %v3859
        %v4680 = vsel %vm4638, %v4615, %v3862
        %v4681 = vsel %vm4638, %v4616, %v3865
        %v4682 = vsel %vm4638, %v4617, %v3868
        %v4683 = vsel %vm4638, %v4618, %v3871
        %v4684 = vsel %vm4638, %v4619, %v3874
        %v4685 = vsel %vm4638, %v4620, %v3877
        %v4686 = vsel %vm4638, %v4621, %v3880
        %v4687 = vsel %vm4638, %v4622, %v3883
        %v4688 = vsel %vm4638, %v4623, %v3886
        %v4689 = vsel %vm4638, %v4624, %v3889
        %v4690 = vsel %vm4638, %v4625, %v3892
        %v4691 = vsel %vm4638, %v4626, %v3895
        %v4692 = vsel %vm4638, %v4627, %v3898
        %v4693 = vsel %vm4638, %v4628, %v3901
        %v4694 = vsel %vm4638, %v4629, %v3904
        %v4695 = vsel %vm4638, %v4630, %v3907
        %v4696 = vsel %vm4638, %v4631, %v3910
        %v4697 = vsel %vm4638, %v4632, %v3913
        %v4698 = vsel %vm4638, %v4633, %v3916
        %v4699 = vsel %vm4638, %v4634, %v3919
        %v4700 = vsel %vm4638, %v4635, %v3922
        %v4701 = vsel %vm4638, %v4636, %v3925
        %v4702 = vsel %vm4638, %v4637, %v3928
        %vm4703 = vcmask 56320
        %v4704 = vsel %vm4703, %v4639, %v4123
        %v4705 = vsel %vm4703, %v4640, %v4126
        %v4706 = vsel %vm4703, %v4641, %v4129
        %v4707 = vsel %vm4703, %v4642, %v4132
        %v4708 = vsel %vm4703, %v4643, %v4135
        %v4709 = vsel %vm4703, %v4644, %v4138
        %v4710 = vsel %vm4703, %v4645, %v4141
        %v4711 = vsel %vm4703, %v4646, %v4144
        %v4712 = vsel %vm4703, %v4647, %v4147
        %v4713 = vsel %vm4703, %v4648, %v4150
        %v4714 = vsel %vm4703, %v4649, %v4153
        %v4715 = vsel %vm4703, %v4650, %v4156
        %v4716 = vsel %vm4703, %v4651, %v4159
        %v4717 = vsel %vm4703, %v4652, %v4162
        %v4718 = vsel %vm4703, %v4653, %v4165
        %v4719 = vsel %vm4703, %v4654, %v4168
        %v4720 = vsel %vm4703, %v4655, %v4171
        %v4721 = vsel %vm4703, %v4656, %v4174
        %v4722 = vsel %vm4703, %v4657, %v4177
        %v4723 = vsel %vm4703, %v4658, %v4180
        %v4724 = vsel %vm4703, %v4659, %v4183
        %v4725 = vsel %vm4703, %v4660, %v4186
        %v4726 = vsel %vm4703, %v4661, %v4189
        %v4727 = vsel %vm4703, %v4662, %v4192
        %v4728 = vsel %vm4703, %v4663, %v4195
        %v4729 = vsel %vm4703, %v4664, %v4198
        %v4730 = vsel %vm4703, %v4665, %v4201
        %v4731 = vsel %vm4703, %v4666, %v4204
        %v4732 = vsel %vm4703, %v4667, %v4207
        %v4733 = vsel %vm4703, %v4668, %v4210
        %v4734 = vsel %vm4703, %v4669, %v4213
        %v4735 = vsel %vm4703, %v4670, %v4216
        %v4736 = vsel %vm4703, %v4671, %v4219
        %v4737 = vsel %vm4703, %v4672, %v4222
        %v4738 = vsel %vm4703, %v4673, %v4225
        %v4739 = vsel %vm4703, %v4674, %v4228
        %v4740 = vsel %vm4703, %v4675, %v4231
        %v4741 = vsel %vm4703, %v4676, %v4234
        %v4742 = vsel %vm4703, %v4677, %v4237
        %v4743 = vsel %vm4703, %v4678, %v4240
        %v4744 = vsel %vm4703, %v4679, %v4243
        %v4745 = vsel %vm4703, %v4680, %v4246
        %v4746 = vsel %vm4703, %v4681, %v4249
        %v4747 = vsel %vm4703, %v4682, %v4252
        %v4748 = vsel %vm4703, %v4683, %v4255
        %v4749 = vsel %vm4703, %v4684, %v4258
        %v4750 = vsel %vm4703, %v4685, %v4261
        %v4751 = vsel %vm4703, %v4686, %v4264
        %v4752 = vsel %vm4703, %v4687, %v4267
        %v4753 = vsel %vm4703, %v4688, %v4270
        %v4754 = vsel %vm4703, %v4689, %v4273
        %v4755 = vsel %vm4703, %v4690, %v4276
        %v4756 = vsel %vm4703, %v4691, %v4279
        %v4757 = vsel %vm4703, %v4692, %v4282
        %v4758 = vsel %vm4703, %v4693, %v4285
        %v4759 = vsel %vm4703, %v4694, %v4288
        %v4760 = vsel %vm4703, %v4695, %v4291
        %v4761 = vsel %vm4703, %v4696, %v4294
        %v4762 = vsel %vm4703, %v4697, %v4297
        %v4763 = vsel %vm4703, %v4698, %v4300
        %v4764 = vsel %vm4703, %v4699, %v4303
        %v4765 = vsel %vm4703, %v4700, %v4306
        %v4766 = vsel %vm4703, %v4701, %v4309
        %v4767 = vsel %vm4703, %v4702, %v4312
        %v4768 = vld [vmem:[%s4] sm:$0x1]
        %v4770 = vlaneseq
        %v4771 = vshrl.u32 %v4770, 7
        %v4772 = vsub.s32 0, %v4771
        %v4773 = vrot.slane %v4768, %v4772
        %v4775 = vadd.f32 %v4704, %v4773
        %v4776 = vadd.f32 %v4705, %v4773
        %v4777 = vadd.f32 %v4706, %v4773
        %v4778 = vadd.f32 %v4707, %v4773
        %v4779 = vadd.f32 %v4708, %v4773
        %v4780 = vadd.f32 %v4709, %v4773
        %v4781 = vadd.f32 %v4710, %v4773
        %v4782 = vadd.f32 %v4711, %v4773
        %v4783 = vadd.f32 %v4712, %v4773
        %v4784 = vadd.f32 %v4713, %v4773
        %v4785 = vadd.f32 %v4714, %v4773
        %v4786 = vadd.f32 %v4715, %v4773
        %v4787 = vadd.f32 %v4716, %v4773
        %v4788 = vadd.f32 %v4717, %v4773
        %v4789 = vadd.f32 %v4718, %v4773
        %v4790 = vadd.f32 %v4719, %v4773
        %v4791 = vadd.f32 %v4720, %v4773
        %v4792 = vadd.f32 %v4721, %v4773
        %v4793 = vadd.f32 %v4722, %v4773
        %v4794 = vadd.f32 %v4723, %v4773
        %v4795 = vadd.f32 %v4724, %v4773
        %v4796 = vadd.f32 %v4725, %v4773
        %v4797 = vadd.f32 %v4726, %v4773
        %v4798 = vadd.f32 %v4727, %v4773
        %v4799 = vadd.f32 %v4728, %v4773
        %v4800 = vadd.f32 %v4729, %v4773
        %v4801 = vadd.f32 %v4730, %v4773
        %v4802 = vadd.f32 %v4731, %v4773
        %v4803 = vadd.f32 %v4732, %v4773
        %v4804 = vadd.f32 %v4733, %v4773
        %v4805 = vadd.f32 %v4734, %v4773
        %v4806 = vadd.f32 %v4735, %v4773
        %v4807 = vadd.f32 %v4736, %v4773
        %v4808 = vadd.f32 %v4737, %v4773
        %v4809 = vadd.f32 %v4738, %v4773
        %v4810 = vadd.f32 %v4739, %v4773
        %v4811 = vadd.f32 %v4740, %v4773
        %v4812 = vadd.f32 %v4741, %v4773
        %v4813 = vadd.f32 %v4742, %v4773
        %v4814 = vadd.f32 %v4743, %v4773
        %v4815 = vadd.f32 %v4744, %v4773
        %v4816 = vadd.f32 %v4745, %v4773
        %v4817 = vadd.f32 %v4746, %v4773
        %v4818 = vadd.f32 %v4747, %v4773
        %v4819 = vadd.f32 %v4748, %v4773
        %v4820 = vadd.f32 %v4749, %v4773
        %v4821 = vadd.f32 %v4750, %v4773
        %v4822 = vadd.f32 %v4751, %v4773
        %v4823 = vadd.f32 %v4752, %v4773
        %v4824 = vadd.f32 %v4753, %v4773
        %v4825 = vadd.f32 %v4754, %v4773
        %v4826 = vadd.f32 %v4755, %v4773
        %v4827 = vadd.f32 %v4756, %v4773
        %v4828 = vadd.f32 %v4757, %v4773
        %v4829 = vadd.f32 %v4758, %v4773
        %v4830 = vadd.f32 %v4759, %v4773
        %v4831 = vadd.f32 %v4760, %v4773
        %v4832 = vadd.f32 %v4761, %v4773
        %v4833 = vadd.f32 %v4762, %v4773
        %v4834 = vadd.f32 %v4763, %v4773
        %v4835 = vadd.f32 %v4764, %v4773
        %v4836 = vadd.f32 %v4765, %v4773
        %v4837 = vadd.f32 %v4766, %v4773
        %v4838 = vadd.f32 %v4767, %v4773
        %4839 = vxpose.xlu0.b32.start [1/16] %v4775, 128
        %4840 = vxpose.xlu0.b32.cont [2/16] %v4776, 128
        %4841 = vxpose.xlu0.b32.cont [3/16] %v4777, 128
        %4842 = vxpose.xlu0.b32.cont [4/16] %v4778, 128
        %4843 = vxpose.xlu0.b32.cont [5/16] %v4779, 128
        %4844 = vxpose.xlu0.b32.cont [6/16] %v4780, 128
        %4845 = vxpose.xlu0.b32.cont [7/16] %v4781, 128
        %4846 = vxpose.xlu0.b32.cont [8/16] %v4782, 128
        %4847 = vxpose.xlu0.b32.cont [9/16] %v4783, 128
        %4848 = vxpose.xlu0.b32.cont [10/16] %v4784, 128
        %4849 = vxpose.xlu0.b32.cont [11/16] %v4785, 128
        %4850 = vxpose.xlu0.b32.cont [12/16] %v4786, 128
        %4851 = vxpose.xlu0.b32.cont [13/16] %v4787, 128
        %4852 = vxpose.xlu0.b32.cont [14/16] %v4788, 128
        %4853 = vxpose.xlu0.b32.cont [15/16] %v4789, 128
        %4854 = vxpose.xlu0.b32.end [16/16] %v4790, 128
        %v4855 = vpop.trf.xlu0
        %v4856 = vpop.trf.xlu0
        %v4857 = vpop.trf.xlu0
        %v4858 = vpop.trf.xlu0
        %v4859 = vpop.trf.xlu0
        %v4860 = vpop.trf.xlu0
        %v4861 = vpop.trf.xlu0
        %v4862 = vpop.trf.xlu0
        %v4863 = vpop.trf.xlu0
        %v4864 = vpop.trf.xlu0
        %v4865 = vpop.trf.xlu0
        %v4866 = vpop.trf.xlu0
        %v4867 = vpop.trf.xlu0
        %v4868 = vpop.trf.xlu0
        %v4869 = vpop.trf.xlu0
        %v4870 = vpop.trf.xlu0
        %4871 = vxpose.xlu0.b32.start [1/16] %v4791, 128
        %4872 = vxpose.xlu0.b32.cont [2/16] %v4792, 128
        %4873 = vxpose.xlu0.b32.cont [3/16] %v4793, 128
        %4874 = vxpose.xlu0.b32.cont [4/16] %v4794, 128
        %4875 = vxpose.xlu0.b32.cont [5/16] %v4795, 128
        %4876 = vxpose.xlu0.b32.cont [6/16] %v4796, 128
        %4877 = vxpose.xlu0.b32.cont [7/16] %v4797, 128
        %4878 = vxpose.xlu0.b32.cont [8/16] %v4798, 128
        %4879 = vxpose.xlu0.b32.cont [9/16] %v4799, 128
        %4880 = vxpose.xlu0.b32.cont [10/16] %v4800, 128
        %4881 = vxpose.xlu0.b32.cont [11/16] %v4801, 128
        %4882 = vxpose.xlu0.b32.cont [12/16] %v4802, 128
        %4883 = vxpose.xlu0.b32.cont [13/16] %v4803, 128
        %4884 = vxpose.xlu0.b32.cont [14/16] %v4804, 128
        %4885 = vxpose.xlu0.b32.cont [15/16] %v4805, 128
        %4886 = vxpose.xlu0.b32.end [16/16] %v4806, 128
        %v4887 = vpop.trf.xlu0
        %v4888 = vpop.trf.xlu0
        %v4889 = vpop.trf.xlu0
        %v4890 = vpop.trf.xlu0
        %v4891 = vpop.trf.xlu0
        %v4892 = vpop.trf.xlu0
        %v4893 = vpop.trf.xlu0
        %v4894 = vpop.trf.xlu0
        %v4895 = vpop.trf.xlu0
        %v4896 = vpop.trf.xlu0
        %v4897 = vpop.trf.xlu0
        %v4898 = vpop.trf.xlu0
        %v4899 = vpop.trf.xlu0
        %v4900 = vpop.trf.xlu0
        %v4901 = vpop.trf.xlu0
        %v4902 = vpop.trf.xlu0
        %4903 = vxpose.xlu0.b32.start [1/16] %v4807, 128
        %4904 = vxpose.xlu0.b32.cont [2/16] %v4808, 128
        %4905 = vxpose.xlu0.b32.cont [3/16] %v4809, 128
        %4906 = vxpose.xlu0.b32.cont [4/16] %v4810, 128
        %4907 = vxpose.xlu0.b32.cont [5/16] %v4811, 128
        %4908 = vxpose.xlu0.b32.cont [6/16] %v4812, 128
        %4909 = vxpose.xlu0.b32.cont [7/16] %v4813, 128
        %4910 = vxpose.xlu0.b32.cont [8/16] %v4814, 128
        %4911 = vxpose.xlu0.b32.cont [9/16] %v4815, 128
        %4912 = vxpose.xlu0.b32.cont [10/16] %v4816, 128
        %4913 = vxpose.xlu0.b32.cont [11/16] %v4817, 128
        %4914 = vxpose.xlu0.b32.cont [12/16] %v4818, 128
        %4915 = vxpose.xlu0.b32.cont [13/16] %v4819, 128
        %4916 = vxpose.xlu0.b32.cont [14/16] %v4820, 128
        %4917 = vxpose.xlu0.b32.cont [15/16] %v4821, 128
        %4918 = vxpose.xlu0.b32.end [16/16] %v4822, 128
        %v4919 = vpop.trf.xlu0
        %v4920 = vpop.trf.xlu0
        %v4921 = vpop.trf.xlu0
        %v4922 = vpop.trf.xlu0
        %v4923 = vpop.trf.xlu0
        %v4924 = vpop.trf.xlu0
        %v4925 = vpop.trf.xlu0
        %v4926 = vpop.trf.xlu0
        %v4927 = vpop.trf.xlu0
        %v4928 = vpop.trf.xlu0
        %v4929 = vpop.trf.xlu0
        %v4930 = vpop.trf.xlu0
        %v4931 = vpop.trf.xlu0
        %v4932 = vpop.trf.xlu0
        %v4933 = vpop.trf.xlu0
        %v4934 = vpop.trf.xlu0
        %4935 = vxpose.xlu0.b32.start [1/16] %v4823, 128
        %4936 = vxpose.xlu0.b32.cont [2/16] %v4824, 128
        %4937 = vxpose.xlu0.b32.cont [3/16] %v4825, 128
        %4938 = vxpose.xlu0.b32.cont [4/16] %v4826, 128
        %4939 = vxpose.xlu0.b32.cont [5/16] %v4827, 128
        %4940 = vxpose.xlu0.b32.cont [6/16] %v4828, 128
        %4941 = vxpose.xlu0.b32.cont [7/16] %v4829, 128
        %4942 = vxpose.xlu0.b32.cont [8/16] %v4830, 128
        %4943 = vxpose.xlu0.b32.cont [9/16] %v4831, 128
        %4944 = vxpose.xlu0.b32.cont [10/16] %v4832, 128
        %4945 = vxpose.xlu0.b32.cont [11/16] %v4833, 128
        %4946 = vxpose.xlu0.b32.cont [12/16] %v4834, 128
        %4947 = vxpose.xlu0.b32.cont [13/16] %v4835, 128
        %4948 = vxpose.xlu0.b32.cont [14/16] %v4836, 128
        %4949 = vxpose.xlu0.b32.cont [15/16] %v4837, 128
        %4950 = vxpose.xlu0.b32.end [16/16] %v4838, 128
        %v4951 = vpop.trf.xlu0
        %v4952 = vpop.trf.xlu0
        %v4953 = vpop.trf.xlu0
        %v4954 = vpop.trf.xlu0
        %v4955 = vpop.trf.xlu0
        %v4956 = vpop.trf.xlu0
        %v4957 = vpop.trf.xlu0
        %v4958 = vpop.trf.xlu0
        %v4959 = vpop.trf.xlu0
        %v4960 = vpop.trf.xlu0
        %v4961 = vpop.trf.xlu0
        %v4962 = vpop.trf.xlu0
        %v4963 = vpop.trf.xlu0
        %v4964 = vpop.trf.xlu0
        %v4965 = vpop.trf.xlu0
        %v4966 = vpop.trf.xlu0
        %4967 = vmatprep.subr.mxu0 %v260
        %4968 = vmatpush1.xpose.msra.mxu0 %v259
        %4969 = vmatprep.subr.mxu0 0.0
        %4970 = vmatpush1.xpose.msra.mxu0 0.0
        %4971 = vmatprep.subr.mxu0 0.0
        %4972 = vmatpush1.xpose.msra.mxu0 0.0
        %4973 = vmatprep.subr.mxu0 0.0
        %4974 = vmatpush1.xpose.msra.mxu0 0.0
        %4975 = vmatprep.subr.mxu0 0.0
        %4976 = vmatpush1.xpose.msra.mxu0 0.0
        %4977 = vmatprep.subr.mxu0 0.0
        %4978 = vmatpush1.xpose.msra.mxu0 0.0
        %4979 = vmatprep.subr.mxu0 0.0
        %4980 = vmatpush1.xpose.msra.mxu0 0.0
        %4981 = vmatprep.subr.mxu0 0.0
        %4982 = vmatpush1.xpose.msra.mxu0 0.0
        %4983 = vmatprep.subr.mxu0 0.0
        %4984 = vmatpush1.xpose.msra.mxu0 0.0
        %4985 = vmatprep.subr.mxu0 0.0
        %4986 = vmatpush1.xpose.msra.mxu0 0.0
        %4987 = vmatprep.subr.mxu0 0.0
        %4988 = vmatpush1.xpose.msra.mxu0 0.0
        %4989 = vmatprep.subr.mxu0 0.0
        %4990 = vmatpush1.xpose.msra.mxu0 0.0
        %4991 = vmatprep.subr.mxu0 0.0
        %4992 = vmatpush1.xpose.msra.mxu0 0.0
        %4993 = vmatprep.subr.mxu0 0.0
        %4994 = vmatpush1.xpose.msra.mxu0 0.0
        %4995 = vmatprep.subr.mxu0 0.0
        %4996 = vmatpush1.xpose.msra.mxu0 0.0
        %4997 = vmatprep.subr.mxu0 0.0
        %4998 = vmatpush1.xpose.msra.mxu0 0.0
        %4999 = vmatprep.subr.mxu0 0.0
        %5000 = vmatpush1.xpose.msra.mxu0 0.0
        %5001 = vmatprep.subr.mxu0 0.0
        %5002 = vmatpush1.xpose.msra.mxu0 0.0
        %5003 = vmatprep.subr.mxu0 0.0
        %5004 = vmatpush1.xpose.msra.mxu0 0.0
        %5005 = vmatprep.subr.mxu0 0.0
        %5006 = vmatpush1.xpose.msra.mxu0 0.0
        %5007 = vmatprep.subr.mxu0 0.0
        %5008 = vmatpush1.xpose.msra.mxu0 0.0
        %5009 = vmatprep.subr.mxu0 0.0
        %5010 = vmatpush1.xpose.msra.mxu0 0.0
        %5011 = vmatprep.subr.mxu0 0.0
        %5012 = vmatpush1.xpose.msra.mxu0 0.0
        %5013 = vmatprep.subr.mxu0 0.0
        %5014 = vmatpush1.xpose.msra.mxu0 0.0
        %5015 = vmatprep.subr.mxu0 0.0
        %5016 = vmatpush1.xpose.msra.mxu0 0.0
        %5017 = vmatprep.subr.mxu0 0.0
        %5018 = vmatpush1.xpose.msra.mxu0 0.0
        %5019 = vmatprep.subr.mxu0 0.0
        %5020 = vmatpush1.xpose.msra.mxu0 0.0
        %5021 = vmatprep.subr.mxu0 0.0
        %5022 = vmatpush1.xpose.msra.mxu0 0.0
        %5023 = vmatprep.subr.mxu0 0.0
        %5024 = vmatpush1.xpose.msra.mxu0 0.0
        %5025 = vmatprep.subr.mxu0 0.0
        %5026 = vmatpush1.xpose.msra.mxu0 0.0
        %5027 = vmatprep.subr.mxu0 0.0
        %5028 = vmatpush1.xpose.msra.mxu0 0.0
        %5029 = vmatprep.subr.mxu0 0.0
        %5030 = vmatpush1.xpose.msra.mxu0 0.0
        %5031 = vmatprep.mubr.f32.mxu0 %v4887
        %5032 = vmatmul.mubr.f32.gmra.mrb[0].mxu0 %v4855
        %v5033 = vpop.f32.mrb[0].mxu0
        %v5034 = vadd.f32 0.0, %v5033
        %v5035 = vpop.f32.mrb[0].mxu0
        %5036 = vdwg.mxu0
        %5037 = vmatprep.subr.mxu0 %v262
        %5038 = vmatpush1.xpose.msra.mxu0 %v261
        %5039 = vmatprep.subr.mxu0 0.0
        %5040 = vmatpush1.xpose.msra.mxu0 0.0
        %5041 = vmatprep.subr.mxu0 0.0
        %5042 = vmatpush1.xpose.msra.mxu0 0.0
        %5043 = vmatprep.subr.mxu0 0.0
        %5044 = vmatpush1.xpose.msra.mxu0 0.0
        %5045 = vmatprep.subr.mxu0 0.0
        %5046 = vmatpush1.xpose.msra.mxu0 0.0
        %5047 = vmatprep.subr.mxu0 0.0
        %5048 = vmatpush1.xpose.msra.mxu0 0.0
        %5049 = vmatprep.subr.mxu0 0.0
        %5050 = vmatpush1.xpose.msra.mxu0 0.0
        %5051 = vmatprep.subr.mxu0 0.0
        %5052 = vmatpush1.xpose.msra.mxu0 0.0
        %5053 = vmatprep.subr.mxu0 0.0
        %5054 = vmatpush1.xpose.msra.mxu0 0.0
        %5055 = vmatprep.subr.mxu0 0.0
        %5056 = vmatpush1.xpose.msra.mxu0 0.0
        %5057 = vmatprep.subr.mxu0 0.0
        %5058 = vmatpush1.xpose.msra.mxu0 0.0
        %5059 = vmatprep.subr.mxu0 0.0
        %5060 = vmatpush1.xpose.msra.mxu0 0.0
        %5061 = vmatprep.subr.mxu0 0.0
        %5062 = vmatpush1.xpose.msra.mxu0 0.0
        %5063 = vmatprep.subr.mxu0 0.0
        %5064 = vmatpush1.xpose.msra.mxu0 0.0
        %5065 = vmatprep.subr.mxu0 0.0
        %5066 = vmatpush1.xpose.msra.mxu0 0.0
        %5067 = vmatprep.subr.mxu0 0.0
        %5068 = vmatpush1.xpose.msra.mxu0 0.0
        %5069 = vmatprep.subr.mxu0 0.0
        %5070 = vmatpush1.xpose.msra.mxu0 0.0
        %5071 = vmatprep.subr.mxu0 0.0
        %5072 = vmatpush1.xpose.msra.mxu0 0.0
        %5073 = vmatprep.subr.mxu0 0.0
        %5074 = vmatpush1.xpose.msra.mxu0 0.0
        %5075 = vmatprep.subr.mxu0 0.0
        %5076 = vmatpush1.xpose.msra.mxu0 0.0
        %5077 = vmatprep.subr.mxu0 0.0
        %5078 = vmatpush1.xpose.msra.mxu0 0.0
        %5079 = vmatprep.subr.mxu0 0.0
        %5080 = vmatpush1.xpose.msra.mxu0 0.0
        %5081 = vmatprep.subr.mxu0 0.0
        %5082 = vmatpush1.xpose.msra.mxu0 0.0
        %5083 = vmatprep.subr.mxu0 0.0
        %5084 = vmatpush1.xpose.msra.mxu0 0.0
        %5085 = vmatprep.subr.mxu0 0.0
        %5086 = vmatpush1.xpose.msra.mxu0 0.0
        %5087 = vmatprep.subr.mxu0 0.0
        %5088 = vmatpush1.xpose.msra.mxu0 0.0
        %5089 = vmatprep.subr.mxu0 0.0
        %5090 = vmatpush1.xpose.msra.mxu0 0.0
        %5091 = vmatprep.subr.mxu0 0.0
        %5092 = vmatpush1.xpose.msra.mxu0 0.0
        %5093 = vmatprep.subr.mxu0 0.0
        %5094 = vmatpush1.xpose.msra.mxu0 0.0
        %5095 = vmatprep.subr.mxu0 0.0
        %5096 = vmatpush1.xpose.msra.mxu0 0.0
        %5097 = vmatprep.subr.mxu0 0.0
        %5098 = vmatpush1.xpose.msra.mxu0 0.0
        %5099 = vmatprep.subr.mxu0 0.0
        %5100 = vmatpush1.xpose.msra.mxu0 0.0
        %5101 = vmatprep.mubr.f32.mxu0 %v4951
        %5102 = vmatmul.mubr.f32.gmra.mrb[0].mxu0 %v4919
        %v5103 = vpop.f32.mrb[0].mxu0
        %v5104 = vadd.f32 0.0, %v5103
        %v5105 = vpop.f32.mrb[0].mxu0
        %5106 = vdwg.mxu0
        %v5107 = vmul.f32 %v5034, 0.00390625
        %v5108 = vmul.f32 %v5104, 0.00390625
        %5109 = vst.msk [vmem:[%s256] sm:$0xff] %vm399, %v5107
        %5110 = vst.msk [vmem:[%s256 + $0x8] sm:$0xff] %vm399, %v5108
        %s5111 = sand.u32 %s141, 1
        %s5112 = scalar_lea.sflag [#allocation4], %s5111
        %s5113 = sand.u32 %s141, 1
        %s5114 = smul.addr %s5113, 16
        %s5115 = scalar_lea.vmem [#allocation7], %s5114
        // Predicated region
        $region49: #{tpu_custom_call.1} parent=39 // pred_check
          %p5116 = pneg %p151
        $region50: #{tpu_custom_call.1} parent=39 // pred_check_branch
          %5118 = sbr.rel (%p5116) target = $region52
        $region51: #{tpu_custom_call.1} parent=39 // pred_region
          %s5119 = smul.u32 2, %s23
          %s5121 = ssub.s32 256, 256
          %5122 = vsyncadd %s5112, %s5121
          %s5123 = smul.addr %s5119, 128
          %s5124 = scalar_lea.hbm %s5, %s5123
          %s5125 = sshll.u32 %s5115, 4
          %s5126 = int_to_ptr.vmem [resolvable:$true] %s5125
          %5131 = dma.vmem_to_hbm [thread:$0]  %s5126, 256, %s5124, %s5112, 128, 128, 8
        $region52: #{tpu_custom_call.1} parent=39 // pred_fallthru
          _
      $region40: #{tpu_custom_call.1} parent=5 // pred_fallthru
        _
      %p5132 = scmp.le.s32.totalorder 2, %s18
      // Predicated region
      $region53: #{tpu_custom_call.1} parent=5 // pred_check
        %p5133 = pneg %p5132
      $region54: #{tpu_custom_call.1} parent=5 // pred_check_branch
        %5135 = sbr.rel (%p5133) target = $region56
      $region55: #{tpu_custom_call.1} parent=5 // pred_region
        %s5136 = ssub.s32 %s18, 2
        // Predicated region
        $region57: #{tpu_custom_call.1} parent=55 // pred_check
          %p5137 = pneg %p157
        $region58: #{tpu_custom_call.1} parent=55 // pred_check_branch
          %5139 = sbr.rel (%p5137) target = $region60
        $region59: #{tpu_custom_call.1} parent=55 // pred_region
          %s5140 = sand.u32 %s142, 1
          %s5141 = scalar_lea.sflag [#allocation4], %s5140
          %s5142 = sand.u32 %s142, 1
          %s5143 = smul.addr %s5142, 16
          %s5144 = scalar_lea.vmem [#allocation7], %s5143
          %5145 = dma.done %s5141, 256
        $region60: #{tpu_custom_call.1} parent=55 // pred_fallthru
          _
      $region56: #{tpu_custom_call.1} parent=5 // pred_fallthru
        _
    $region6: #{tpu_custom_call.1} parent=1 // loop_footer
      %s22 = sadd.s32 1, %s18
    $region7: #{tpu_custom_call.1} parent=1 // loop_footer_branch
      %17 = sbr.rel target = $region3
    $region8: #{tpu_custom_call.1} parent=1 // loop_exit
      _
    %5146 = vsyncpa [#allocation3], 1
    %s5147 = scalar_lea.sflag [#allocation3], 1
    %5148 = vsyncpa %s5147, 1
    %5149 = vsyncpa [#allocation6], 1
    %5150 = vsyncpa [#allocation4], 1
    %s5151 = scalar_lea.sflag [#allocation4], 1
    %5152 = vsyncpa %s5151, 1

</llo_original>
